<compile_context>
chip_gen: v7x
topology: tpu7x:2x2x1
jax: 0.10.0
libtpu: 0.0.40
codegen_flags: <defaults>
</compile_context>

<pallas_src>
import functools

import jax
import jax.numpy as jnp
from jax import lax
from jax.experimental import pallas as pl
from jax.experimental.pallas import tpu as pltpu

_NEG = -1e30                # pad-class logit bias -> softmax prob exactly 0
_RRELU_SLOPE = 11.0 / 48.0  # nn.RReLU eval slope = (1/8 + 1/3) / 2


def _rup(n, m):
    return ((n + m - 1) // m) * m


# ----------------------------- Pallas kernel ------------------------------- #

def _classifier_kernel(ids_ref,                                  # SMEM (B*T,) int32
                       embed_ref,                                # (DP, E)
                       wih0_ref, bih0_ref,                       # (E, 3HP), (1, 3HP)
                       whh_ref, bhh_ref,                         # (2HP, 6HP), (1, 6HP)
                       wih1_ref, bih1_ref,                       # (HP, 3HP), (1, 3HP)
                       fc1w_ref, fc1b_ref, fc2w_ref, fc2b_ref,   # head
                       o_ref,                                    # (BP, OP)
                       x_scr,                                    # (T*BP, E)
                       gx0_scr,                                  # (T, BP, 3HP)
                       *, batch, use_swish):
    T, BP, G3 = gx0_scr.shape
    HP = G3 // 3

    # ---- Embedding gather inside the kernel (ids come from SMEM) ---------- #
    x_scr[...] = jnp.zeros_like(x_scr)          # pad-batch rows stay exactly 0
    for t in range(T):
        for b in range(batch):
            idx = ids_ref[b * T + t]            # seq_ids[b, t]
            x_scr[pl.ds(t * BP + b, 1), :] = embed_ref[pl.ds(idx, 1), :]

    # ---- Hoisted layer-0 input projection: one MXU call over all T steps -- #
    # (For production-sized T this scratch should be chunked over T; at T=8 it
    #  is a few hundred KB and fits every generation's VMEM easily.)
    gx0 = jnp.dot(x_scr[...], wih0_ref[...],
                  preferred_element_type=jnp.float32) + bih0_ref[...]
    gx0_scr[...] = jnp.reshape(gx0, (T, BP, G3))

    # Hoist only the small bias broadcasts (JAX does not CSE broadcast_in_dim).
    # The big recurrent weights are read from their refs at each dot so the MXU
    # streams them from VMEM instead of spilling vregs across the unroll.
    bhh = jnp.broadcast_to(bhh_ref[...], (BP, 2 * G3))
    bih1 = jnp.broadcast_to(bih1_ref[...], (BP, G3))

    def _gates(gx, gh, h_prev):
        # Gate blocks are 128-lane aligned (HP == 128): lane-dense slices.
        # r and z share one sigmoid over 2*HP lanes.
        rz = jax.nn.sigmoid(gx[:, :2 * HP] + gh[:, :2 * HP])
        r = rz[:, :HP]
        z = rz[:, HP:]
        n = jnp.tanh(gx[:, 2 * HP:] + r * gh[:, 2 * HP:])
        return (1.0 - z) * n + z * h_prev

    def step(t, carry):
        h0, h1 = carry
        # Fused h-dependent projection of BOTH layers: one block-diag matmul.
        hcat = jnp.concatenate([h0, h1], axis=1)                       # (BP, 2HP)
        gh = jnp.dot(hcat, whh_ref[...],
                     preferred_element_type=jnp.float32) + bhh         # (BP, 6HP)
        h0n = _gates(gx0_scr[t], gh[:, :G3], h0)
        # Layer 1 (inter-layer dropout is an eval-mode no-op).
        gx1 = jnp.dot(h0n, wih1_ref[...],
                      preferred_element_type=jnp.float32) + bih1
        h1n = _gates(gx1, gh[:, G3:], h1)
        return (h0n, h1n)

    h_init = jnp.zeros((BP, HP), jnp.float32)
    _, h1 = lax.fori_loop(0, T, step, (h_init, h_init), unroll=True)

    # ---- Head: fc1 -> activation -> (dropout no-op) -> fc2 -> softmax ----- #
    a = jnp.dot(h1, fc1w_ref[...],
                preferred_element_type=jnp.float32) + fc1b_ref[...]
    if use_swish:
        a = a * jax.nn.sigmoid(a)                      # Swish
    else:
        a = jnp.where(a >= 0.0, a, a * _RRELU_SLOPE)   # RReLU (eval mode)
    logits = (jnp.dot(a, fc2w_ref[...], preferred_element_type=jnp.float32)
              + fc2b_ref[...])
    # Padded class columns carry a -1e30 bias -> exp underflows to exactly 0,
    # so the full-width (lane-dense) softmax equals softmax over the 2 classes.
    m = jnp.max(logits, axis=-1, keepdims=True)
    e = jnp.exp(logits - m)
    s = jnp.sum(e, axis=-1, keepdims=True)
    # approx=True would risk the 1e-5 parity check; approx=False is exact.
    probs = e * pl.reciprocal(s, approx=False)

    # Single lane-dense output store, exactly once.
    o_ref[...] = probs.astype(o_ref.dtype)


# --------------------- one-time weight re-layout (host) --------------------- #

def _pad_gru_w(w, in_pad, hp):
    """PyTorch GRU weight (3H, in) -> transposed, gate-blocked, padded (in_pad, 3*hp)."""
    h3, in_dim = w.shape
    h = h3 // 3
    wt = jnp.transpose(w).reshape(in_dim, 3, h)            # cols grouped r|z|n
    wt = jnp.pad(wt, ((0, in_pad - in_dim), (0, 0), (0, hp - h)))
    return wt.reshape(in_pad, 3 * hp).astype(jnp.float32)


def _pad_gru_b(b, hp):
    h = b.shape[0] // 3
    bb = jnp.pad(b.reshape(3, h), ((0, 0), (0, hp - h)))
    return bb.reshape(1, 3 * hp).astype(jnp.float32)


def _pad_fc_w(w, in_pad, out_pad):
    """PyTorch Linear weight (out, in) -> transposed padded (in_pad, out_pad)."""
    out_dim, in_dim = w.shape
    wt = jnp.transpose(w)
    return jnp.pad(wt, ((0, in_pad - in_dim), (0, out_pad - out_dim))).astype(jnp.float32)


def _pad_fc_b(b, out_pad, pad_value=0.0):
    out_dim = b.shape[0]
    return jnp.pad(b, (0, out_pad - out_dim),
                   constant_values=pad_value).reshape(1, out_pad).astype(jnp.float32)


def prepare_params(embed_table, params):
    """One-time layout prep at parameter-load time (NOT per forward call)."""
    E = embed_table.shape[1]
    H = params["b_hh_l0"].shape[0] // 3
    F1 = params["fc1_b"].shape[0]
    NC = params["fc2_b"].shape[0]
    D = embed_table.shape[0]

    HP = _rup(H, 128)     # lane-padded hidden width (gate blocks 128-aligned)
    F1P = _rup(F1, 128)   # lane-padded fc1 width
    OP = _rup(NC, 128)    # lane-padded class dim
    DP = _rup(D, 8)       # sublane-padded dict size

    # Block-diagonal fusion of the two h-dependent recurrent weights.
    whh0 = _pad_gru_w(params["w_hh_l0"], HP, HP)
    whh1 = _pad_gru_w(params["w_hh_l1"], HP, HP)
    z = jnp.zeros((HP, 3 * HP), jnp.float32)
    whh_blk = jnp.concatenate(
        [jnp.concatenate([whh0, z], axis=1),
         jnp.concatenate([z, whh1], axis=1)], axis=0)               # (2HP, 6HP)
    bhh_cat = jnp.concatenate(
        [_pad_gru_b(params["b_hh_l0"], HP),
         _pad_gru_b(params["b_hh_l1"], HP)], axis=1)                # (1, 6HP)

    prepped = {
        "embed": jnp.pad(embed_table.astype(jnp.float32), ((0, DP - D), (0, 0))),
        "wih0": _pad_gru_w(params["w_ih_l0"], E, HP),
        "bih0": _pad_gru_b(params["b_ih_l0"], HP),
        "whh_blk": whh_blk,
        "bhh_cat": bhh_cat,
        "wih1": _pad_gru_w(params["w_ih_l1"], HP, HP),
        "bih1": _pad_gru_b(params["b_ih_l1"], HP),
        "fc1w": _pad_fc_w(params["fc1_w"], HP, F1P),
        "fc1b": _pad_fc_b(params["fc1_b"], F1P),
        "fc2w": _pad_fc_w(params["fc2_w"], F1P, OP),
        "fc2b": _pad_fc_b(params["fc2_b"], OP, pad_value=_NEG),
    }
    return prepped, NC


# ------------------------------ jitted forward ------------------------------ #

@functools.partial(jax.jit, static_argnames=("num_classes", "use_swish"))
def classifier_forward(seq_ids, prepped, *, num_classes, use_swish=True):
    """seq_ids: (B, T) int32 -> (B, num_classes) softmax probabilities (eval)."""
    B, T = seq_ids.shape
    DP, E = prepped["embed"].shape
    HP = prepped["wih1"].shape[0]
    F1P = prepped["fc1b"].shape[1]
    OP = prepped["fc2b"].shape[1]
    BP = _rup(B, 8)       # sublane-padded batch -> h is one (8,128) vreg

    ids_flat = seq_ids.reshape(B * T).astype(jnp.int32)   # free (row-major) reshape

    full2 = lambda i, ids: (0, 0)   # index_maps also receive the prefetch ref
    out = pl.pallas_call(
        functools.partial(_classifier_kernel, batch=B, use_swish=use_swish),
        out_shape=jax.ShapeDtypeStruct((BP, OP), jnp.float32),
        grid_spec=pltpu.PrefetchScalarGridSpec(
            num_scalar_prefetch=1,   # seq ids -> SMEM
            grid=(1,),               # entire recurrence in one kernel invocation
            in_specs=[
                pl.BlockSpec((DP, E), full2),           # embedding table
                pl.BlockSpec((E, 3 * HP), full2),       # W_ih0^T (padded)
                pl.BlockSpec((1, 3 * HP), full2),       # b_ih0
                pl.BlockSpec((2 * HP, 6 * HP), full2),  # blockdiag(W_hh0^T, W_hh1^T)
                pl.BlockSpec((1, 6 * HP), full2),       # [b_hh0 | b_hh1]
                pl.BlockSpec((HP, 3 * HP), full2),      # W_ih1^T
                pl.BlockSpec((1, 3 * HP), full2),       # b_ih1
                pl.BlockSpec((HP, F1P), full2),         # fc1 W^T
                pl.BlockSpec((1, F1P), full2),          # fc1 b
                pl.BlockSpec((F1P, OP), full2),         # fc2 W^T
                pl.BlockSpec((1, OP), full2),           # fc2 b (pad = -1e30)
            ],
            out_specs=pl.BlockSpec((BP, OP), full2),
            scratch_shapes=[pltpu.VMEM((T * BP, E), jnp.float32),      # gathered x
                            pltpu.VMEM((T, BP, 3 * HP), jnp.float32)],  # gx0
        ),
        compiler_params=pltpu.CompilerParams(
            dimension_semantics=("arbitrary",),
            vmem_limit_bytes=32 * 1024 * 1024),
    )(ids_flat, prepped["embed"], prepped["wih0"], prepped["bih0"],
      prepped["whh_blk"], prepped["bhh_cat"], prepped["wih1"], prepped["bih1"],
      prepped["fc1w"], prepped["fc1b"], prepped["fc2w"], prepped["fc2b"])

    return out[:B, :num_classes]


# ------------------------------ pure-JAX reference -------------------------- #

def reference_forward(seq_ids, embed_table, params, *, use_swish=True):
    B, T = seq_ids.shape
    H = params["b_hh_l0"].shape[0] // 3
    x = jnp.take(embed_table, seq_ids, axis=0)
    x = jnp.transpose(x, (1, 0, 2)).astype(jnp.float32)    # (T, B, E)

    def cell(x_in, h_prev, w_ih, w_hh, b_ih, b_hh):
        gx = x_in @ w_ih.T + b_ih
        gh = h_prev @ w_hh.T + b_hh
        r = jax.nn.sigmoid(gx[:, :H] + gh[:, :H])
        z = jax.nn.sigmoid(gx[:, H:2 * H] + gh[:, H:2 * H])
        n = jnp.tanh(gx[:, 2 * H:] + r * gh[:, 2 * H:])
        return (1.0 - z) * n + z * h_prev

    def step(carry, x_t):
        h0, h1 = carry
        h0n = cell(x_t, h0, params["w_ih_l0"], params["w_hh_l0"],
                   params["b_ih_l0"], params["b_hh_l0"])
        h1n = cell(h0n, h1, params["w_ih_l1"], params["w_hh_l1"],
                   params["b_ih_l1"], params["b_hh_l1"])
        return (h0n, h1n), None

    init = (jnp.zeros((B, H), jnp.float32), jnp.zeros((B, H), jnp.float32))
    (_, h1), _ = lax.scan(step, init, x)

    a = h1 @ params["fc1_w"].T + params["fc1_b"]
    if use_swish:
        a = a * jax.nn.sigmoid(a)
    else:
        a = jnp.where(a >= 0.0, a, a * _RRELU_SLOPE)
    logits = a @ params["fc2_w"].T + params["fc2_b"]
    return jax.nn.softmax(logits, axis=1)


# ----------------------------------- main ----------------------------------- #

if __name__ == "__main__":
    # Small shapes consistent with the module's forward.
    B, T, E, H = 4, 8, 16, 32
    dict_size = 50
    use_swish = True   # Classifier(usingswish=True) -> Swish activation

    key = jax.random.PRNGKey(0)
    ks = jax.random.split(key, 14)

    seq_ids = jax.random.randint(ks[0], (B, T), 0, dict_size, dtype=jnp.int32)
    embed_table = jax.random.normal(ks[1], (dict_size, E), dtype=jnp.float32)

    s = 1.0 / jnp.sqrt(jnp.float32(H))
    params = {
        # GRU layer 0 (input size E), PyTorch layout (3H, in); gate order r|z|n.
        "w_ih_l0": jax.random.normal(ks[2], (3 * H, E), jnp.float32) * s,
        "w_hh_l0": jax.random.normal(ks[3], (3 * H, H), jnp.float32) * s,
        "b_ih_l0": jax.random.normal(ks[4], (3 * H,), jnp.float32) * s,
        "b_hh_l0": jax.random.normal(ks[5], (3 * H,), jnp.float32) * s,
        # GRU layer 1 (input size H).
        "w_ih_l1": jax.random.normal(ks[6], (3 * H, H), jnp.float32) * s,
        "w_hh_l1": jax.random.normal(ks[7], (3 * H, H), jnp.float32) * s,
        "b_ih_l1": jax.random.normal(ks[8], (3 * H,), jnp.float32) * s,
        "b_hh_l1": jax.random.normal(ks[9], (3 * H,), jnp.float32) * s,
        # Classifier head: fc1 (H -> 64), fc2 (64 -> 2), PyTorch (out, in) layout.
        "fc1_w": jax.random.normal(ks[10], (64, H), jnp.float32) * s,
        "fc1_b": jax.random.normal(ks[11], (64,), jnp.float32) * s,
        "fc2_w": jax.random.normal(ks[12], (2, 64), jnp.float32) * 0.125,
        "fc2_b": jax.random.normal(ks[13], (2,), jnp.float32) * 0.125,
    }

    # One-time weight re-layout (parameter-load time, not per call).
    prepped, num_classes = prepare_params(embed_table, params)

    out = classifier_forward(seq_ids, prepped,
                             num_classes=num_classes, use_swish=use_swish)
    out = jax.block_until_ready(out)
    ref = jax.block_until_ready(
        reference_forward(seq_ids, embed_table, params, use_swish=use_swish))

    assert out.shape == (B, 2)
    assert bool(jnp.all(jnp.isfinite(out)))
    assert jnp.allclose(jnp.sum(out, axis=1), 1.0, atol=1e-5)
    assert jnp.allclose(out, ref, atol=1e-5, rtol=1e-5), "mismatch vs JAX reference"

    print("KERNEL_OK")
</pallas_src>

<mosaic_0001>
module attributes {stable_mosaic.version = 11 : i64} {
  func.func @_classifier_kernel(%arg0: i32, %arg1: memref<32xi32, #tpu.memory_space<smem>>, %arg2: memref<56x16xf32, #tpu.memory_space<vmem>>, %arg3: memref<16x384xf32, #tpu.memory_space<vmem>>, %arg4: memref<1x384xf32, #tpu.memory_space<vmem>>, %arg5: memref<256x768xf32, #tpu.memory_space<vmem>>, %arg6: memref<1x768xf32, #tpu.memory_space<vmem>>, %arg7: memref<128x384xf32, #tpu.memory_space<vmem>>, %arg8: memref<1x384xf32, #tpu.memory_space<vmem>>, %arg9: memref<128x128xf32, #tpu.memory_space<vmem>>, %arg10: memref<1x128xf32, #tpu.memory_space<vmem>>, %arg11: memref<128x128xf32, #tpu.memory_space<vmem>>, %arg12: memref<1x128xf32, #tpu.memory_space<vmem>>, %arg13: memref<8x128xf32, #tpu.memory_space<vmem>>, %arg14: memref<64x16xf32, #tpu.memory_space<vmem>>, %arg15: memref<8x8x384xf32, #tpu.memory_space<vmem>>) attributes {dimension_semantics = [#tpu.dimension_semantics<arbitrary>], iteration_bounds = array<i64: 1>, scalar_prefetch = 1 : i64, scratch_operands = 2 : i64, tpu.core_type = #tpu.core_type<tc>, window_params = [{pipeline_mode = #tpu.pipeline_mode<synchronous>, transform_indices = @transform_0, window_bounds = array<i64: 56, 16>}, {pipeline_mode = #tpu.pipeline_mode<synchronous>, transform_indices = @transform_1, window_bounds = array<i64: 16, 384>}, {pipeline_mode = #tpu.pipeline_mode<synchronous>, transform_indices = @transform_2, window_bounds = array<i64: 1, 384>}, {pipeline_mode = #tpu.pipeline_mode<synchronous>, transform_indices = @transform_3, window_bounds = array<i64: 256, 768>}, {pipeline_mode = #tpu.pipeline_mode<synchronous>, transform_indices = @transform_4, window_bounds = array<i64: 1, 768>}, {pipeline_mode = #tpu.pipeline_mode<synchronous>, transform_indices = @transform_5, window_bounds = array<i64: 128, 384>}, {pipeline_mode = #tpu.pipeline_mode<synchronous>, transform_indices = @transform_6, window_bounds = array<i64: 1, 384>}, {pipeline_mode = #tpu.pipeline_mode<synchronous>, transform_indices = @transform_7, window_bounds = array<i64: 128, 128>}, {pipeline_mode = #tpu.pipeline_mode<synchronous>, transform_indices = @transform_8, window_bounds = array<i64: 1, 128>}, {pipeline_mode = #tpu.pipeline_mode<synchronous>, transform_indices = @transform_9, window_bounds = array<i64: 128, 128>}, {pipeline_mode = #tpu.pipeline_mode<synchronous>, transform_indices = @transform_10, window_bounds = array<i64: 1, 128>}, {pipeline_mode = #tpu.pipeline_mode<synchronous>, transform_indices = @transform_11, window_bounds = array<i64: 8, 128>}]} {
    %cst = arith.constant 0.000000e+00 : f32
    %0 = vector.broadcast %cst : f32 to vector<64x16xf32>
    %c0 = arith.constant 0 : index
    %c0_0 = arith.constant 0 : index
    %1 = vector.load %arg14[%c0, %c0_0] : memref<64x16xf32, #tpu.memory_space<vmem>>, vector<64x16xf32>
    tpu.vector_store %arg14[%c0, %c0_0], %0 {strides = array<i32>} : memref<64x16xf32, #tpu.memory_space<vmem>>, vector<64x16xf32>,
    %c0_1 = arith.constant 0 : index
    %2 = memref.load %arg1[%c0_1] : memref<32xi32, #tpu.memory_space<smem>>
    %3 = arith.index_cast %2 : i32 to index
    %c0_2 = arith.constant 0 : index
    %4 = vector.load %arg2[%3, %c0_2] : memref<56x16xf32, #tpu.memory_space<vmem>>, vector<1x16xf32>
    %c0_3 = arith.constant 0 : index
    %c0_4 = arith.constant 0 : index
    %5 = vector.load %arg14[%c0_3, %c0_4] : memref<64x16xf32, #tpu.memory_space<vmem>>, vector<1x16xf32>
    tpu.vector_store %arg14[%c0_3, %c0_4], %4 {strides = array<i32>} : memref<64x16xf32, #tpu.memory_space<vmem>>, vector<1x16xf32>,
    %c8 = arith.constant 8 : index
    %6 = memref.load %arg1[%c8] : memref<32xi32, #tpu.memory_space<smem>>
    %7 = arith.index_cast %6 : i32 to index
    %c0_5 = arith.constant 0 : index
    %8 = vector.load %arg2[%7, %c0_5] : memref<56x16xf32, #tpu.memory_space<vmem>>, vector<1x16xf32>
    %c1 = arith.constant 1 : index
    %c0_6 = arith.constant 0 : index
    %9 = vector.load %arg14[%c1, %c0_6] : memref<64x16xf32, #tpu.memory_space<vmem>>, vector<1x16xf32>
    tpu.vector_store %arg14[%c1, %c0_6], %8 {strides = array<i32>} : memref<64x16xf32, #tpu.memory_space<vmem>>, vector<1x16xf32>,
    %c16 = arith.constant 16 : index
    %10 = memref.load %arg1[%c16] : memref<32xi32, #tpu.memory_space<smem>>
    %11 = arith.index_cast %10 : i32 to index
    %c0_7 = arith.constant 0 : index
    %12 = vector.load %arg2[%11, %c0_7] : memref<56x16xf32, #tpu.memory_space<vmem>>, vector<1x16xf32>
    %c2 = arith.constant 2 : index
    %c0_8 = arith.constant 0 : index
    %13 = vector.load %arg14[%c2, %c0_8] : memref<64x16xf32, #tpu.memory_space<vmem>>, vector<1x16xf32>
    tpu.vector_store %arg14[%c2, %c0_8], %12 {strides = array<i32>} : memref<64x16xf32, #tpu.memory_space<vmem>>, vector<1x16xf32>,
    %c24 = arith.constant 24 : index
    %14 = memref.load %arg1[%c24] : memref<32xi32, #tpu.memory_space<smem>>
    %15 = arith.index_cast %14 : i32 to index
    %c0_9 = arith.constant 0 : index
    %16 = vector.load %arg2[%15, %c0_9] : memref<56x16xf32, #tpu.memory_space<vmem>>, vector<1x16xf32>
    %c3 = arith.constant 3 : index
    %c0_10 = arith.constant 0 : index
    %17 = vector.load %arg14[%c3, %c0_10] : memref<64x16xf32, #tpu.memory_space<vmem>>, vector<1x16xf32>
    tpu.vector_store %arg14[%c3, %c0_10], %16 {strides = array<i32>} : memref<64x16xf32, #tpu.memory_space<vmem>>, vector<1x16xf32>,
    %c1_11 = arith.constant 1 : index
    %18 = memref.load %arg1[%c1_11] : memref<32xi32, #tpu.memory_space<smem>>
    %19 = arith.index_cast %18 : i32 to index
    %c0_12 = arith.constant 0 : index
    %20 = vector.load %arg2[%19, %c0_12] : memref<56x16xf32, #tpu.memory_space<vmem>>, vector<1x16xf32>
    %c8_13 = arith.constant 8 : index
    %c0_14 = arith.constant 0 : index
    %21 = vector.load %arg14[%c8_13, %c0_14] : memref<64x16xf32, #tpu.memory_space<vmem>>, vector<1x16xf32>
    tpu.vector_store %arg14[%c8_13, %c0_14], %20 {strides = array<i32>} : memref<64x16xf32, #tpu.memory_space<vmem>>, vector<1x16xf32>,
    %c9 = arith.constant 9 : index
    %22 = memref.load %arg1[%c9] : memref<32xi32, #tpu.memory_space<smem>>
    %23 = arith.index_cast %22 : i32 to index
    %c0_15 = arith.constant 0 : index
    %24 = vector.load %arg2[%23, %c0_15] : memref<56x16xf32, #tpu.memory_space<vmem>>, vector<1x16xf32>
    %c9_16 = arith.constant 9 : index
    %c0_17 = arith.constant 0 : index
    %25 = vector.load %arg14[%c9_16, %c0_17] : memref<64x16xf32, #tpu.memory_space<vmem>>, vector<1x16xf32>
    tpu.vector_store %arg14[%c9_16, %c0_17], %24 {strides = array<i32>} : memref<64x16xf32, #tpu.memory_space<vmem>>, vector<1x16xf32>,
    %c17 = arith.constant 17 : index
    %26 = memref.load %arg1[%c17] : memref<32xi32, #tpu.memory_space<smem>>
    %27 = arith.index_cast %26 : i32 to index
    %c0_18 = arith.constant 0 : index
    %28 = vector.load %arg2[%27, %c0_18] : memref<56x16xf32, #tpu.memory_space<vmem>>, vector<1x16xf32>
    %c10 = arith.constant 10 : index
    %c0_19 = arith.constant 0 : index
    %29 = vector.load %arg14[%c10, %c0_19] : memref<64x16xf32, #tpu.memory_space<vmem>>, vector<1x16xf32>
    tpu.vector_store %arg14[%c10, %c0_19], %28 {strides = array<i32>} : memref<64x16xf32, #tpu.memory_space<vmem>>, vector<1x16xf32>,
    %c25 = arith.constant 25 : index
    %30 = memref.load %arg1[%c25] : memref<32xi32, #tpu.memory_space<smem>>
    %31 = arith.index_cast %30 : i32 to index
    %c0_20 = arith.constant 0 : index
    %32 = vector.load %arg2[%31, %c0_20] : memref<56x16xf32, #tpu.memory_space<vmem>>, vector<1x16xf32>
    %c11 = arith.constant 11 : index
    %c0_21 = arith.constant 0 : index
    %33 = vector.load %arg14[%c11, %c0_21] : memref<64x16xf32, #tpu.memory_space<vmem>>, vector<1x16xf32>
    tpu.vector_store %arg14[%c11, %c0_21], %32 {strides = array<i32>} : memref<64x16xf32, #tpu.memory_space<vmem>>, vector<1x16xf32>,
    %c2_22 = arith.constant 2 : index
    %34 = memref.load %arg1[%c2_22] : memref<32xi32, #tpu.memory_space<smem>>
    %35 = arith.index_cast %34 : i32 to index
    %c0_23 = arith.constant 0 : index
    %36 = vector.load %arg2[%35, %c0_23] : memref<56x16xf32, #tpu.memory_space<vmem>>, vector<1x16xf32>
    %c16_24 = arith.constant 16 : index
    %c0_25 = arith.constant 0 : index
    %37 = vector.load %arg14[%c16_24, %c0_25] : memref<64x16xf32, #tpu.memory_space<vmem>>, vector<1x16xf32>
    tpu.vector_store %arg14[%c16_24, %c0_25], %36 {strides = array<i32>} : memref<64x16xf32, #tpu.memory_space<vmem>>, vector<1x16xf32>,
    %c10_26 = arith.constant 10 : index
    %38 = memref.load %arg1[%c10_26] : memref<32xi32, #tpu.memory_space<smem>>
    %39 = arith.index_cast %38 : i32 to index
    %c0_27 = arith.constant 0 : index
    %40 = vector.load %arg2[%39, %c0_27] : memref<56x16xf32, #tpu.memory_space<vmem>>, vector<1x16xf32>
    %c17_28 = arith.constant 17 : index
    %c0_29 = arith.constant 0 : index
    %41 = vector.load %arg14[%c17_28, %c0_29] : memref<64x16xf32, #tpu.memory_space<vmem>>, vector<1x16xf32>
    tpu.vector_store %arg14[%c17_28, %c0_29], %40 {strides = array<i32>} : memref<64x16xf32, #tpu.memory_space<vmem>>, vector<1x16xf32>,
    %c18 = arith.constant 18 : index
    %42 = memref.load %arg1[%c18] : memref<32xi32, #tpu.memory_space<smem>>
    %43 = arith.index_cast %42 : i32 to index
    %c0_30 = arith.constant 0 : index
    %44 = vector.load %arg2[%43, %c0_30] : memref<56x16xf32, #tpu.memory_space<vmem>>, vector<1x16xf32>
    %c18_31 = arith.constant 18 : index
    %c0_32 = arith.constant 0 : index
    %45 = vector.load %arg14[%c18_31, %c0_32] : memref<64x16xf32, #tpu.memory_space<vmem>>, vector<1x16xf32>
    tpu.vector_store %arg14[%c18_31, %c0_32], %44 {strides = array<i32>} : memref<64x16xf32, #tpu.memory_space<vmem>>, vector<1x16xf32>,
    %c26 = arith.constant 26 : index
    %46 = memref.load %arg1[%c26] : memref<32xi32, #tpu.memory_space<smem>>
    %47 = arith.index_cast %46 : i32 to index
    %c0_33 = arith.constant 0 : index
    %48 = vector.load %arg2[%47, %c0_33] : memref<56x16xf32, #tpu.memory_space<vmem>>, vector<1x16xf32>
    %c19 = arith.constant 19 : index
    %c0_34 = arith.constant 0 : index
    %49 = vector.load %arg14[%c19, %c0_34] : memref<64x16xf32, #tpu.memory_space<vmem>>, vector<1x16xf32>
    tpu.vector_store %arg14[%c19, %c0_34], %48 {strides = array<i32>} : memref<64x16xf32, #tpu.memory_space<vmem>>, vector<1x16xf32>,
    %c3_35 = arith.constant 3 : index
    %50 = memref.load %arg1[%c3_35] : memref<32xi32, #tpu.memory_space<smem>>
    %51 = arith.index_cast %50 : i32 to index
    %c0_36 = arith.constant 0 : index
    %52 = vector.load %arg2[%51, %c0_36] : memref<56x16xf32, #tpu.memory_space<vmem>>, vector<1x16xf32>
    %c24_37 = arith.constant 24 : index
    %c0_38 = arith.constant 0 : index
    %53 = vector.load %arg14[%c24_37, %c0_38] : memref<64x16xf32, #tpu.memory_space<vmem>>, vector<1x16xf32>
    tpu.vector_store %arg14[%c24_37, %c0_38], %52 {strides = array<i32>} : memref<64x16xf32, #tpu.memory_space<vmem>>, vector<1x16xf32>,
    %c11_39 = arith.constant 11 : index
    %54 = memref.load %arg1[%c11_39] : memref<32xi32, #tpu.memory_space<smem>>
    %55 = arith.index_cast %54 : i32 to index
    %c0_40 = arith.constant 0 : index
    %56 = vector.load %arg2[%55, %c0_40] : memref<56x16xf32, #tpu.memory_space<vmem>>, vector<1x16xf32>
    %c25_41 = arith.constant 25 : index
    %c0_42 = arith.constant 0 : index
    %57 = vector.load %arg14[%c25_41, %c0_42] : memref<64x16xf32, #tpu.memory_space<vmem>>, vector<1x16xf32>
    tpu.vector_store %arg14[%c25_41, %c0_42], %56 {strides = array<i32>} : memref<64x16xf32, #tpu.memory_space<vmem>>, vector<1x16xf32>,
    %c19_43 = arith.constant 19 : index
    %58 = memref.load %arg1[%c19_43] : memref<32xi32, #tpu.memory_space<smem>>
    %59 = arith.index_cast %58 : i32 to index
    %c0_44 = arith.constant 0 : index
    %60 = vector.load %arg2[%59, %c0_44] : memref<56x16xf32, #tpu.memory_space<vmem>>, vector<1x16xf32>
    %c26_45 = arith.constant 26 : index
    %c0_46 = arith.constant 0 : index
    %61 = vector.load %arg14[%c26_45, %c0_46] : memref<64x16xf32, #tpu.memory_space<vmem>>, vector<1x16xf32>
    tpu.vector_store %arg14[%c26_45, %c0_46], %60 {strides = array<i32>} : memref<64x16xf32, #tpu.memory_space<vmem>>, vector<1x16xf32>,
    %c27 = arith.constant 27 : index
    %62 = memref.load %arg1[%c27] : memref<32xi32, #tpu.memory_space<smem>>
    %63 = arith.index_cast %62 : i32 to index
    %c0_47 = arith.constant 0 : index
    %64 = vector.load %arg2[%63, %c0_47] : memref<56x16xf32, #tpu.memory_space<vmem>>, vector<1x16xf32>
    %c27_48 = arith.constant 27 : index
    %c0_49 = arith.constant 0 : index
    %65 = vector.load %arg14[%c27_48, %c0_49] : memref<64x16xf32, #tpu.memory_space<vmem>>, vector<1x16xf32>
    tpu.vector_store %arg14[%c27_48, %c0_49], %64 {strides = array<i32>} : memref<64x16xf32, #tpu.memory_space<vmem>>, vector<1x16xf32>,
    %c4 = arith.constant 4 : index
    %66 = memref.load %arg1[%c4] : memref<32xi32, #tpu.memory_space<smem>>
    %67 = arith.index_cast %66 : i32 to index
    %c0_50 = arith.constant 0 : index
    %68 = vector.load %arg2[%67, %c0_50] : memref<56x16xf32, #tpu.memory_space<vmem>>, vector<1x16xf32>
    %c32 = arith.constant 32 : index
    %c0_51 = arith.constant 0 : index
    %69 = vector.load %arg14[%c32, %c0_51] : memref<64x16xf32, #tpu.memory_space<vmem>>, vector<1x16xf32>
    tpu.vector_store %arg14[%c32, %c0_51], %68 {strides = array<i32>} : memref<64x16xf32, #tpu.memory_space<vmem>>, vector<1x16xf32>,
    %c12 = arith.constant 12 : index
    %70 = memref.load %arg1[%c12] : memref<32xi32, #tpu.memory_space<smem>>
    %71 = arith.index_cast %70 : i32 to index
    %c0_52 = arith.constant 0 : index
    %72 = vector.load %arg2[%71, %c0_52] : memref<56x16xf32, #tpu.memory_space<vmem>>, vector<1x16xf32>
    %c33 = arith.constant 33 : index
    %c0_53 = arith.constant 0 : index
    %73 = vector.load %arg14[%c33, %c0_53] : memref<64x16xf32, #tpu.memory_space<vmem>>, vector<1x16xf32>
    tpu.vector_store %arg14[%c33, %c0_53], %72 {strides = array<i32>} : memref<64x16xf32, #tpu.memory_space<vmem>>, vector<1x16xf32>,
    %c20 = arith.constant 20 : index
    %74 = memref.load %arg1[%c20] : memref<32xi32, #tpu.memory_space<smem>>
    %75 = arith.index_cast %74 : i32 to index
    %c0_54 = arith.constant 0 : index
    %76 = vector.load %arg2[%75, %c0_54] : memref<56x16xf32, #tpu.memory_space<vmem>>, vector<1x16xf32>
    %c34 = arith.constant 34 : index
    %c0_55 = arith.constant 0 : index
    %77 = vector.load %arg14[%c34, %c0_55] : memref<64x16xf32, #tpu.memory_space<vmem>>, vector<1x16xf32>
    tpu.vector_store %arg14[%c34, %c0_55], %76 {strides = array<i32>} : memref<64x16xf32, #tpu.memory_space<vmem>>, vector<1x16xf32>,
    %c28 = arith.constant 28 : index
    %78 = memref.load %arg1[%c28] : memref<32xi32, #tpu.memory_space<smem>>
    %79 = arith.index_cast %78 : i32 to index
    %c0_56 = arith.constant 0 : index
    %80 = vector.load %arg2[%79, %c0_56] : memref<56x16xf32, #tpu.memory_space<vmem>>, vector<1x16xf32>
    %c35 = arith.constant 35 : index
    %c0_57 = arith.constant 0 : index
    %81 = vector.load %arg14[%c35, %c0_57] : memref<64x16xf32, #tpu.memory_space<vmem>>, vector<1x16xf32>
    tpu.vector_store %arg14[%c35, %c0_57], %80 {strides = array<i32>} : memref<64x16xf32, #tpu.memory_space<vmem>>, vector<1x16xf32>,
    %c5 = arith.constant 5 : index
    %82 = memref.load %arg1[%c5] : memref<32xi32, #tpu.memory_space<smem>>
    %83 = arith.index_cast %82 : i32 to index
    %c0_58 = arith.constant 0 : index
    %84 = vector.load %arg2[%83, %c0_58] : memref<56x16xf32, #tpu.memory_space<vmem>>, vector<1x16xf32>
    %c40 = arith.constant 40 : index
    %c0_59 = arith.constant 0 : index
    %85 = vector.load %arg14[%c40, %c0_59] : memref<64x16xf32, #tpu.memory_space<vmem>>, vector<1x16xf32>
    tpu.vector_store %arg14[%c40, %c0_59], %84 {strides = array<i32>} : memref<64x16xf32, #tpu.memory_space<vmem>>, vector<1x16xf32>,
    %c13 = arith.constant 13 : index
    %86 = memref.load %arg1[%c13] : memref<32xi32, #tpu.memory_space<smem>>
    %87 = arith.index_cast %86 : i32 to index
    %c0_60 = arith.constant 0 : index
    %88 = vector.load %arg2[%87, %c0_60] : memref<56x16xf32, #tpu.memory_space<vmem>>, vector<1x16xf32>
    %c41 = arith.constant 41 : index
    %c0_61 = arith.constant 0 : index
    %89 = vector.load %arg14[%c41, %c0_61] : memref<64x16xf32, #tpu.memory_space<vmem>>, vector<1x16xf32>
    tpu.vector_store %arg14[%c41, %c0_61], %88 {strides = array<i32>} : memref<64x16xf32, #tpu.memory_space<vmem>>, vector<1x16xf32>,
    %c21 = arith.constant 21 : index
    %90 = memref.load %arg1[%c21] : memref<32xi32, #tpu.memory_space<smem>>
    %91 = arith.index_cast %90 : i32 to index
    %c0_62 = arith.constant 0 : index
    %92 = vector.load %arg2[%91, %c0_62] : memref<56x16xf32, #tpu.memory_space<vmem>>, vector<1x16xf32>
    %c42 = arith.constant 42 : index
    %c0_63 = arith.constant 0 : index
    %93 = vector.load %arg14[%c42, %c0_63] : memref<64x16xf32, #tpu.memory_space<vmem>>, vector<1x16xf32>
    tpu.vector_store %arg14[%c42, %c0_63], %92 {strides = array<i32>} : memref<64x16xf32, #tpu.memory_space<vmem>>, vector<1x16xf32>,
    %c29 = arith.constant 29 : index
    %94 = memref.load %arg1[%c29] : memref<32xi32, #tpu.memory_space<smem>>
    %95 = arith.index_cast %94 : i32 to index
    %c0_64 = arith.constant 0 : index
    %96 = vector.load %arg2[%95, %c0_64] : memref<56x16xf32, #tpu.memory_space<vmem>>, vector<1x16xf32>
    %c43 = arith.constant 43 : index
    %c0_65 = arith.constant 0 : index
    %97 = vector.load %arg14[%c43, %c0_65] : memref<64x16xf32, #tpu.memory_space<vmem>>, vector<1x16xf32>
    tpu.vector_store %arg14[%c43, %c0_65], %96 {strides = array<i32>} : memref<64x16xf32, #tpu.memory_space<vmem>>, vector<1x16xf32>,
    %c6 = arith.constant 6 : index
    %98 = memref.load %arg1[%c6] : memref<32xi32, #tpu.memory_space<smem>>
    %99 = arith.index_cast %98 : i32 to index
    %c0_66 = arith.constant 0 : index
    %100 = vector.load %arg2[%99, %c0_66] : memref<56x16xf32, #tpu.memory_space<vmem>>, vector<1x16xf32>
    %c48 = arith.constant 48 : index
    %c0_67 = arith.constant 0 : index
    %101 = vector.load %arg14[%c48, %c0_67] : memref<64x16xf32, #tpu.memory_space<vmem>>, vector<1x16xf32>
    tpu.vector_store %arg14[%c48, %c0_67], %100 {strides = array<i32>} : memref<64x16xf32, #tpu.memory_space<vmem>>, vector<1x16xf32>,
    %c14 = arith.constant 14 : index
    %102 = memref.load %arg1[%c14] : memref<32xi32, #tpu.memory_space<smem>>
    %103 = arith.index_cast %102 : i32 to index
    %c0_68 = arith.constant 0 : index
    %104 = vector.load %arg2[%103, %c0_68] : memref<56x16xf32, #tpu.memory_space<vmem>>, vector<1x16xf32>
    %c49 = arith.constant 49 : index
    %c0_69 = arith.constant 0 : index
    %105 = vector.load %arg14[%c49, %c0_69] : memref<64x16xf32, #tpu.memory_space<vmem>>, vector<1x16xf32>
    tpu.vector_store %arg14[%c49, %c0_69], %104 {strides = array<i32>} : memref<64x16xf32, #tpu.memory_space<vmem>>, vector<1x16xf32>,
    %c22 = arith.constant 22 : index
    %106 = memref.load %arg1[%c22] : memref<32xi32, #tpu.memory_space<smem>>
    %107 = arith.index_cast %106 : i32 to index
    %c0_70 = arith.constant 0 : index
    %108 = vector.load %arg2[%107, %c0_70] : memref<56x16xf32, #tpu.memory_space<vmem>>, vector<1x16xf32>
    %c50 = arith.constant 50 : index
    %c0_71 = arith.constant 0 : index
    %109 = vector.load %arg14[%c50, %c0_71] : memref<64x16xf32, #tpu.memory_space<vmem>>, vector<1x16xf32>
    tpu.vector_store %arg14[%c50, %c0_71], %108 {strides = array<i32>} : memref<64x16xf32, #tpu.memory_space<vmem>>, vector<1x16xf32>,
    %c30 = arith.constant 30 : index
    %110 = memref.load %arg1[%c30] : memref<32xi32, #tpu.memory_space<smem>>
    %111 = arith.index_cast %110 : i32 to index
    %c0_72 = arith.constant 0 : index
    %112 = vector.load %arg2[%111, %c0_72] : memref<56x16xf32, #tpu.memory_space<vmem>>, vector<1x16xf32>
    %c51 = arith.constant 51 : index
    %c0_73 = arith.constant 0 : index
    %113 = vector.load %arg14[%c51, %c0_73] : memref<64x16xf32, #tpu.memory_space<vmem>>, vector<1x16xf32>
    tpu.vector_store %arg14[%c51, %c0_73], %112 {strides = array<i32>} : memref<64x16xf32, #tpu.memory_space<vmem>>, vector<1x16xf32>,
    %c7 = arith.constant 7 : index
    %114 = memref.load %arg1[%c7] : memref<32xi32, #tpu.memory_space<smem>>
    %115 = arith.index_cast %114 : i32 to index
    %c0_74 = arith.constant 0 : index
    %116 = vector.load %arg2[%115, %c0_74] : memref<56x16xf32, #tpu.memory_space<vmem>>, vector<1x16xf32>
    %c56 = arith.constant 56 : index
    %c0_75 = arith.constant 0 : index
    %117 = vector.load %arg14[%c56, %c0_75] : memref<64x16xf32, #tpu.memory_space<vmem>>, vector<1x16xf32>
    tpu.vector_store %arg14[%c56, %c0_75], %116 {strides = array<i32>} : memref<64x16xf32, #tpu.memory_space<vmem>>, vector<1x16xf32>,
    %c15 = arith.constant 15 : index
    %118 = memref.load %arg1[%c15] : memref<32xi32, #tpu.memory_space<smem>>
    %119 = arith.index_cast %118 : i32 to index
    %c0_76 = arith.constant 0 : index
    %120 = vector.load %arg2[%119, %c0_76] : memref<56x16xf32, #tpu.memory_space<vmem>>, vector<1x16xf32>
    %c57 = arith.constant 57 : index
    %c0_77 = arith.constant 0 : index
    %121 = vector.load %arg14[%c57, %c0_77] : memref<64x16xf32, #tpu.memory_space<vmem>>, vector<1x16xf32>
    tpu.vector_store %arg14[%c57, %c0_77], %120 {strides = array<i32>} : memref<64x16xf32, #tpu.memory_space<vmem>>, vector<1x16xf32>,
    %c23 = arith.constant 23 : index
    %122 = memref.load %arg1[%c23] : memref<32xi32, #tpu.memory_space<smem>>
    %123 = arith.index_cast %122 : i32 to index
    %c0_78 = arith.constant 0 : index
    %124 = vector.load %arg2[%123, %c0_78] : memref<56x16xf32, #tpu.memory_space<vmem>>, vector<1x16xf32>
    %c58 = arith.constant 58 : index
    %c0_79 = arith.constant 0 : index
    %125 = vector.load %arg14[%c58, %c0_79] : memref<64x16xf32, #tpu.memory_space<vmem>>, vector<1x16xf32>
    tpu.vector_store %arg14[%c58, %c0_79], %124 {strides = array<i32>} : memref<64x16xf32, #tpu.memory_space<vmem>>, vector<1x16xf32>,
    %c31 = arith.constant 31 : index
    %126 = memref.load %arg1[%c31] : memref<32xi32, #tpu.memory_space<smem>>
    %127 = arith.index_cast %126 : i32 to index
    %c0_80 = arith.constant 0 : index
    %128 = vector.load %arg2[%127, %c0_80] : memref<56x16xf32, #tpu.memory_space<vmem>>, vector<1x16xf32>
    %c59 = arith.constant 59 : index
    %c0_81 = arith.constant 0 : index
    %129 = vector.load %arg14[%c59, %c0_81] : memref<64x16xf32, #tpu.memory_space<vmem>>, vector<1x16xf32>
    tpu.vector_store %arg14[%c59, %c0_81], %128 {strides = array<i32>} : memref<64x16xf32, #tpu.memory_space<vmem>>, vector<1x16xf32>,
    %c0_82 = arith.constant 0 : index
    %c0_83 = arith.constant 0 : index
    %130 = vector.load %arg14[%c0_82, %c0_83] : memref<64x16xf32, #tpu.memory_space<vmem>>, vector<64x16xf32>
    %c0_84 = arith.constant 0 : index
    %c0_85 = arith.constant 0 : index
    %131 = vector.load %arg3[%c0_84, %c0_85] : memref<16x384xf32, #tpu.memory_space<vmem>>, vector<16x384xf32>
    %cst_86 = arith.constant dense<0.000000e+00> : vector<64x384xf32>
    %132 = tpu.matmul %130, %131, %cst_86 {dimension_numbers = #tpu.dot_dimension_numbers<[1], [0], [0], [1], [0, 0, 1, 1], [], []>} : vector<64x16xf32>, vector<16x384xf32>, vector<64x384xf32> -> vector<64x384xf32>
    %c0_87 = arith.constant 0 : index
    %c0_88 = arith.constant 0 : index
    %133 = vector.load %arg4[%c0_87, %c0_88] : memref<1x384xf32, #tpu.memory_space<vmem>>, vector<1x384xf32>
    %134 = vector.broadcast %133 : vector<1x384xf32> to vector<64x384xf32>
    %135 = arith.addf %132, %134 : vector<64x384xf32>
    %136 = vector.shape_cast %135 : vector<64x384xf32> to vector<8x8x384xf32>
    %c0_89 = arith.constant 0 : index
    %c0_90 = arith.constant 0 : index
    %c0_91 = arith.constant 0 : index
    %137 = vector.load %arg15[%c0_89, %c0_90, %c0_91] : memref<8x8x384xf32, #tpu.memory_space<vmem>>, vector<8x8x384xf32>
    tpu.vector_store %arg15[%c0_89, %c0_90, %c0_91], %136 {strides = array<i32>} : memref<8x8x384xf32, #tpu.memory_space<vmem>>, vector<8x8x384xf32>,
    %c0_92 = arith.constant 0 : index
    %c0_93 = arith.constant 0 : index
    %138 = vector.load %arg6[%c0_92, %c0_93] : memref<1x768xf32, #tpu.memory_space<vmem>>, vector<1x768xf32>
    %139 = vector.shape_cast %138 : vector<1x768xf32> to vector<1x768xf32>
    %140 = vector.broadcast %139 : vector<1x768xf32> to vector<8x768xf32>
    %c0_94 = arith.constant 0 : index
    %c0_95 = arith.constant 0 : index
    %141 = vector.load %arg8[%c0_94, %c0_95] : memref<1x384xf32, #tpu.memory_space<vmem>>, vector<1x384xf32>
    %142 = vector.shape_cast %141 : vector<1x384xf32> to vector<1x384xf32>
    %143 = vector.broadcast %142 : vector<1x384xf32> to vector<8x384xf32>
    %cst_96 = arith.constant 0.000000e+00 : f32
    %144 = vector.broadcast %cst_96 : f32 to vector<8x128xf32>
    %c0_i32 = arith.constant 0 : i32
    %145 = tpu.concatenate %144, %144 in 1 : vector<8x128xf32>, vector<8x128xf32> -> vector<8x256xf32>
    %c0_97 = arith.constant 0 : index
    %c0_98 = arith.constant 0 : index
    %146 = vector.load %arg5[%c0_97, %c0_98] : memref<256x768xf32, #tpu.memory_space<vmem>>, vector<256x768xf32>
    %cst_99 = arith.constant dense<0.000000e+00> : vector<8x768xf32>
    %147 = tpu.matmul %145, %146, %cst_99 {dimension_numbers = #tpu.dot_dimension_numbers<[1], [0], [0], [1], [0, 0, 1, 1], [], []>} : vector<8x256xf32>, vector<256x768xf32>, vector<8x768xf32> -> vector<8x768xf32>
    %148 = arith.addf %147, %140 : vector<8x768xf32>
    %149 = arith.index_cast %c0_i32 : i32 to index
    %c0_100 = arith.constant 0 : index
    %c0_101 = arith.constant 0 : index
    %150 = vector.load %arg15[%149, %c0_100, %c0_101] : memref<8x8x384xf32, #tpu.memory_space<vmem>>, vector<1x8x384xf32>
    %151 = vector.shape_cast %150 : vector<1x8x384xf32> to vector<8x384xf32>
    %152 = vector.extract_strided_slice %148 {offsets = [0, 0], sizes = [8, 384], strides = [1, 1]} : vector<8x768xf32> to vector<8x384xf32>
    %153 = vector.extract_strided_slice %151 {offsets = [0, 0], sizes = [8, 256], strides = [1, 1]} : vector<8x384xf32> to vector<8x256xf32>
    %154 = vector.extract_strided_slice %152 {offsets = [0, 0], sizes = [8, 256], strides = [1, 1]} : vector<8x384xf32> to vector<8x256xf32>
    %155 = arith.addf %153, %154 : vector<8x256xf32>
    %156 = arith.negf %155 : vector<8x256xf32>
    %157 = math.exp %156 : vector<8x256xf32>
    %cst_102 = arith.constant 1.000000e+00 : f32
    %158 = vector.broadcast %cst_102 : f32 to vector<8x256xf32>
    %159 = arith.addf %158, %157 : vector<8x256xf32>
    %160 = arith.divf %158, %159 : vector<8x256xf32>
    %161 = vector.extract_strided_slice %160 {offsets = [0, 0], sizes = [8, 128], strides = [1, 1]} : vector<8x256xf32> to vector<8x128xf32>
    %162 = vector.extract_strided_slice %160 {offsets = [0, 128], sizes = [8, 128], strides = [1, 1]} : vector<8x256xf32> to vector<8x128xf32>
    %163 = vector.extract_strided_slice %151 {offsets = [0, 256], sizes = [8, 128], strides = [1, 1]} : vector<8x384xf32> to vector<8x128xf32>
    %164 = vector.extract_strided_slice %152 {offsets = [0, 256], sizes = [8, 128], strides = [1, 1]} : vector<8x384xf32> to vector<8x128xf32>
    %165 = arith.mulf %161, %164 : vector<8x128xf32>
    %166 = arith.addf %163, %165 : vector<8x128xf32>
    %167 = math.tanh %166 : vector<8x128xf32>
    %cst_103 = arith.constant 1.000000e+00 : f32
    %168 = vector.broadcast %cst_103 : f32 to vector<8x128xf32>
    %169 = arith.subf %168, %162 : vector<8x128xf32>
    %170 = arith.mulf %169, %167 : vector<8x128xf32>
    %171 = arith.mulf %162, %144 : vector<8x128xf32>
    %172 = arith.addf %170, %171 : vector<8x128xf32>
    %c0_104 = arith.constant 0 : index
    %c0_105 = arith.constant 0 : index
    %173 = vector.load %arg7[%c0_104, %c0_105] : memref<128x384xf32, #tpu.memory_space<vmem>>, vector<128x384xf32>
    %cst_106 = arith.constant dense<0.000000e+00> : vector<8x384xf32>
    %174 = tpu.matmul %172, %173, %cst_106 {dimension_numbers = #tpu.dot_dimension_numbers<[1], [0], [0], [1], [0, 0, 1, 1], [], []>} : vector<8x128xf32>, vector<128x384xf32>, vector<8x384xf32> -> vector<8x384xf32>
    %175 = arith.addf %174, %143 : vector<8x384xf32>
    %176 = vector.extract_strided_slice %148 {offsets = [0, 384], sizes = [8, 384], strides = [1, 1]} : vector<8x768xf32> to vector<8x384xf32>
    %177 = vector.extract_strided_slice %175 {offsets = [0, 0], sizes = [8, 256], strides = [1, 1]} : vector<8x384xf32> to vector<8x256xf32>
    %178 = vector.extract_strided_slice %176 {offsets = [0, 0], sizes = [8, 256], strides = [1, 1]} : vector<8x384xf32> to vector<8x256xf32>
    %179 = arith.addf %177, %178 : vector<8x256xf32>
    %180 = arith.negf %179 : vector<8x256xf32>
    %181 = math.exp %180 : vector<8x256xf32>
    %cst_107 = arith.constant 1.000000e+00 : f32
    %182 = vector.broadcast %cst_107 : f32 to vector<8x256xf32>
    %183 = arith.addf %182, %181 : vector<8x256xf32>
    %184 = arith.divf %182, %183 : vector<8x256xf32>
    %185 = vector.extract_strided_slice %184 {offsets = [0, 0], sizes = [8, 128], strides = [1, 1]} : vector<8x256xf32> to vector<8x128xf32>
    %186 = vector.extract_strided_slice %184 {offsets = [0, 128], sizes = [8, 128], strides = [1, 1]} : vector<8x256xf32> to vector<8x128xf32>
    %187 = vector.extract_strided_slice %175 {offsets = [0, 256], sizes = [8, 128], strides = [1, 1]} : vector<8x384xf32> to vector<8x128xf32>
    %188 = vector.extract_strided_slice %176 {offsets = [0, 256], sizes = [8, 128], strides = [1, 1]} : vector<8x384xf32> to vector<8x128xf32>
    %189 = arith.mulf %185, %188 : vector<8x128xf32>
    %190 = arith.addf %187, %189 : vector<8x128xf32>
    %191 = math.tanh %190 : vector<8x128xf32>
    %cst_108 = arith.constant 1.000000e+00 : f32
    %192 = vector.broadcast %cst_108 : f32 to vector<8x128xf32>
    %193 = arith.subf %192, %186 : vector<8x128xf32>
    %194 = arith.mulf %193, %191 : vector<8x128xf32>
    %195 = arith.mulf %186, %144 : vector<8x128xf32>
    %196 = arith.addf %194, %195 : vector<8x128xf32>
    %c1_i32 = arith.constant 1 : i32
    %197 = tpu.concatenate %172, %196 in 1 : vector<8x128xf32>, vector<8x128xf32> -> vector<8x256xf32>
    %c0_109 = arith.constant 0 : index
    %c0_110 = arith.constant 0 : index
    %198 = vector.load %arg5[%c0_109, %c0_110] : memref<256x768xf32, #tpu.memory_space<vmem>>, vector<256x768xf32>
    %cst_111 = arith.constant dense<0.000000e+00> : vector<8x768xf32>
    %199 = tpu.matmul %197, %198, %cst_111 {dimension_numbers = #tpu.dot_dimension_numbers<[1], [0], [0], [1], [0, 0, 1, 1], [], []>} : vector<8x256xf32>, vector<256x768xf32>, vector<8x768xf32> -> vector<8x768xf32>
    %200 = arith.addf %199, %140 : vector<8x768xf32>
    %201 = arith.index_cast %c1_i32 : i32 to index
    %c0_112 = arith.constant 0 : index
    %c0_113 = arith.constant 0 : index
    %202 = vector.load %arg15[%201, %c0_112, %c0_113] : memref<8x8x384xf32, #tpu.memory_space<vmem>>, vector<1x8x384xf32>
    %203 = vector.shape_cast %202 : vector<1x8x384xf32> to vector<8x384xf32>
    %204 = vector.extract_strided_slice %200 {offsets = [0, 0], sizes = [8, 384], strides = [1, 1]} : vector<8x768xf32> to vector<8x384xf32>
    %205 = vector.extract_strided_slice %203 {offsets = [0, 0], sizes = [8, 256], strides = [1, 1]} : vector<8x384xf32> to vector<8x256xf32>
    %206 = vector.extract_strided_slice %204 {offsets = [0, 0], sizes = [8, 256], strides = [1, 1]} : vector<8x384xf32> to vector<8x256xf32>
    %207 = arith.addf %205, %206 : vector<8x256xf32>
    %208 = arith.negf %207 : vector<8x256xf32>
    %209 = math.exp %208 : vector<8x256xf32>
    %cst_114 = arith.constant 1.000000e+00 : f32
    %210 = vector.broadcast %cst_114 : f32 to vector<8x256xf32>
    %211 = arith.addf %210, %209 : vector<8x256xf32>
    %212 = arith.divf %210, %211 : vector<8x256xf32>
    %213 = vector.extract_strided_slice %212 {offsets = [0, 0], sizes = [8, 128], strides = [1, 1]} : vector<8x256xf32> to vector<8x128xf32>
    %214 = vector.extract_strided_slice %212 {offsets = [0, 128], sizes = [8, 128], strides = [1, 1]} : vector<8x256xf32> to vector<8x128xf32>
    %215 = vector.extract_strided_slice %203 {offsets = [0, 256], sizes = [8, 128], strides = [1, 1]} : vector<8x384xf32> to vector<8x128xf32>
    %216 = vector.extract_strided_slice %204 {offsets = [0, 256], sizes = [8, 128], strides = [1, 1]} : vector<8x384xf32> to vector<8x128xf32>
    %217 = arith.mulf %213, %216 : vector<8x128xf32>
    %218 = arith.addf %215, %217 : vector<8x128xf32>
    %219 = math.tanh %218 : vector<8x128xf32>
    %cst_115 = arith.constant 1.000000e+00 : f32
    %220 = vector.broadcast %cst_115 : f32 to vector<8x128xf32>
    %221 = arith.subf %220, %214 : vector<8x128xf32>
    %222 = arith.mulf %221, %219 : vector<8x128xf32>
    %223 = arith.mulf %214, %172 : vector<8x128xf32>
    %224 = arith.addf %222, %223 : vector<8x128xf32>
    %c0_116 = arith.constant 0 : index
    %c0_117 = arith.constant 0 : index
    %225 = vector.load %arg7[%c0_116, %c0_117] : memref<128x384xf32, #tpu.memory_space<vmem>>, vector<128x384xf32>
    %cst_118 = arith.constant dense<0.000000e+00> : vector<8x384xf32>
    %226 = tpu.matmul %224, %225, %cst_118 {dimension_numbers = #tpu.dot_dimension_numbers<[1], [0], [0], [1], [0, 0, 1, 1], [], []>} : vector<8x128xf32>, vector<128x384xf32>, vector<8x384xf32> -> vector<8x384xf32>
    %227 = arith.addf %226, %143 : vector<8x384xf32>
    %228 = vector.extract_strided_slice %200 {offsets = [0, 384], sizes = [8, 384], strides = [1, 1]} : vector<8x768xf32> to vector<8x384xf32>
    %229 = vector.extract_strided_slice %227 {offsets = [0, 0], sizes = [8, 256], strides = [1, 1]} : vector<8x384xf32> to vector<8x256xf32>
    %230 = vector.extract_strided_slice %228 {offsets = [0, 0], sizes = [8, 256], strides = [1, 1]} : vector<8x384xf32> to vector<8x256xf32>
    %231 = arith.addf %229, %230 : vector<8x256xf32>
    %232 = arith.negf %231 : vector<8x256xf32>
    %233 = math.exp %232 : vector<8x256xf32>
    %cst_119 = arith.constant 1.000000e+00 : f32
    %234 = vector.broadcast %cst_119 : f32 to vector<8x256xf32>
    %235 = arith.addf %234, %233 : vector<8x256xf32>
    %236 = arith.divf %234, %235 : vector<8x256xf32>
    %237 = vector.extract_strided_slice %236 {offsets = [0, 0], sizes = [8, 128], strides = [1, 1]} : vector<8x256xf32> to vector<8x128xf32>
    %238 = vector.extract_strided_slice %236 {offsets = [0, 128], sizes = [8, 128], strides = [1, 1]} : vector<8x256xf32> to vector<8x128xf32>
    %239 = vector.extract_strided_slice %227 {offsets = [0, 256], sizes = [8, 128], strides = [1, 1]} : vector<8x384xf32> to vector<8x128xf32>
    %240 = vector.extract_strided_slice %228 {offsets = [0, 256], sizes = [8, 128], strides = [1, 1]} : vector<8x384xf32> to vector<8x128xf32>
    %241 = arith.mulf %237, %240 : vector<8x128xf32>
    %242 = arith.addf %239, %241 : vector<8x128xf32>
    %243 = math.tanh %242 : vector<8x128xf32>
    %cst_120 = arith.constant 1.000000e+00 : f32
    %244 = vector.broadcast %cst_120 : f32 to vector<8x128xf32>
    %245 = arith.subf %244, %238 : vector<8x128xf32>
    %246 = arith.mulf %245, %243 : vector<8x128xf32>
    %247 = arith.mulf %238, %196 : vector<8x128xf32>
    %248 = arith.addf %246, %247 : vector<8x128xf32>
    %c2_i32 = arith.constant 2 : i32
    %249 = tpu.concatenate %224, %248 in 1 : vector<8x128xf32>, vector<8x128xf32> -> vector<8x256xf32>
    %c0_121 = arith.constant 0 : index
    %c0_122 = arith.constant 0 : index
    %250 = vector.load %arg5[%c0_121, %c0_122] : memref<256x768xf32, #tpu.memory_space<vmem>>, vector<256x768xf32>
    %cst_123 = arith.constant dense<0.000000e+00> : vector<8x768xf32>
    %251 = tpu.matmul %249, %250, %cst_123 {dimension_numbers = #tpu.dot_dimension_numbers<[1], [0], [0], [1], [0, 0, 1, 1], [], []>} : vector<8x256xf32>, vector<256x768xf32>, vector<8x768xf32> -> vector<8x768xf32>
    %252 = arith.addf %251, %140 : vector<8x768xf32>
    %253 = arith.index_cast %c2_i32 : i32 to index
    %c0_124 = arith.constant 0 : index
    %c0_125 = arith.constant 0 : index
    %254 = vector.load %arg15[%253, %c0_124, %c0_125] : memref<8x8x384xf32, #tpu.memory_space<vmem>>, vector<1x8x384xf32>
    %255 = vector.shape_cast %254 : vector<1x8x384xf32> to vector<8x384xf32>
    %256 = vector.extract_strided_slice %252 {offsets = [0, 0], sizes = [8, 384], strides = [1, 1]} : vector<8x768xf32> to vector<8x384xf32>
    %257 = vector.extract_strided_slice %255 {offsets = [0, 0], sizes = [8, 256], strides = [1, 1]} : vector<8x384xf32> to vector<8x256xf32>
    %258 = vector.extract_strided_slice %256 {offsets = [0, 0], sizes = [8, 256], strides = [1, 1]} : vector<8x384xf32> to vector<8x256xf32>
    %259 = arith.addf %257, %258 : vector<8x256xf32>
    %260 = arith.negf %259 : vector<8x256xf32>
    %261 = math.exp %260 : vector<8x256xf32>
    %cst_126 = arith.constant 1.000000e+00 : f32
    %262 = vector.broadcast %cst_126 : f32 to vector<8x256xf32>
    %263 = arith.addf %262, %261 : vector<8x256xf32>
    %264 = arith.divf %262, %263 : vector<8x256xf32>
    %265 = vector.extract_strided_slice %264 {offsets = [0, 0], sizes = [8, 128], strides = [1, 1]} : vector<8x256xf32> to vector<8x128xf32>
    %266 = vector.extract_strided_slice %264 {offsets = [0, 128], sizes = [8, 128], strides = [1, 1]} : vector<8x256xf32> to vector<8x128xf32>
    %267 = vector.extract_strided_slice %255 {offsets = [0, 256], sizes = [8, 128], strides = [1, 1]} : vector<8x384xf32> to vector<8x128xf32>
    %268 = vector.extract_strided_slice %256 {offsets = [0, 256], sizes = [8, 128], strides = [1, 1]} : vector<8x384xf32> to vector<8x128xf32>
    %269 = arith.mulf %265, %268 : vector<8x128xf32>
    %270 = arith.addf %267, %269 : vector<8x128xf32>
    %271 = math.tanh %270 : vector<8x128xf32>
    %cst_127 = arith.constant 1.000000e+00 : f32
    %272 = vector.broadcast %cst_127 : f32 to vector<8x128xf32>
    %273 = arith.subf %272, %266 : vector<8x128xf32>
    %274 = arith.mulf %273, %271 : vector<8x128xf32>
    %275 = arith.mulf %266, %224 : vector<8x128xf32>
    %276 = arith.addf %274, %275 : vector<8x128xf32>
    %c0_128 = arith.constant 0 : index
    %c0_129 = arith.constant 0 : index
    %277 = vector.load %arg7[%c0_128, %c0_129] : memref<128x384xf32, #tpu.memory_space<vmem>>, vector<128x384xf32>
    %cst_130 = arith.constant dense<0.000000e+00> : vector<8x384xf32>
    %278 = tpu.matmul %276, %277, %cst_130 {dimension_numbers = #tpu.dot_dimension_numbers<[1], [0], [0], [1], [0, 0, 1, 1], [], []>} : vector<8x128xf32>, vector<128x384xf32>, vector<8x384xf32> -> vector<8x384xf32>
    %279 = arith.addf %278, %143 : vector<8x384xf32>
    %280 = vector.extract_strided_slice %252 {offsets = [0, 384], sizes = [8, 384], strides = [1, 1]} : vector<8x768xf32> to vector<8x384xf32>
    %281 = vector.extract_strided_slice %279 {offsets = [0, 0], sizes = [8, 256], strides = [1, 1]} : vector<8x384xf32> to vector<8x256xf32>
    %282 = vector.extract_strided_slice %280 {offsets = [0, 0], sizes = [8, 256], strides = [1, 1]} : vector<8x384xf32> to vector<8x256xf32>
    %283 = arith.addf %281, %282 : vector<8x256xf32>
    %284 = arith.negf %283 : vector<8x256xf32>
    %285 = math.exp %284 : vector<8x256xf32>
    %cst_131 = arith.constant 1.000000e+00 : f32
    %286 = vector.broadcast %cst_131 : f32 to vector<8x256xf32>
    %287 = arith.addf %286, %285 : vector<8x256xf32>
    %288 = arith.divf %286, %287 : vector<8x256xf32>
    %289 = vector.extract_strided_slice %288 {offsets = [0, 0], sizes = [8, 128], strides = [1, 1]} : vector<8x256xf32> to vector<8x128xf32>
    %290 = vector.extract_strided_slice %288 {offsets = [0, 128], sizes = [8, 128], strides = [1, 1]} : vector<8x256xf32> to vector<8x128xf32>
    %291 = vector.extract_strided_slice %279 {offsets = [0, 256], sizes = [8, 128], strides = [1, 1]} : vector<8x384xf32> to vector<8x128xf32>
    %292 = vector.extract_strided_slice %280 {offsets = [0, 256], sizes = [8, 128], strides = [1, 1]} : vector<8x384xf32> to vector<8x128xf32>
    %293 = arith.mulf %289, %292 : vector<8x128xf32>
    %294 = arith.addf %291, %293 : vector<8x128xf32>
    %295 = math.tanh %294 : vector<8x128xf32>
    %cst_132 = arith.constant 1.000000e+00 : f32
    %296 = vector.broadcast %cst_132 : f32 to vector<8x128xf32>
    %297 = arith.subf %296, %290 : vector<8x128xf32>
    %298 = arith.mulf %297, %295 : vector<8x128xf32>
    %299 = arith.mulf %290, %248 : vector<8x128xf32>
    %300 = arith.addf %298, %299 : vector<8x128xf32>
    %c3_i32 = arith.constant 3 : i32
    %301 = tpu.concatenate %276, %300 in 1 : vector<8x128xf32>, vector<8x128xf32> -> vector<8x256xf32>
    %c0_133 = arith.constant 0 : index
    %c0_134 = arith.constant 0 : index
    %302 = vector.load %arg5[%c0_133, %c0_134] : memref<256x768xf32, #tpu.memory_space<vmem>>, vector<256x768xf32>
    %cst_135 = arith.constant dense<0.000000e+00> : vector<8x768xf32>
    %303 = tpu.matmul %301, %302, %cst_135 {dimension_numbers = #tpu.dot_dimension_numbers<[1], [0], [0], [1], [0, 0, 1, 1], [], []>} : vector<8x256xf32>, vector<256x768xf32>, vector<8x768xf32> -> vector<8x768xf32>
    %304 = arith.addf %303, %140 : vector<8x768xf32>
    %305 = arith.index_cast %c3_i32 : i32 to index
    %c0_136 = arith.constant 0 : index
    %c0_137 = arith.constant 0 : index
    %306 = vector.load %arg15[%305, %c0_136, %c0_137] : memref<8x8x384xf32, #tpu.memory_space<vmem>>, vector<1x8x384xf32>
    %307 = vector.shape_cast %306 : vector<1x8x384xf32> to vector<8x384xf32>
    %308 = vector.extract_strided_slice %304 {offsets = [0, 0], sizes = [8, 384], strides = [1, 1]} : vector<8x768xf32> to vector<8x384xf32>
    %309 = vector.extract_strided_slice %307 {offsets = [0, 0], sizes = [8, 256], strides = [1, 1]} : vector<8x384xf32> to vector<8x256xf32>
    %310 = vector.extract_strided_slice %308 {offsets = [0, 0], sizes = [8, 256], strides = [1, 1]} : vector<8x384xf32> to vector<8x256xf32>
    %311 = arith.addf %309, %310 : vector<8x256xf32>
    %312 = arith.negf %311 : vector<8x256xf32>
    %313 = math.exp %312 : vector<8x256xf32>
    %cst_138 = arith.constant 1.000000e+00 : f32
    %314 = vector.broadcast %cst_138 : f32 to vector<8x256xf32>
    %315 = arith.addf %314, %313 : vector<8x256xf32>
    %316 = arith.divf %314, %315 : vector<8x256xf32>
    %317 = vector.extract_strided_slice %316 {offsets = [0, 0], sizes = [8, 128], strides = [1, 1]} : vector<8x256xf32> to vector<8x128xf32>
    %318 = vector.extract_strided_slice %316 {offsets = [0, 128], sizes = [8, 128], strides = [1, 1]} : vector<8x256xf32> to vector<8x128xf32>
    %319 = vector.extract_strided_slice %307 {offsets = [0, 256], sizes = [8, 128], strides = [1, 1]} : vector<8x384xf32> to vector<8x128xf32>
    %320 = vector.extract_strided_slice %308 {offsets = [0, 256], sizes = [8, 128], strides = [1, 1]} : vector<8x384xf32> to vector<8x128xf32>
    %321 = arith.mulf %317, %320 : vector<8x128xf32>
    %322 = arith.addf %319, %321 : vector<8x128xf32>
    %323 = math.tanh %322 : vector<8x128xf32>
    %cst_139 = arith.constant 1.000000e+00 : f32
    %324 = vector.broadcast %cst_139 : f32 to vector<8x128xf32>
    %325 = arith.subf %324, %318 : vector<8x128xf32>
    %326 = arith.mulf %325, %323 : vector<8x128xf32>
    %327 = arith.mulf %318, %276 : vector<8x128xf32>
    %328 = arith.addf %326, %327 : vector<8x128xf32>
    %c0_140 = arith.constant 0 : index
    %c0_141 = arith.constant 0 : index
    %329 = vector.load %arg7[%c0_140, %c0_141] : memref<128x384xf32, #tpu.memory_space<vmem>>, vector<128x384xf32>
    %cst_142 = arith.constant dense<0.000000e+00> : vector<8x384xf32>
    %330 = tpu.matmul %328, %329, %cst_142 {dimension_numbers = #tpu.dot_dimension_numbers<[1], [0], [0], [1], [0, 0, 1, 1], [], []>} : vector<8x128xf32>, vector<128x384xf32>, vector<8x384xf32> -> vector<8x384xf32>
    %331 = arith.addf %330, %143 : vector<8x384xf32>
    %332 = vector.extract_strided_slice %304 {offsets = [0, 384], sizes = [8, 384], strides = [1, 1]} : vector<8x768xf32> to vector<8x384xf32>
    %333 = vector.extract_strided_slice %331 {offsets = [0, 0], sizes = [8, 256], strides = [1, 1]} : vector<8x384xf32> to vector<8x256xf32>
    %334 = vector.extract_strided_slice %332 {offsets = [0, 0], sizes = [8, 256], strides = [1, 1]} : vector<8x384xf32> to vector<8x256xf32>
    %335 = arith.addf %333, %334 : vector<8x256xf32>
    %336 = arith.negf %335 : vector<8x256xf32>
    %337 = math.exp %336 : vector<8x256xf32>
    %cst_143 = arith.constant 1.000000e+00 : f32
    %338 = vector.broadcast %cst_143 : f32 to vector<8x256xf32>
    %339 = arith.addf %338, %337 : vector<8x256xf32>
    %340 = arith.divf %338, %339 : vector<8x256xf32>
    %341 = vector.extract_strided_slice %340 {offsets = [0, 0], sizes = [8, 128], strides = [1, 1]} : vector<8x256xf32> to vector<8x128xf32>
    %342 = vector.extract_strided_slice %340 {offsets = [0, 128], sizes = [8, 128], strides = [1, 1]} : vector<8x256xf32> to vector<8x128xf32>
    %343 = vector.extract_strided_slice %331 {offsets = [0, 256], sizes = [8, 128], strides = [1, 1]} : vector<8x384xf32> to vector<8x128xf32>
    %344 = vector.extract_strided_slice %332 {offsets = [0, 256], sizes = [8, 128], strides = [1, 1]} : vector<8x384xf32> to vector<8x128xf32>
    %345 = arith.mulf %341, %344 : vector<8x128xf32>
    %346 = arith.addf %343, %345 : vector<8x128xf32>
    %347 = math.tanh %346 : vector<8x128xf32>
    %cst_144 = arith.constant 1.000000e+00 : f32
    %348 = vector.broadcast %cst_144 : f32 to vector<8x128xf32>
    %349 = arith.subf %348, %342 : vector<8x128xf32>
    %350 = arith.mulf %349, %347 : vector<8x128xf32>
    %351 = arith.mulf %342, %300 : vector<8x128xf32>
    %352 = arith.addf %350, %351 : vector<8x128xf32>
    %c4_i32 = arith.constant 4 : i32
    %353 = tpu.concatenate %328, %352 in 1 : vector<8x128xf32>, vector<8x128xf32> -> vector<8x256xf32>
    %c0_145 = arith.constant 0 : index
    %c0_146 = arith.constant 0 : index
    %354 = vector.load %arg5[%c0_145, %c0_146] : memref<256x768xf32, #tpu.memory_space<vmem>>, vector<256x768xf32>
    %cst_147 = arith.constant dense<0.000000e+00> : vector<8x768xf32>
    %355 = tpu.matmul %353, %354, %cst_147 {dimension_numbers = #tpu.dot_dimension_numbers<[1], [0], [0], [1], [0, 0, 1, 1], [], []>} : vector<8x256xf32>, vector<256x768xf32>, vector<8x768xf32> -> vector<8x768xf32>
    %356 = arith.addf %355, %140 : vector<8x768xf32>
    %357 = arith.index_cast %c4_i32 : i32 to index
    %c0_148 = arith.constant 0 : index
    %c0_149 = arith.constant 0 : index
    %358 = vector.load %arg15[%357, %c0_148, %c0_149] : memref<8x8x384xf32, #tpu.memory_space<vmem>>, vector<1x8x384xf32>
    %359 = vector.shape_cast %358 : vector<1x8x384xf32> to vector<8x384xf32>
    %360 = vector.extract_strided_slice %356 {offsets = [0, 0], sizes = [8, 384], strides = [1, 1]} : vector<8x768xf32> to vector<8x384xf32>
    %361 = vector.extract_strided_slice %359 {offsets = [0, 0], sizes = [8, 256], strides = [1, 1]} : vector<8x384xf32> to vector<8x256xf32>
    %362 = vector.extract_strided_slice %360 {offsets = [0, 0], sizes = [8, 256], strides = [1, 1]} : vector<8x384xf32> to vector<8x256xf32>
    %363 = arith.addf %361, %362 : vector<8x256xf32>
    %364 = arith.negf %363 : vector<8x256xf32>
    %365 = math.exp %364 : vector<8x256xf32>
    %cst_150 = arith.constant 1.000000e+00 : f32
    %366 = vector.broadcast %cst_150 : f32 to vector<8x256xf32>
    %367 = arith.addf %366, %365 : vector<8x256xf32>
    %368 = arith.divf %366, %367 : vector<8x256xf32>
    %369 = vector.extract_strided_slice %368 {offsets = [0, 0], sizes = [8, 128], strides = [1, 1]} : vector<8x256xf32> to vector<8x128xf32>
    %370 = vector.extract_strided_slice %368 {offsets = [0, 128], sizes = [8, 128], strides = [1, 1]} : vector<8x256xf32> to vector<8x128xf32>
    %371 = vector.extract_strided_slice %359 {offsets = [0, 256], sizes = [8, 128], strides = [1, 1]} : vector<8x384xf32> to vector<8x128xf32>
    %372 = vector.extract_strided_slice %360 {offsets = [0, 256], sizes = [8, 128], strides = [1, 1]} : vector<8x384xf32> to vector<8x128xf32>
    %373 = arith.mulf %369, %372 : vector<8x128xf32>
    %374 = arith.addf %371, %373 : vector<8x128xf32>
    %375 = math.tanh %374 : vector<8x128xf32>
    %cst_151 = arith.constant 1.000000e+00 : f32
    %376 = vector.broadcast %cst_151 : f32 to vector<8x128xf32>
    %377 = arith.subf %376, %370 : vector<8x128xf32>
    %378 = arith.mulf %377, %375 : vector<8x128xf32>
    %379 = arith.mulf %370, %328 : vector<8x128xf32>
    %380 = arith.addf %378, %379 : vector<8x128xf32>
    %c0_152 = arith.constant 0 : index
    %c0_153 = arith.constant 0 : index
    %381 = vector.load %arg7[%c0_152, %c0_153] : memref<128x384xf32, #tpu.memory_space<vmem>>, vector<128x384xf32>
    %cst_154 = arith.constant dense<0.000000e+00> : vector<8x384xf32>
    %382 = tpu.matmul %380, %381, %cst_154 {dimension_numbers = #tpu.dot_dimension_numbers<[1], [0], [0], [1], [0, 0, 1, 1], [], []>} : vector<8x128xf32>, vector<128x384xf32>, vector<8x384xf32> -> vector<8x384xf32>
    %383 = arith.addf %382, %143 : vector<8x384xf32>
    %384 = vector.extract_strided_slice %356 {offsets = [0, 384], sizes = [8, 384], strides = [1, 1]} : vector<8x768xf32> to vector<8x384xf32>
    %385 = vector.extract_strided_slice %383 {offsets = [0, 0], sizes = [8, 256], strides = [1, 1]} : vector<8x384xf32> to vector<8x256xf32>
    %386 = vector.extract_strided_slice %384 {offsets = [0, 0], sizes = [8, 256], strides = [1, 1]} : vector<8x384xf32> to vector<8x256xf32>
    %387 = arith.addf %385, %386 : vector<8x256xf32>
    %388 = arith.negf %387 : vector<8x256xf32>
    %389 = math.exp %388 : vector<8x256xf32>
    %cst_155 = arith.constant 1.000000e+00 : f32
    %390 = vector.broadcast %cst_155 : f32 to vector<8x256xf32>
    %391 = arith.addf %390, %389 : vector<8x256xf32>
    %392 = arith.divf %390, %391 : vector<8x256xf32>
    %393 = vector.extract_strided_slice %392 {offsets = [0, 0], sizes = [8, 128], strides = [1, 1]} : vector<8x256xf32> to vector<8x128xf32>
    %394 = vector.extract_strided_slice %392 {offsets = [0, 128], sizes = [8, 128], strides = [1, 1]} : vector<8x256xf32> to vector<8x128xf32>
    %395 = vector.extract_strided_slice %383 {offsets = [0, 256], sizes = [8, 128], strides = [1, 1]} : vector<8x384xf32> to vector<8x128xf32>
    %396 = vector.extract_strided_slice %384 {offsets = [0, 256], sizes = [8, 128], strides = [1, 1]} : vector<8x384xf32> to vector<8x128xf32>
    %397 = arith.mulf %393, %396 : vector<8x128xf32>
    %398 = arith.addf %395, %397 : vector<8x128xf32>
    %399 = math.tanh %398 : vector<8x128xf32>
    %cst_156 = arith.constant 1.000000e+00 : f32
    %400 = vector.broadcast %cst_156 : f32 to vector<8x128xf32>
    %401 = arith.subf %400, %394 : vector<8x128xf32>
    %402 = arith.mulf %401, %399 : vector<8x128xf32>
    %403 = arith.mulf %394, %352 : vector<8x128xf32>
    %404 = arith.addf %402, %403 : vector<8x128xf32>
    %c5_i32 = arith.constant 5 : i32
    %405 = tpu.concatenate %380, %404 in 1 : vector<8x128xf32>, vector<8x128xf32> -> vector<8x256xf32>
    %c0_157 = arith.constant 0 : index
    %c0_158 = arith.constant 0 : index
    %406 = vector.load %arg5[%c0_157, %c0_158] : memref<256x768xf32, #tpu.memory_space<vmem>>, vector<256x768xf32>
    %cst_159 = arith.constant dense<0.000000e+00> : vector<8x768xf32>
    %407 = tpu.matmul %405, %406, %cst_159 {dimension_numbers = #tpu.dot_dimension_numbers<[1], [0], [0], [1], [0, 0, 1, 1], [], []>} : vector<8x256xf32>, vector<256x768xf32>, vector<8x768xf32> -> vector<8x768xf32>
    %408 = arith.addf %407, %140 : vector<8x768xf32>
    %409 = arith.index_cast %c5_i32 : i32 to index
    %c0_160 = arith.constant 0 : index
    %c0_161 = arith.constant 0 : index
    %410 = vector.load %arg15[%409, %c0_160, %c0_161] : memref<8x8x384xf32, #tpu.memory_space<vmem>>, vector<1x8x384xf32>
    %411 = vector.shape_cast %410 : vector<1x8x384xf32> to vector<8x384xf32>
    %412 = vector.extract_strided_slice %408 {offsets = [0, 0], sizes = [8, 384], strides = [1, 1]} : vector<8x768xf32> to vector<8x384xf32>
    %413 = vector.extract_strided_slice %411 {offsets = [0, 0], sizes = [8, 256], strides = [1, 1]} : vector<8x384xf32> to vector<8x256xf32>
    %414 = vector.extract_strided_slice %412 {offsets = [0, 0], sizes = [8, 256], strides = [1, 1]} : vector<8x384xf32> to vector<8x256xf32>
    %415 = arith.addf %413, %414 : vector<8x256xf32>
    %416 = arith.negf %415 : vector<8x256xf32>
    %417 = math.exp %416 : vector<8x256xf32>
    %cst_162 = arith.constant 1.000000e+00 : f32
    %418 = vector.broadcast %cst_162 : f32 to vector<8x256xf32>
    %419 = arith.addf %418, %417 : vector<8x256xf32>
    %420 = arith.divf %418, %419 : vector<8x256xf32>
    %421 = vector.extract_strided_slice %420 {offsets = [0, 0], sizes = [8, 128], strides = [1, 1]} : vector<8x256xf32> to vector<8x128xf32>
    %422 = vector.extract_strided_slice %420 {offsets = [0, 128], sizes = [8, 128], strides = [1, 1]} : vector<8x256xf32> to vector<8x128xf32>
    %423 = vector.extract_strided_slice %411 {offsets = [0, 256], sizes = [8, 128], strides = [1, 1]} : vector<8x384xf32> to vector<8x128xf32>
    %424 = vector.extract_strided_slice %412 {offsets = [0, 256], sizes = [8, 128], strides = [1, 1]} : vector<8x384xf32> to vector<8x128xf32>
    %425 = arith.mulf %421, %424 : vector<8x128xf32>
    %426 = arith.addf %423, %425 : vector<8x128xf32>
    %427 = math.tanh %426 : vector<8x128xf32>
    %cst_163 = arith.constant 1.000000e+00 : f32
    %428 = vector.broadcast %cst_163 : f32 to vector<8x128xf32>
    %429 = arith.subf %428, %422 : vector<8x128xf32>
    %430 = arith.mulf %429, %427 : vector<8x128xf32>
    %431 = arith.mulf %422, %380 : vector<8x128xf32>
    %432 = arith.addf %430, %431 : vector<8x128xf32>
    %c0_164 = arith.constant 0 : index
    %c0_165 = arith.constant 0 : index
    %433 = vector.load %arg7[%c0_164, %c0_165] : memref<128x384xf32, #tpu.memory_space<vmem>>, vector<128x384xf32>
    %cst_166 = arith.constant dense<0.000000e+00> : vector<8x384xf32>
    %434 = tpu.matmul %432, %433, %cst_166 {dimension_numbers = #tpu.dot_dimension_numbers<[1], [0], [0], [1], [0, 0, 1, 1], [], []>} : vector<8x128xf32>, vector<128x384xf32>, vector<8x384xf32> -> vector<8x384xf32>
    %435 = arith.addf %434, %143 : vector<8x384xf32>
    %436 = vector.extract_strided_slice %408 {offsets = [0, 384], sizes = [8, 384], strides = [1, 1]} : vector<8x768xf32> to vector<8x384xf32>
    %437 = vector.extract_strided_slice %435 {offsets = [0, 0], sizes = [8, 256], strides = [1, 1]} : vector<8x384xf32> to vector<8x256xf32>
    %438 = vector.extract_strided_slice %436 {offsets = [0, 0], sizes = [8, 256], strides = [1, 1]} : vector<8x384xf32> to vector<8x256xf32>
    %439 = arith.addf %437, %438 : vector<8x256xf32>
    %440 = arith.negf %439 : vector<8x256xf32>
    %441 = math.exp %440 : vector<8x256xf32>
    %cst_167 = arith.constant 1.000000e+00 : f32
    %442 = vector.broadcast %cst_167 : f32 to vector<8x256xf32>
    %443 = arith.addf %442, %441 : vector<8x256xf32>
    %444 = arith.divf %442, %443 : vector<8x256xf32>
    %445 = vector.extract_strided_slice %444 {offsets = [0, 0], sizes = [8, 128], strides = [1, 1]} : vector<8x256xf32> to vector<8x128xf32>
    %446 = vector.extract_strided_slice %444 {offsets = [0, 128], sizes = [8, 128], strides = [1, 1]} : vector<8x256xf32> to vector<8x128xf32>
    %447 = vector.extract_strided_slice %435 {offsets = [0, 256], sizes = [8, 128], strides = [1, 1]} : vector<8x384xf32> to vector<8x128xf32>
    %448 = vector.extract_strided_slice %436 {offsets = [0, 256], sizes = [8, 128], strides = [1, 1]} : vector<8x384xf32> to vector<8x128xf32>
    %449 = arith.mulf %445, %448 : vector<8x128xf32>
    %450 = arith.addf %447, %449 : vector<8x128xf32>
    %451 = math.tanh %450 : vector<8x128xf32>
    %cst_168 = arith.constant 1.000000e+00 : f32
    %452 = vector.broadcast %cst_168 : f32 to vector<8x128xf32>
    %453 = arith.subf %452, %446 : vector<8x128xf32>
    %454 = arith.mulf %453, %451 : vector<8x128xf32>
    %455 = arith.mulf %446, %404 : vector<8x128xf32>
    %456 = arith.addf %454, %455 : vector<8x128xf32>
    %c6_i32 = arith.constant 6 : i32
    %457 = tpu.concatenate %432, %456 in 1 : vector<8x128xf32>, vector<8x128xf32> -> vector<8x256xf32>
    %c0_169 = arith.constant 0 : index
    %c0_170 = arith.constant 0 : index
    %458 = vector.load %arg5[%c0_169, %c0_170] : memref<256x768xf32, #tpu.memory_space<vmem>>, vector<256x768xf32>
    %cst_171 = arith.constant dense<0.000000e+00> : vector<8x768xf32>
    %459 = tpu.matmul %457, %458, %cst_171 {dimension_numbers = #tpu.dot_dimension_numbers<[1], [0], [0], [1], [0, 0, 1, 1], [], []>} : vector<8x256xf32>, vector<256x768xf32>, vector<8x768xf32> -> vector<8x768xf32>
    %460 = arith.addf %459, %140 : vector<8x768xf32>
    %461 = arith.index_cast %c6_i32 : i32 to index
    %c0_172 = arith.constant 0 : index
    %c0_173 = arith.constant 0 : index
    %462 = vector.load %arg15[%461, %c0_172, %c0_173] : memref<8x8x384xf32, #tpu.memory_space<vmem>>, vector<1x8x384xf32>
    %463 = vector.shape_cast %462 : vector<1x8x384xf32> to vector<8x384xf32>
    %464 = vector.extract_strided_slice %460 {offsets = [0, 0], sizes = [8, 384], strides = [1, 1]} : vector<8x768xf32> to vector<8x384xf32>
    %465 = vector.extract_strided_slice %463 {offsets = [0, 0], sizes = [8, 256], strides = [1, 1]} : vector<8x384xf32> to vector<8x256xf32>
    %466 = vector.extract_strided_slice %464 {offsets = [0, 0], sizes = [8, 256], strides = [1, 1]} : vector<8x384xf32> to vector<8x256xf32>
    %467 = arith.addf %465, %466 : vector<8x256xf32>
    %468 = arith.negf %467 : vector<8x256xf32>
    %469 = math.exp %468 : vector<8x256xf32>
    %cst_174 = arith.constant 1.000000e+00 : f32
    %470 = vector.broadcast %cst_174 : f32 to vector<8x256xf32>
    %471 = arith.addf %470, %469 : vector<8x256xf32>
    %472 = arith.divf %470, %471 : vector<8x256xf32>
    %473 = vector.extract_strided_slice %472 {offsets = [0, 0], sizes = [8, 128], strides = [1, 1]} : vector<8x256xf32> to vector<8x128xf32>
    %474 = vector.extract_strided_slice %472 {offsets = [0, 128], sizes = [8, 128], strides = [1, 1]} : vector<8x256xf32> to vector<8x128xf32>
    %475 = vector.extract_strided_slice %463 {offsets = [0, 256], sizes = [8, 128], strides = [1, 1]} : vector<8x384xf32> to vector<8x128xf32>
    %476 = vector.extract_strided_slice %464 {offsets = [0, 256], sizes = [8, 128], strides = [1, 1]} : vector<8x384xf32> to vector<8x128xf32>
    %477 = arith.mulf %473, %476 : vector<8x128xf32>
    %478 = arith.addf %475, %477 : vector<8x128xf32>
    %479 = math.tanh %478 : vector<8x128xf32>
    %cst_175 = arith.constant 1.000000e+00 : f32
    %480 = vector.broadcast %cst_175 : f32 to vector<8x128xf32>
    %481 = arith.subf %480, %474 : vector<8x128xf32>
    %482 = arith.mulf %481, %479 : vector<8x128xf32>
    %483 = arith.mulf %474, %432 : vector<8x128xf32>
    %484 = arith.addf %482, %483 : vector<8x128xf32>
    %c0_176 = arith.constant 0 : index
    %c0_177 = arith.constant 0 : index
    %485 = vector.load %arg7[%c0_176, %c0_177] : memref<128x384xf32, #tpu.memory_space<vmem>>, vector<128x384xf32>
    %cst_178 = arith.constant dense<0.000000e+00> : vector<8x384xf32>
    %486 = tpu.matmul %484, %485, %cst_178 {dimension_numbers = #tpu.dot_dimension_numbers<[1], [0], [0], [1], [0, 0, 1, 1], [], []>} : vector<8x128xf32>, vector<128x384xf32>, vector<8x384xf32> -> vector<8x384xf32>
    %487 = arith.addf %486, %143 : vector<8x384xf32>
    %488 = vector.extract_strided_slice %460 {offsets = [0, 384], sizes = [8, 384], strides = [1, 1]} : vector<8x768xf32> to vector<8x384xf32>
    %489 = vector.extract_strided_slice %487 {offsets = [0, 0], sizes = [8, 256], strides = [1, 1]} : vector<8x384xf32> to vector<8x256xf32>
    %490 = vector.extract_strided_slice %488 {offsets = [0, 0], sizes = [8, 256], strides = [1, 1]} : vector<8x384xf32> to vector<8x256xf32>
    %491 = arith.addf %489, %490 : vector<8x256xf32>
    %492 = arith.negf %491 : vector<8x256xf32>
    %493 = math.exp %492 : vector<8x256xf32>
    %cst_179 = arith.constant 1.000000e+00 : f32
    %494 = vector.broadcast %cst_179 : f32 to vector<8x256xf32>
    %495 = arith.addf %494, %493 : vector<8x256xf32>
    %496 = arith.divf %494, %495 : vector<8x256xf32>
    %497 = vector.extract_strided_slice %496 {offsets = [0, 0], sizes = [8, 128], strides = [1, 1]} : vector<8x256xf32> to vector<8x128xf32>
    %498 = vector.extract_strided_slice %496 {offsets = [0, 128], sizes = [8, 128], strides = [1, 1]} : vector<8x256xf32> to vector<8x128xf32>
    %499 = vector.extract_strided_slice %487 {offsets = [0, 256], sizes = [8, 128], strides = [1, 1]} : vector<8x384xf32> to vector<8x128xf32>
    %500 = vector.extract_strided_slice %488 {offsets = [0, 256], sizes = [8, 128], strides = [1, 1]} : vector<8x384xf32> to vector<8x128xf32>
    %501 = arith.mulf %497, %500 : vector<8x128xf32>
    %502 = arith.addf %499, %501 : vector<8x128xf32>
    %503 = math.tanh %502 : vector<8x128xf32>
    %cst_180 = arith.constant 1.000000e+00 : f32
    %504 = vector.broadcast %cst_180 : f32 to vector<8x128xf32>
    %505 = arith.subf %504, %498 : vector<8x128xf32>
    %506 = arith.mulf %505, %503 : vector<8x128xf32>
    %507 = arith.mulf %498, %456 : vector<8x128xf32>
    %508 = arith.addf %506, %507 : vector<8x128xf32>
    %c7_i32 = arith.constant 7 : i32
    %509 = tpu.concatenate %484, %508 in 1 : vector<8x128xf32>, vector<8x128xf32> -> vector<8x256xf32>
    %c0_181 = arith.constant 0 : index
    %c0_182 = arith.constant 0 : index
    %510 = vector.load %arg5[%c0_181, %c0_182] : memref<256x768xf32, #tpu.memory_space<vmem>>, vector<256x768xf32>
    %cst_183 = arith.constant dense<0.000000e+00> : vector<8x768xf32>
    %511 = tpu.matmul %509, %510, %cst_183 {dimension_numbers = #tpu.dot_dimension_numbers<[1], [0], [0], [1], [0, 0, 1, 1], [], []>} : vector<8x256xf32>, vector<256x768xf32>, vector<8x768xf32> -> vector<8x768xf32>
    %512 = arith.addf %511, %140 : vector<8x768xf32>
    %513 = arith.index_cast %c7_i32 : i32 to index
    %c0_184 = arith.constant 0 : index
    %c0_185 = arith.constant 0 : index
    %514 = vector.load %arg15[%513, %c0_184, %c0_185] : memref<8x8x384xf32, #tpu.memory_space<vmem>>, vector<1x8x384xf32>
    %515 = vector.shape_cast %514 : vector<1x8x384xf32> to vector<8x384xf32>
    %516 = vector.extract_strided_slice %512 {offsets = [0, 0], sizes = [8, 384], strides = [1, 1]} : vector<8x768xf32> to vector<8x384xf32>
    %517 = vector.extract_strided_slice %515 {offsets = [0, 0], sizes = [8, 256], strides = [1, 1]} : vector<8x384xf32> to vector<8x256xf32>
    %518 = vector.extract_strided_slice %516 {offsets = [0, 0], sizes = [8, 256], strides = [1, 1]} : vector<8x384xf32> to vector<8x256xf32>
    %519 = arith.addf %517, %518 : vector<8x256xf32>
    %520 = arith.negf %519 : vector<8x256xf32>
    %521 = math.exp %520 : vector<8x256xf32>
    %cst_186 = arith.constant 1.000000e+00 : f32
    %522 = vector.broadcast %cst_186 : f32 to vector<8x256xf32>
    %523 = arith.addf %522, %521 : vector<8x256xf32>
    %524 = arith.divf %522, %523 : vector<8x256xf32>
    %525 = vector.extract_strided_slice %524 {offsets = [0, 0], sizes = [8, 128], strides = [1, 1]} : vector<8x256xf32> to vector<8x128xf32>
    %526 = vector.extract_strided_slice %524 {offsets = [0, 128], sizes = [8, 128], strides = [1, 1]} : vector<8x256xf32> to vector<8x128xf32>
    %527 = vector.extract_strided_slice %515 {offsets = [0, 256], sizes = [8, 128], strides = [1, 1]} : vector<8x384xf32> to vector<8x128xf32>
    %528 = vector.extract_strided_slice %516 {offsets = [0, 256], sizes = [8, 128], strides = [1, 1]} : vector<8x384xf32> to vector<8x128xf32>
    %529 = arith.mulf %525, %528 : vector<8x128xf32>
    %530 = arith.addf %527, %529 : vector<8x128xf32>
    %531 = math.tanh %530 : vector<8x128xf32>
    %cst_187 = arith.constant 1.000000e+00 : f32
    %532 = vector.broadcast %cst_187 : f32 to vector<8x128xf32>
    %533 = arith.subf %532, %526 : vector<8x128xf32>
    %534 = arith.mulf %533, %531 : vector<8x128xf32>
    %535 = arith.mulf %526, %484 : vector<8x128xf32>
    %536 = arith.addf %534, %535 : vector<8x128xf32>
    %c0_188 = arith.constant 0 : index
    %c0_189 = arith.constant 0 : index
    %537 = vector.load %arg7[%c0_188, %c0_189] : memref<128x384xf32, #tpu.memory_space<vmem>>, vector<128x384xf32>
    %cst_190 = arith.constant dense<0.000000e+00> : vector<8x384xf32>
    %538 = tpu.matmul %536, %537, %cst_190 {dimension_numbers = #tpu.dot_dimension_numbers<[1], [0], [0], [1], [0, 0, 1, 1], [], []>} : vector<8x128xf32>, vector<128x384xf32>, vector<8x384xf32> -> vector<8x384xf32>
    %539 = arith.addf %538, %143 : vector<8x384xf32>
    %540 = vector.extract_strided_slice %512 {offsets = [0, 384], sizes = [8, 384], strides = [1, 1]} : vector<8x768xf32> to vector<8x384xf32>
    %541 = vector.extract_strided_slice %539 {offsets = [0, 0], sizes = [8, 256], strides = [1, 1]} : vector<8x384xf32> to vector<8x256xf32>
    %542 = vector.extract_strided_slice %540 {offsets = [0, 0], sizes = [8, 256], strides = [1, 1]} : vector<8x384xf32> to vector<8x256xf32>
    %543 = arith.addf %541, %542 : vector<8x256xf32>
    %544 = arith.negf %543 : vector<8x256xf32>
    %545 = math.exp %544 : vector<8x256xf32>
    %cst_191 = arith.constant 1.000000e+00 : f32
    %546 = vector.broadcast %cst_191 : f32 to vector<8x256xf32>
    %547 = arith.addf %546, %545 : vector<8x256xf32>
    %548 = arith.divf %546, %547 : vector<8x256xf32>
    %549 = vector.extract_strided_slice %548 {offsets = [0, 0], sizes = [8, 128], strides = [1, 1]} : vector<8x256xf32> to vector<8x128xf32>
    %550 = vector.extract_strided_slice %548 {offsets = [0, 128], sizes = [8, 128], strides = [1, 1]} : vector<8x256xf32> to vector<8x128xf32>
    %551 = vector.extract_strided_slice %539 {offsets = [0, 256], sizes = [8, 128], strides = [1, 1]} : vector<8x384xf32> to vector<8x128xf32>
    %552 = vector.extract_strided_slice %540 {offsets = [0, 256], sizes = [8, 128], strides = [1, 1]} : vector<8x384xf32> to vector<8x128xf32>
    %553 = arith.mulf %549, %552 : vector<8x128xf32>
    %554 = arith.addf %551, %553 : vector<8x128xf32>
    %555 = math.tanh %554 : vector<8x128xf32>
    %cst_192 = arith.constant 1.000000e+00 : f32
    %556 = vector.broadcast %cst_192 : f32 to vector<8x128xf32>
    %557 = arith.subf %556, %550 : vector<8x128xf32>
    %558 = arith.mulf %557, %555 : vector<8x128xf32>
    %559 = arith.mulf %550, %508 : vector<8x128xf32>
    %560 = arith.addf %558, %559 : vector<8x128xf32>
    %c8_i32 = arith.constant 8 : i32
    %c0_193 = arith.constant 0 : index
    %c0_194 = arith.constant 0 : index
    %561 = vector.load %arg9[%c0_193, %c0_194] : memref<128x128xf32, #tpu.memory_space<vmem>>, vector<128x128xf32>
    %cst_195 = arith.constant dense<0.000000e+00> : vector<8x128xf32>
    %562 = tpu.matmul %560, %561, %cst_195 {dimension_numbers = #tpu.dot_dimension_numbers<[1], [0], [0], [1], [0, 0, 1, 1], [], []>} : vector<8x128xf32>, vector<128x128xf32>, vector<8x128xf32> -> vector<8x128xf32>
    %c0_196 = arith.constant 0 : index
    %c0_197 = arith.constant 0 : index
    %563 = vector.load %arg10[%c0_196, %c0_197] : memref<1x128xf32, #tpu.memory_space<vmem>>, vector<1x128xf32>
    %564 = vector.broadcast %563 : vector<1x128xf32> to vector<8x128xf32>
    %565 = arith.addf %562, %564 : vector<8x128xf32>
    %566 = arith.negf %565 : vector<8x128xf32>
    %567 = math.exp %566 : vector<8x128xf32>
    %cst_198 = arith.constant 1.000000e+00 : f32
    %568 = vector.broadcast %cst_198 : f32 to vector<8x128xf32>
    %569 = arith.addf %568, %567 : vector<8x128xf32>
    %570 = arith.divf %568, %569 : vector<8x128xf32>
    %571 = arith.mulf %565, %570 : vector<8x128xf32>
    %c0_199 = arith.constant 0 : index
    %c0_200 = arith.constant 0 : index
    %572 = vector.load %arg11[%c0_199, %c0_200] : memref<128x128xf32, #tpu.memory_space<vmem>>, vector<128x128xf32>
    %cst_201 = arith.constant dense<0.000000e+00> : vector<8x128xf32>
    %573 = tpu.matmul %571, %572, %cst_201 {dimension_numbers = #tpu.dot_dimension_numbers<[1], [0], [0], [1], [0, 0, 1, 1], [], []>} : vector<8x128xf32>, vector<128x128xf32>, vector<8x128xf32> -> vector<8x128xf32>
    %c0_202 = arith.constant 0 : index
    %c0_203 = arith.constant 0 : index
    %574 = vector.load %arg12[%c0_202, %c0_203] : memref<1x128xf32, #tpu.memory_space<vmem>>, vector<1x128xf32>
    %575 = vector.broadcast %574 : vector<1x128xf32> to vector<8x128xf32>
    %576 = arith.addf %573, %575 : vector<8x128xf32>
    %cst_204 = arith.constant dense<0xFF800000> : vector<8xf32>
    %577 = vector.multi_reduction <maximumf>, %576, %cst_204 [1] : vector<8x128xf32> to vector<8xf32>
    %578 = vector.shape_cast %577 : vector<8xf32> to vector<8x1xf32>
    %579 = vector.broadcast %578 : vector<8x1xf32> to vector<8x128xf32>
    %580 = arith.subf %576, %579 : vector<8x128xf32>
    %581 = math.exp %580 : vector<8x128xf32>
    %cst_205 = arith.constant dense<0.000000e+00> : vector<8xf32>
    %582 = vector.multi_reduction <add>, %581, %cst_205 [1] : vector<8x128xf32> to vector<8xf32>
    %583 = vector.shape_cast %582 : vector<8xf32> to vector<8x1xf32>
    %584 = tpu.reciprocal %583 : vector<8x1xf32> -> vector<8x1xf32>
    %585 = vector.broadcast %584 : vector<8x1xf32> to vector<8x128xf32>
    %586 = arith.mulf %581, %585 : vector<8x128xf32>
    %c0_206 = arith.constant 0 : index
    %c0_207 = arith.constant 0 : index
    %587 = vector.load %arg13[%c0_206, %c0_207] : memref<8x128xf32, #tpu.memory_space<vmem>>, vector<8x128xf32>
    tpu.vector_store %arg13[%c0_206, %c0_207], %586 {strides = array<i32>} : memref<8x128xf32, #tpu.memory_space<vmem>>, vector<8x128xf32>,
    return
  }
  func.func @transform_0(%arg0: i32, %arg1: memref<32xi32, #tpu.memory_space<smem>>) -> (i32, i32) {
    %c0_i32 = arith.constant 0 : i32
    %c0_i32_0 = arith.constant 0 : i32
    %c0_i32_1 = arith.constant 0 : i32
    return %c0_i32, %c0_i32_0 : i32, i32
  }
  func.func @transform_1(%arg0: i32, %arg1: memref<32xi32, #tpu.memory_space<smem>>) -> (i32, i32) {
    %c0_i32 = arith.constant 0 : i32
    %c0_i32_0 = arith.constant 0 : i32
    %c0_i32_1 = arith.constant 0 : i32
    return %c0_i32, %c0_i32_0 : i32, i32
  }
  func.func @transform_2(%arg0: i32, %arg1: memref<32xi32, #tpu.memory_space<smem>>) -> (i32, i32) {
    %c0_i32 = arith.constant 0 : i32
    %c0_i32_0 = arith.constant 0 : i32
    %c0_i32_1 = arith.constant 0 : i32
    return %c0_i32, %c0_i32_0 : i32, i32
  }
  func.func @transform_3(%arg0: i32, %arg1: memref<32xi32, #tpu.memory_space<smem>>) -> (i32, i32) {
    %c0_i32 = arith.constant 0 : i32
    %c0_i32_0 = arith.constant 0 : i32
    %c0_i32_1 = arith.constant 0 : i32
    return %c0_i32, %c0_i32_0 : i32, i32
  }
  func.func @transform_4(%arg0: i32, %arg1: memref<32xi32, #tpu.memory_space<smem>>) -> (i32, i32) {
    %c0_i32 = arith.constant 0 : i32
    %c0_i32_0 = arith.constant 0 : i32
    %c0_i32_1 = arith.constant 0 : i32
    return %c0_i32, %c0_i32_0 : i32, i32
  }
  func.func @transform_5(%arg0: i32, %arg1: memref<32xi32, #tpu.memory_space<smem>>) -> (i32, i32) {
    %c0_i32 = arith.constant 0 : i32
    %c0_i32_0 = arith.constant 0 : i32
    %c0_i32_1 = arith.constant 0 : i32
    return %c0_i32, %c0_i32_0 : i32, i32
  }
  func.func @transform_6(%arg0: i32, %arg1: memref<32xi32, #tpu.memory_space<smem>>) -> (i32, i32) {
    %c0_i32 = arith.constant 0 : i32
    %c0_i32_0 = arith.constant 0 : i32
    %c0_i32_1 = arith.constant 0 : i32
    return %c0_i32, %c0_i32_0 : i32, i32
  }
  func.func @transform_7(%arg0: i32, %arg1: memref<32xi32, #tpu.memory_space<smem>>) -> (i32, i32) {
    %c0_i32 = arith.constant 0 : i32
    %c0_i32_0 = arith.constant 0 : i32
    %c0_i32_1 = arith.constant 0 : i32
    return %c0_i32, %c0_i32_0 : i32, i32
  }
  func.func @transform_8(%arg0: i32, %arg1: memref<32xi32, #tpu.memory_space<smem>>) -> (i32, i32) {
    %c0_i32 = arith.constant 0 : i32
    %c0_i32_0 = arith.constant 0 : i32
    %c0_i32_1 = arith.constant 0 : i32
    return %c0_i32, %c0_i32_0 : i32, i32
  }
  func.func @transform_9(%arg0: i32, %arg1: memref<32xi32, #tpu.memory_space<smem>>) -> (i32, i32) {
    %c0_i32 = arith.constant 0 : i32
    %c0_i32_0 = arith.constant 0 : i32
    %c0_i32_1 = arith.constant 0 : i32
    return %c0_i32, %c0_i32_0 : i32, i32
  }
  func.func @transform_10(%arg0: i32, %arg1: memref<32xi32, #tpu.memory_space<smem>>) -> (i32, i32) {
    %c0_i32 = arith.constant 0 : i32
    %c0_i32_0 = arith.constant 0 : i32
    %c0_i32_1 = arith.constant 0 : i32
    return %c0_i32, %c0_i32_0 : i32, i32
  }
  func.func @transform_11(%arg0: i32, %arg1: memref<32xi32, #tpu.memory_space<smem>>) -> (i32, i32) {
    %c0_i32 = arith.constant 0 : i32
    %c0_i32_0 = arith.constant 0 : i32
    %c0_i32_1 = arith.constant 0 : i32
    return %c0_i32, %c0_i32_0 : i32, i32
  }
}

</mosaic_0001>

<llo_original>
// kernel: classifier_forward.1
$region0: #{classifier_forward.1}
  #allocation0 [shape = 'u32[]', space=smem, size = 0x4, offset = 0x4, fixed_abs, tag = 'smem constant byte address 0x4 - core index']
  #allocation1 [shape = 'u32[144,128]{1,0:T(1,128)}', space=vmem, size = 0x12000, scoped, tag = 'internal scratch']
  #allocation2 [shape = 'f32[64,16]{1,0:T(8,128)}', space=vmem, size = 0x8000, scoped, tag = 'scratch operand']
  #allocation3 [shape = 'f32[8,8,384]{2,1,0:T(8,128)}', space=vmem, size = 0x18000, scoped, tag = 'scratch operand']
  #allocation4 [shape = 's32[1]{0}', space=sflag, size = 0x4, scoped, tag = 'scoped memory for classifier_forward.1']
  #allocation5 [shape = 'u8[512]{0}', space=smem, size = 0x200, scoped, tag = 'prefetched SMEM operand 0']
  %s0 = inlined_call_operand.vmem [shape: s32[32], index: 0, kind: input, shape index: {}]
  %s1 = inlined_call_operand.vmem [shape: f32[56,16], index: 1, kind: input, shape index: {}]
  %s2 = inlined_call_operand.vmem [shape: f32[16,384], index: 2, kind: input, shape index: {}]
  %s3 = inlined_call_operand.vmem [shape: f32[1,384], index: 3, kind: input, shape index: {}]
  %s4 = inlined_call_operand.hbm [shape: f32[256,768], index: 4, kind: input, shape index: {}]
  %s5 = inlined_call_operand.vmem [shape: f32[1,768], index: 5, kind: input, shape index: {}]
  %s6 = inlined_call_operand.hbm [shape: f32[128,384], index: 6, kind: input, shape index: {}]
  %s7 = inlined_call_operand.vmem [shape: f32[1,384], index: 7, kind: input, shape index: {}]
  %s8 = inlined_call_operand.hbm [shape: f32[128,128], index: 8, kind: input, shape index: {}]
  %s9 = inlined_call_operand.vmem [shape: f32[1,128], index: 9, kind: input, shape index: {}]
  %s10 = inlined_call_operand.hbm [shape: f32[128,128], index: 10, kind: input, shape index: {}]
  %s11 = inlined_call_operand.vmem [shape: f32[1,128], index: 11, kind: input, shape index: {}]
  %s12 = inlined_call_operand.vmem [shape: f32[8,128], index: 12, kind: output, shape index: {}]
  %s13 = sld [smem:[#allocation0]]
  $region70: #{classifier_forward.1} parent=0
    _
  %s15 = ssub.s32 1, %s13
  %s16 = scalar_select 0, %s15, %s13
  %s17 = sshll.u32 %s0, 4
  %s18 = int_to_ptr.vmem [resolvable:$true] %s17
  %20 = dma.vmem_to_smem %s18, 16, [#allocation5], [#allocation4]
  %21 = dma.done [#allocation4], 16
  %22 = sfence
  $region1: #{classifier_forward.1} parent=0
    #allocation6 [shape = 'u8[786432]{0}', space=vmem, size = 0xc0000, scoped, tag = 'input window, operand 4, single buffered']
    #allocation7 [shape = 's32[1]{0}', space=sflag, size = 0x4, scoped, tag = 'scoped memory for classifier_forward.1']
    #allocation8 [shape = 'u8[196608]{0}', space=vmem, size = 0x30000, scoped, tag = 'input window, operand 6, single buffered']
    #allocation9 [shape = 's32[1]{0}', space=sflag, size = 0x4, scoped, tag = 'scoped memory for classifier_forward.1']
    #allocation10 [shape = 'u8[65536]{0}', space=vmem, size = 0x10000, scoped, tag = 'input window, operand 8, single buffered']
    #allocation11 [shape = 'u8[65536]{0}', space=vmem, size = 0x10000, scoped, tag = 'input window, operand 10, single buffered']
    #allocation12 [shape = 's32[1]{0}', space=sflag, size = 0x4, scoped, tag = 'scoped memory for classifier_forward.1']
    %23 = vsyncpa [#allocation7], 0
    %24 = vsyncpa [#allocation9], 0
    %25 = vsyncpa [#allocation12], 0
    // Predicated region
    $region2: #{classifier_forward.1} parent=1 // pred_check
      _
    $region3: #{classifier_forward.1} parent=1 // pred_check_branch
      %27 = sbr.rel (0) target = $region5
    $region4: #{classifier_forward.1} parent=1 // pred_region
      _
    $region5: #{classifier_forward.1} parent=1 // pred_fallthru
      _
    // Predicated region
    $region6: #{classifier_forward.1} parent=1 // pred_check
      _
    $region7: #{classifier_forward.1} parent=1 // pred_check_branch
      %29 = sbr.rel (0) target = $region9
    $region8: #{classifier_forward.1} parent=1 // pred_region
      _
    $region9: #{classifier_forward.1} parent=1 // pred_fallthru
      _
    // Predicated region
    $region10: #{classifier_forward.1} parent=1 // pred_check
      _
    $region11: #{classifier_forward.1} parent=1 // pred_check_branch
      %31 = sbr.rel (0) target = $region13
    $region12: #{classifier_forward.1} parent=1 // pred_region
      _
    $region13: #{classifier_forward.1} parent=1 // pred_fallthru
      _
    // Predicated region
    $region14: #{classifier_forward.1} parent=1 // pred_check
      _
    $region15: #{classifier_forward.1} parent=1 // pred_check_branch
      %33 = sbr.rel (0) target = $region17
    $region16: #{classifier_forward.1} parent=1 // pred_region
      %s35 = ssub.s32 24576, 24576
      %36 = vsyncadd [#allocation7], %s35
      %s37 = sshll.u32 [#allocation6], 4
      %s38 = int_to_ptr.vmem [resolvable:$true] %s37
      %43 = dma.hbm_to_vmem [thread:$0]  %s4, 24576, %s38, [#allocation7], 768, 768, 48
    $region17: #{classifier_forward.1} parent=1 // pred_fallthru
      _
    // Predicated region
    $region18: #{classifier_forward.1} parent=1 // pred_check
      _
    $region19: #{classifier_forward.1} parent=1 // pred_check_branch
      %45 = sbr.rel (0) target = $region21
    $region20: #{classifier_forward.1} parent=1 // pred_region
      _
    $region21: #{classifier_forward.1} parent=1 // pred_fallthru
      _
    // Predicated region
    $region22: #{classifier_forward.1} parent=1 // pred_check
      _
    $region23: #{classifier_forward.1} parent=1 // pred_check_branch
      %47 = sbr.rel (0) target = $region25
    $region24: #{classifier_forward.1} parent=1 // pred_region
      %s49 = ssub.s32 6144, 6144
      %50 = vsyncadd [#allocation9], %s49
      %s51 = sshll.u32 [#allocation8], 4
      %s52 = int_to_ptr.vmem [resolvable:$true] %s51
      %57 = dma.hbm_to_vmem [thread:$0]  %s6, 6144, %s52, [#allocation9], 384, 384, 24
    $region25: #{classifier_forward.1} parent=1 // pred_fallthru
      _
    // Predicated region
    $region26: #{classifier_forward.1} parent=1 // pred_check
      _
    $region27: #{classifier_forward.1} parent=1 // pred_check_branch
      %59 = sbr.rel (0) target = $region29
    $region28: #{classifier_forward.1} parent=1 // pred_region
      _
    $region29: #{classifier_forward.1} parent=1 // pred_fallthru
      _
    // Predicated region
    $region30: #{classifier_forward.1} parent=1 // pred_check
      _
    $region31: #{classifier_forward.1} parent=1 // pred_check_branch
      %61 = sbr.rel (0) target = $region33
    $region32: #{classifier_forward.1} parent=1 // pred_region
      %s63 = ssub.s32 2048, 2048
      %64 = vsyncadd [#allocation9], %s63
      %s65 = sshll.u32 [#allocation10], 4
      %s66 = int_to_ptr.vmem [resolvable:$true] %s65
      %71 = dma.hbm_to_vmem [thread:$0]  %s8, 2048, %s66, [#allocation9], 128, 128, 8
    $region33: #{classifier_forward.1} parent=1 // pred_fallthru
      _
    // Predicated region
    $region34: #{classifier_forward.1} parent=1 // pred_check
      _
    $region35: #{classifier_forward.1} parent=1 // pred_check_branch
      %73 = sbr.rel (0) target = $region37
    $region36: #{classifier_forward.1} parent=1 // pred_region
      _
    $region37: #{classifier_forward.1} parent=1 // pred_fallthru
      _
    // Predicated region
    $region38: #{classifier_forward.1} parent=1 // pred_check
      _
    $region39: #{classifier_forward.1} parent=1 // pred_check_branch
      %75 = sbr.rel (0) target = $region41
    $region40: #{classifier_forward.1} parent=1 // pred_region
      %s77 = ssub.s32 2048, 2048
      %78 = vsyncadd [#allocation12], %s77
      %s79 = sshll.u32 [#allocation11], 4
      %s80 = int_to_ptr.vmem [resolvable:$true] %s79
      %85 = dma.hbm_to_vmem [thread:$0]  %s10, 2048, %s80, [#allocation12], 128, 128, 8
    $region41: #{classifier_forward.1} parent=1 // pred_fallthru
      _
    // Predicated region
    $region42: #{classifier_forward.1} parent=1 // pred_check
      _
    $region43: #{classifier_forward.1} parent=1 // pred_check_branch
      %87 = sbr.rel (0) target = $region45
    $region44: #{classifier_forward.1} parent=1 // pred_region
      _
    $region45: #{classifier_forward.1} parent=1 // pred_fallthru
      _
    // Predicated region
    $region46: #{classifier_forward.1} parent=1 // pred_check
      _
    $region47: #{classifier_forward.1} parent=1 // pred_check_branch
      %89 = sbr.rel (0) target = $region49
    $region48: #{classifier_forward.1} parent=1 // pred_region
      %90 = dma.done [#allocation7], 24576
    $region49: #{classifier_forward.1} parent=1 // pred_fallthru
      _
    // Predicated region
    $region50: #{classifier_forward.1} parent=1 // pred_check
      _
    $region51: #{classifier_forward.1} parent=1 // pred_check_branch
      %92 = sbr.rel (0) target = $region53
    $region52: #{classifier_forward.1} parent=1 // pred_region
      %93 = dma.done [#allocation9], 6144
    $region53: #{classifier_forward.1} parent=1 // pred_fallthru
      _
    // Predicated region
    $region54: #{classifier_forward.1} parent=1 // pred_check
      _
    $region55: #{classifier_forward.1} parent=1 // pred_check_branch
      %95 = sbr.rel (0) target = $region57
    $region56: #{classifier_forward.1} parent=1 // pred_region
      %96 = dma.done [#allocation9], 2048
    $region57: #{classifier_forward.1} parent=1 // pred_fallthru
      _
    // Predicated region
    $region58: #{classifier_forward.1} parent=1 // pred_check
      _
    $region59: #{classifier_forward.1} parent=1 // pred_check_branch
      %98 = sbr.rel (0) target = $region61
    $region60: #{classifier_forward.1} parent=1 // pred_region
      %99 = dma.done [#allocation12], 2048
    $region61: #{classifier_forward.1} parent=1 // pred_fallthru
      _
    %vm100 = vcmask 130048
    %101 = vst.msk [vmem:[#allocation2] sm:$0xff] %vm100, 0.0
    %102 = vst.msk [vmem:[#allocation2 + $0x8] sm:$0xff] %vm100, 0.0
    %103 = vst.msk [vmem:[#allocation2 + $0x10] sm:$0xff] %vm100, 0.0
    %104 = vst.msk [vmem:[#allocation2 + $0x18] sm:$0xff] %vm100, 0.0
    %105 = vst.msk [vmem:[#allocation2 + $0x20] sm:$0xff] %vm100, 0.0
    %106 = vst.msk [vmem:[#allocation2 + $0x28] sm:$0xff] %vm100, 0.0
    %107 = vst.msk [vmem:[#allocation2 + $0x30] sm:$0xff] %vm100, 0.0
    %108 = vst.msk [vmem:[#allocation2 + $0x38] sm:$0xff] %vm100, 0.0
    %s109 = sld [smem:[#allocation5]]
    %s110 = scalar_lea.vmem %s1, %s109
    %v111 = vld [vmem:[%s110] sm:$0x1]
    %vm112 = vcmask 122880
    %113 = vst.msk [vmem:[#allocation2] sm:$0x1] %vm112, %v111
    %s114 = sld [smem:[#allocation5 + $0x8]]
    %s115 = scalar_lea.vmem %s1, %s114
    %v116 = vld [vmem:[%s115] sm:$0x1]
    %117 = vst.msk [vmem:[#allocation2 + $0x1] sm:$0x1] %vm112, %v116
    %s118 = sld [smem:[#allocation5 + $0x10]]
    %s119 = scalar_lea.vmem %s1, %s118
    %v120 = vld [vmem:[%s119] sm:$0x1]
    %121 = vst.msk [vmem:[#allocation2 + $0x2] sm:$0x1] %vm112, %v120
    %s122 = sld [smem:[#allocation5 + $0x18]]
    %s123 = scalar_lea.vmem %s1, %s122
    %v124 = vld [vmem:[%s123] sm:$0x1]
    %125 = vst.msk [vmem:[#allocation2 + $0x3] sm:$0x1] %vm112, %v124
    %s126 = sld [smem:[#allocation5 + $0x1]]
    %s127 = scalar_lea.vmem %s1, %s126
    %v128 = vld [vmem:[%s127] sm:$0x1]
    %129 = vst.msk [vmem:[#allocation2 + $0x8] sm:$0x1] %vm112, %v128
    %s130 = sld [smem:[#allocation5 + $0x9]]
    %s131 = scalar_lea.vmem %s1, %s130
    %v132 = vld [vmem:[%s131] sm:$0x1]
    %133 = vst.msk [vmem:[#allocation2 + $0x9] sm:$0x1] %vm112, %v132
    %s134 = sld [smem:[#allocation5 + $0x11]]
    %s135 = scalar_lea.vmem %s1, %s134
    %v136 = vld [vmem:[%s135] sm:$0x1]
    %137 = vst.msk [vmem:[#allocation2 + $0xa] sm:$0x1] %vm112, %v136
    %s138 = sld [smem:[#allocation5 + $0x19]]
    %s139 = scalar_lea.vmem %s1, %s138
    %v140 = vld [vmem:[%s139] sm:$0x1]
    %141 = vst.msk [vmem:[#allocation2 + $0xb] sm:$0x1] %vm112, %v140
    %s142 = sld [smem:[#allocation5 + $0x2]]
    %s143 = scalar_lea.vmem %s1, %s142
    %v144 = vld [vmem:[%s143] sm:$0x1]
    %145 = vst.msk [vmem:[#allocation2 + $0x10] sm:$0x1] %vm112, %v144
    %s146 = sld [smem:[#allocation5 + $0xa]]
    %s147 = scalar_lea.vmem %s1, %s146
    %v148 = vld [vmem:[%s147] sm:$0x1]
    %149 = vst.msk [vmem:[#allocation2 + $0x11] sm:$0x1] %vm112, %v148
    %s150 = sld [smem:[#allocation5 + $0x12]]
    %s151 = scalar_lea.vmem %s1, %s150
    %v152 = vld [vmem:[%s151] sm:$0x1]
    %153 = vst.msk [vmem:[#allocation2 + $0x12] sm:$0x1] %vm112, %v152
    %s154 = sld [smem:[#allocation5 + $0x1a]]
    %s155 = scalar_lea.vmem %s1, %s154
    %v156 = vld [vmem:[%s155] sm:$0x1]
    %157 = vst.msk [vmem:[#allocation2 + $0x13] sm:$0x1] %vm112, %v156
    %s158 = sld [smem:[#allocation5 + $0x3]]
    %s159 = scalar_lea.vmem %s1, %s158
    %v160 = vld [vmem:[%s159] sm:$0x1]
    %161 = vst.msk [vmem:[#allocation2 + $0x18] sm:$0x1] %vm112, %v160
    %s162 = sld [smem:[#allocation5 + $0xb]]
    %s163 = scalar_lea.vmem %s1, %s162
    %v164 = vld [vmem:[%s163] sm:$0x1]
    %165 = vst.msk [vmem:[#allocation2 + $0x19] sm:$0x1] %vm112, %v164
    %s166 = sld [smem:[#allocation5 + $0x13]]
    %s167 = scalar_lea.vmem %s1, %s166
    %v168 = vld [vmem:[%s167] sm:$0x1]
    %169 = vst.msk [vmem:[#allocation2 + $0x1a] sm:$0x1] %vm112, %v168
    %s170 = sld [smem:[#allocation5 + $0x1b]]
    %s171 = scalar_lea.vmem %s1, %s170
    %v172 = vld [vmem:[%s171] sm:$0x1]
    %173 = vst.msk [vmem:[#allocation2 + $0x1b] sm:$0x1] %vm112, %v172
    %s174 = sld [smem:[#allocation5 + $0x4]]
    %s175 = scalar_lea.vmem %s1, %s174
    %v176 = vld [vmem:[%s175] sm:$0x1]
    %177 = vst.msk [vmem:[#allocation2 + $0x20] sm:$0x1] %vm112, %v176
    %s178 = sld [smem:[#allocation5 + $0xc]]
    %s179 = scalar_lea.vmem %s1, %s178
    %v180 = vld [vmem:[%s179] sm:$0x1]
    %181 = vst.msk [vmem:[#allocation2 + $0x21] sm:$0x1] %vm112, %v180
    %s182 = sld [smem:[#allocation5 + $0x14]]
    %s183 = scalar_lea.vmem %s1, %s182
    %v184 = vld [vmem:[%s183] sm:$0x1]
    %185 = vst.msk [vmem:[#allocation2 + $0x22] sm:$0x1] %vm112, %v184
    %s186 = sld [smem:[#allocation5 + $0x1c]]
    %s187 = scalar_lea.vmem %s1, %s186
    %v188 = vld [vmem:[%s187] sm:$0x1]
    %189 = vst.msk [vmem:[#allocation2 + $0x23] sm:$0x1] %vm112, %v188
    %s190 = sld [smem:[#allocation5 + $0x5]]
    %s191 = scalar_lea.vmem %s1, %s190
    %v192 = vld [vmem:[%s191] sm:$0x1]
    %193 = vst.msk [vmem:[#allocation2 + $0x28] sm:$0x1] %vm112, %v192
    %s194 = sld [smem:[#allocation5 + $0xd]]
    %s195 = scalar_lea.vmem %s1, %s194
    %v196 = vld [vmem:[%s195] sm:$0x1]
    %197 = vst.msk [vmem:[#allocation2 + $0x29] sm:$0x1] %vm112, %v196
    %s198 = sld [smem:[#allocation5 + $0x15]]
    %s199 = scalar_lea.vmem %s1, %s198
    %v200 = vld [vmem:[%s199] sm:$0x1]
    %201 = vst.msk [vmem:[#allocation2 + $0x2a] sm:$0x1] %vm112, %v200
    %s202 = sld [smem:[#allocation5 + $0x1d]]
    %s203 = scalar_lea.vmem %s1, %s202
    %v204 = vld [vmem:[%s203] sm:$0x1]
    %205 = vst.msk [vmem:[#allocation2 + $0x2b] sm:$0x1] %vm112, %v204
    %s206 = sld [smem:[#allocation5 + $0x6]]
    %s207 = scalar_lea.vmem %s1, %s206
    %v208 = vld [vmem:[%s207] sm:$0x1]
    %209 = vst.msk [vmem:[#allocation2 + $0x30] sm:$0x1] %vm112, %v208
    %s210 = sld [smem:[#allocation5 + $0xe]]
    %s211 = scalar_lea.vmem %s1, %s210
    %v212 = vld [vmem:[%s211] sm:$0x1]
    %213 = vst.msk [vmem:[#allocation2 + $0x31] sm:$0x1] %vm112, %v212
    %s214 = sld [smem:[#allocation5 + $0x16]]
    %s215 = scalar_lea.vmem %s1, %s214
    %v216 = vld [vmem:[%s215] sm:$0x1]
    %217 = vst.msk [vmem:[#allocation2 + $0x32] sm:$0x1] %vm112, %v216
    %s218 = sld [smem:[#allocation5 + $0x1e]]
    %s219 = scalar_lea.vmem %s1, %s218
    %v220 = vld [vmem:[%s219] sm:$0x1]
    %221 = vst.msk [vmem:[#allocation2 + $0x33] sm:$0x1] %vm112, %v220
    %s222 = sld [smem:[#allocation5 + $0x7]]
    %s223 = scalar_lea.vmem %s1, %s222
    %v224 = vld [vmem:[%s223] sm:$0x1]
    %225 = vst.msk [vmem:[#allocation2 + $0x38] sm:$0x1] %vm112, %v224
    %s226 = sld [smem:[#allocation5 + $0xf]]
    %s227 = scalar_lea.vmem %s1, %s226
    %v228 = vld [vmem:[%s227] sm:$0x1]
    %229 = vst.msk [vmem:[#allocation2 + $0x39] sm:$0x1] %vm112, %v228
    %s230 = sld [smem:[#allocation5 + $0x17]]
    %s231 = scalar_lea.vmem %s1, %s230
    %v232 = vld [vmem:[%s231] sm:$0x1]
    %233 = vst.msk [vmem:[#allocation2 + $0x3a] sm:$0x1] %vm112, %v232
    %s234 = sld [smem:[#allocation5 + $0x1f]]
    %s235 = scalar_lea.vmem %s1, %s234
    %v236 = vld [vmem:[%s235] sm:$0x1]
    %237 = vst.msk [vmem:[#allocation2 + $0x3b] sm:$0x1] %vm112, %v236
    %v238 = vld [vmem:[#allocation2] sm:$0xff]
    %v239 = vld [vmem:[#allocation2 + $0x8] sm:$0xff]
    %v240 = vld [vmem:[#allocation2 + $0x10] sm:$0xff]
    %v241 = vld [vmem:[#allocation2 + $0x18] sm:$0xff]
    %v242 = vld [vmem:[#allocation2 + $0x20] sm:$0xff]
    %v243 = vld [vmem:[#allocation2 + $0x28] sm:$0xff]
    %v244 = vld [vmem:[#allocation2 + $0x30] sm:$0xff]
    %v245 = vld [vmem:[#allocation2 + $0x38] sm:$0xff]
    %v246 = vld [vmem:[%s2] sm:$0xff]
    %v247 = vld [vmem:[%s2 + $0x8] sm:$0xff]
    %v248 = vld [vmem:[%s2 + $0x10] sm:$0xff]
    %v249 = vld [vmem:[%s2 + $0x18] sm:$0xff]
    %v250 = vld [vmem:[%s2 + $0x20] sm:$0xff]
    %v251 = vld [vmem:[%s2 + $0x28] sm:$0xff]
    %v252 = vld [vmem:[%s3] sm:$0x7]
    %v254 = vlaneseq
    %v255 = vshrl.u32 %v254, 7
    %v256 = vsub.s32 0, %v255
    %v257 = vrot.slane %v252, %v256
    %v258 = vlaneseq
    %v259 = vshrl.u32 %v258, 7
    %v260 = vsub.s32 1, %v259
    %v261 = vrot.slane %v252, %v260
    %v262 = vlaneseq
    %v263 = vshrl.u32 %v262, 7
    %v264 = vsub.s32 2, %v263
    %v265 = vrot.slane %v252, %v264
    %v270 = vsel %vm100, %v238, 0
    %v273 = vsel %vm100, %v239, 0
    %v276 = vsel %vm100, %v240, 0
    %v279 = vsel %vm100, %v241, 0
    %v282 = vsel %vm100, %v242, 0
    %v285 = vsel %vm100, %v243, 0
    %v288 = vsel %vm100, %v244, 0
    %v291 = vsel %vm100, %v245, 0
    %293 = vmatprep.subr.mxu0 %v247
    %294 = vmatpush1.msra.mxu0 %v246
    %295 = vmatprep.subr.mxu0 %v250
    %296 = vmatpush1.msra.mxu0 %v249
    %297 = vmatprep.subr.mxu0 0.0
    %298 = vmatpush1.msra.mxu0 0.0
    %299 = vmatprep.subr.mxu0 0.0
    %300 = vmatpush1.msra.mxu0 0.0
    %301 = vmatprep.subr.mxu0 0.0
    %302 = vmatpush1.msra.mxu0 0.0
    %303 = vmatprep.subr.mxu0 0.0
    %304 = vmatpush1.msra.mxu0 0.0
    %305 = vmatprep.subr.mxu0 0.0
    %306 = vmatpush1.msra.mxu0 0.0
    %307 = vmatprep.subr.mxu0 0.0
    %308 = vmatpush1.msra.mxu0 0.0
    %309 = vmatprep.subr.mxu0 0.0
    %310 = vmatpush1.msra.mxu0 0.0
    %311 = vmatprep.subr.mxu0 0.0
    %312 = vmatpush1.msra.mxu0 0.0
    %313 = vmatprep.subr.mxu0 0.0
    %314 = vmatpush1.msra.mxu0 0.0
    %315 = vmatprep.subr.mxu0 0.0
    %316 = vmatpush1.msra.mxu0 0.0
    %317 = vmatprep.subr.mxu0 0.0
    %318 = vmatpush1.msra.mxu0 0.0
    %319 = vmatprep.subr.mxu0 0.0
    %320 = vmatpush1.msra.mxu0 0.0
    %321 = vmatprep.subr.mxu0 0.0
    %322 = vmatpush1.msra.mxu0 0.0
    %323 = vmatprep.subr.mxu0 0.0
    %324 = vmatpush1.msra.mxu0 0.0
    %325 = vmatprep.subr.mxu0 0.0
    %326 = vmatpush1.msra.mxu0 0.0
    %327 = vmatprep.subr.mxu0 0.0
    %328 = vmatpush1.msra.mxu0 0.0
    %329 = vmatprep.subr.mxu0 0.0
    %330 = vmatpush1.msra.mxu0 0.0
    %331 = vmatprep.subr.mxu0 0.0
    %332 = vmatpush1.msra.mxu0 0.0
    %333 = vmatprep.subr.mxu0 0.0
    %334 = vmatpush1.msra.mxu0 0.0
    %335 = vmatprep.subr.mxu0 0.0
    %336 = vmatpush1.msra.mxu0 0.0
    %337 = vmatprep.subr.mxu0 0.0
    %338 = vmatpush1.msra.mxu0 0.0
    %339 = vmatprep.subr.mxu0 0.0
    %340 = vmatpush1.msra.mxu0 0.0
    %341 = vmatprep.subr.mxu0 0.0
    %342 = vmatpush1.msra.mxu0 0.0
    %343 = vmatprep.subr.mxu0 0.0
    %344 = vmatpush1.msra.mxu0 0.0
    %345 = vmatprep.subr.mxu0 0.0
    %346 = vmatpush1.msra.mxu0 0.0
    %347 = vmatprep.subr.mxu0 0.0
    %348 = vmatpush1.msra.mxu0 0.0
    %349 = vmatprep.subr.mxu0 0.0
    %350 = vmatpush1.msra.mxu0 0.0
    %351 = vmatprep.subr.mxu0 0.0
    %352 = vmatpush1.msra.mxu0 0.0
    %353 = vmatprep.subr.mxu0 0.0
    %354 = vmatpush1.msra.mxu0 0.0
    %355 = vmatprep.subr.mxu0 0.0
    %356 = vmatpush1.msra.mxu0 0.0
    %357 = vmatprep.mubr.f32.mxu0 0.0
    %358 = vmatmul.mubr.f32.gmra.mrb[0].mxu0 %v270
    %v359 = vpop.f32.mrb[0].mxu0
    %v360 = vadd.f32 %v257, %v359
    %v361 = vpop.f32.mrb[0].mxu0
    %v362 = vadd.f32 %v261, %v361
    %363 = vmatprep.mubr.f32.mxu0 0.0
    %364 = vmatmul.mubr.f32.gmra.mrb[0].mxu0 %v273
    %v365 = vpop.f32.mrb[0].mxu0
    %v366 = vadd.f32 %v257, %v365
    %v367 = vpop.f32.mrb[0].mxu0
    %v368 = vadd.f32 %v261, %v367
    %369 = vmatprep.mubr.f32.mxu0 0.0
    %370 = vmatmul.mubr.f32.gmra.mrb[0].mxu0 %v276
    %v371 = vpop.f32.mrb[0].mxu0
    %v372 = vadd.f32 %v257, %v371
    %v373 = vpop.f32.mrb[0].mxu0
    %v374 = vadd.f32 %v261, %v373
    %375 = vmatprep.mubr.f32.mxu0 0.0
    %376 = vmatmul.mubr.f32.gmra.mrb[0].mxu0 %v279
    %v377 = vpop.f32.mrb[0].mxu0
    %v378 = vadd.f32 %v257, %v377
    %v379 = vpop.f32.mrb[0].mxu0
    %v380 = vadd.f32 %v261, %v379
    %381 = vmatprep.mubr.f32.mxu0 0.0
    %382 = vmatmul.mubr.f32.gmra.mrb[0].mxu0 %v282
    %v383 = vpop.f32.mrb[0].mxu0
    %v384 = vadd.f32 %v257, %v383
    %v385 = vpop.f32.mrb[0].mxu0
    %v386 = vadd.f32 %v261, %v385
    %387 = vmatprep.mubr.f32.mxu0 0.0
    %388 = vmatmul.mubr.f32.gmra.mrb[0].mxu0 %v285
    %v389 = vpop.f32.mrb[0].mxu0
    %v390 = vadd.f32 %v257, %v389
    %v391 = vpop.f32.mrb[0].mxu0
    %v392 = vadd.f32 %v261, %v391
    %393 = vmatprep.mubr.f32.mxu0 0.0
    %394 = vmatmul.mubr.f32.gmra.mrb[0].mxu0 %v288
    %v395 = vpop.f32.mrb[0].mxu0
    %v396 = vadd.f32 %v257, %v395
    %v397 = vpop.f32.mrb[0].mxu0
    %v398 = vadd.f32 %v261, %v397
    %399 = vmatprep.mubr.f32.mxu0 0.0
    %400 = vmatmul.mubr.f32.gmra.mrb[0].mxu0 %v291
    %v401 = vpop.f32.mrb[0].mxu0
    %v402 = vadd.f32 %v257, %v401
    %v403 = vpop.f32.mrb[0].mxu0
    %v404 = vadd.f32 %v261, %v403
    %405 = vdwg.mxu0
    %406 = vmatprep.subr.mxu0 0.0
    %407 = vmatpush1.msra.mxu0 %v248
    %408 = vmatprep.subr.mxu0 0.0
    %409 = vmatpush1.msra.mxu0 %v251
    %410 = vmatprep.subr.mxu0 0.0
    %411 = vmatpush1.msra.mxu0 0.0
    %412 = vmatprep.subr.mxu0 0.0
    %413 = vmatpush1.msra.mxu0 0.0
    %414 = vmatprep.subr.mxu0 0.0
    %415 = vmatpush1.msra.mxu0 0.0
    %416 = vmatprep.subr.mxu0 0.0
    %417 = vmatpush1.msra.mxu0 0.0
    %418 = vmatprep.subr.mxu0 0.0
    %419 = vmatpush1.msra.mxu0 0.0
    %420 = vmatprep.subr.mxu0 0.0
    %421 = vmatpush1.msra.mxu0 0.0
    %422 = vmatprep.subr.mxu0 0.0
    %423 = vmatpush1.msra.mxu0 0.0
    %424 = vmatprep.subr.mxu0 0.0
    %425 = vmatpush1.msra.mxu0 0.0
    %426 = vmatprep.subr.mxu0 0.0
    %427 = vmatpush1.msra.mxu0 0.0
    %428 = vmatprep.subr.mxu0 0.0
    %429 = vmatpush1.msra.mxu0 0.0
    %430 = vmatprep.subr.mxu0 0.0
    %431 = vmatpush1.msra.mxu0 0.0
    %432 = vmatprep.subr.mxu0 0.0
    %433 = vmatpush1.msra.mxu0 0.0
    %434 = vmatprep.subr.mxu0 0.0
    %435 = vmatpush1.msra.mxu0 0.0
    %436 = vmatprep.subr.mxu0 0.0
    %437 = vmatpush1.msra.mxu0 0.0
    %438 = vmatprep.subr.mxu0 0.0
    %439 = vmatpush1.msra.mxu0 0.0
    %440 = vmatprep.subr.mxu0 0.0
    %441 = vmatpush1.msra.mxu0 0.0
    %442 = vmatprep.subr.mxu0 0.0
    %443 = vmatpush1.msra.mxu0 0.0
    %444 = vmatprep.subr.mxu0 0.0
    %445 = vmatpush1.msra.mxu0 0.0
    %446 = vmatprep.subr.mxu0 0.0
    %447 = vmatpush1.msra.mxu0 0.0
    %448 = vmatprep.subr.mxu0 0.0
    %449 = vmatpush1.msra.mxu0 0.0
    %450 = vmatprep.subr.mxu0 0.0
    %451 = vmatpush1.msra.mxu0 0.0
    %452 = vmatprep.subr.mxu0 0.0
    %453 = vmatpush1.msra.mxu0 0.0
    %454 = vmatprep.subr.mxu0 0.0
    %455 = vmatpush1.msra.mxu0 0.0
    %456 = vmatprep.subr.mxu0 0.0
    %457 = vmatpush1.msra.mxu0 0.0
    %458 = vmatprep.subr.mxu0 0.0
    %459 = vmatpush1.msra.mxu0 0.0
    %460 = vmatprep.subr.mxu0 0.0
    %461 = vmatpush1.msra.mxu0 0.0
    %462 = vmatprep.subr.mxu0 0.0
    %463 = vmatpush1.msra.mxu0 0.0
    %464 = vmatprep.subr.mxu0 0.0
    %465 = vmatpush1.msra.mxu0 0.0
    %466 = vmatprep.subr.mxu0 0.0
    %467 = vmatpush1.msra.mxu0 0.0
    %468 = vmatprep.subr.mxu0 0.0
    %469 = vmatpush1.msra.mxu0 0.0
    %470 = vmatprep.mubr.f32.mxu0 0.0
    %471 = vmatmul.mubr.f32.gmra.mrb[0].mxu0 %v270
    %v472 = vpop.f32.mrb[0].mxu0
    %v473 = vadd.f32 %v265, %v472
    %v474 = vpop.f32.mrb[0].mxu0
    %475 = vmatprep.mubr.f32.mxu0 0.0
    %476 = vmatmul.mubr.f32.gmra.mrb[0].mxu0 %v273
    %v477 = vpop.f32.mrb[0].mxu0
    %v478 = vadd.f32 %v265, %v477
    %v479 = vpop.f32.mrb[0].mxu0
    %480 = vmatprep.mubr.f32.mxu0 0.0
    %481 = vmatmul.mubr.f32.gmra.mrb[0].mxu0 %v276
    %v482 = vpop.f32.mrb[0].mxu0
    %v483 = vadd.f32 %v265, %v482
    %v484 = vpop.f32.mrb[0].mxu0
    %485 = vmatprep.mubr.f32.mxu0 0.0
    %486 = vmatmul.mubr.f32.gmra.mrb[0].mxu0 %v279
    %v487 = vpop.f32.mrb[0].mxu0
    %v488 = vadd.f32 %v265, %v487
    %v489 = vpop.f32.mrb[0].mxu0
    %490 = vmatprep.mubr.f32.mxu0 0.0
    %491 = vmatmul.mubr.f32.gmra.mrb[0].mxu0 %v282
    %v492 = vpop.f32.mrb[0].mxu0
    %v493 = vadd.f32 %v265, %v492
    %v494 = vpop.f32.mrb[0].mxu0
    %495 = vmatprep.mubr.f32.mxu0 0.0
    %496 = vmatmul.mubr.f32.gmra.mrb[0].mxu0 %v285
    %v497 = vpop.f32.mrb[0].mxu0
    %v498 = vadd.f32 %v265, %v497
    %v499 = vpop.f32.mrb[0].mxu0
    %500 = vmatprep.mubr.f32.mxu0 0.0
    %501 = vmatmul.mubr.f32.gmra.mrb[0].mxu0 %v288
    %v502 = vpop.f32.mrb[0].mxu0
    %v503 = vadd.f32 %v265, %v502
    %v504 = vpop.f32.mrb[0].mxu0
    %505 = vmatprep.mubr.f32.mxu0 0.0
    %506 = vmatmul.mubr.f32.gmra.mrb[0].mxu0 %v291
    %v507 = vpop.f32.mrb[0].mxu0
    %v508 = vadd.f32 %v265, %v507
    %v509 = vpop.f32.mrb[0].mxu0
    %510 = vdwg.mxu0
    %511 = vst [vmem:[#allocation3] sm:$0xff] %v360
    %512 = vst [vmem:[#allocation3 + $0x8] sm:$0xff] %v362
    %513 = vst [vmem:[#allocation3 + $0x10] sm:$0xff] %v473
    %514 = vst [vmem:[#allocation3 + $0x18] sm:$0xff] %v366
    %515 = vst [vmem:[#allocation3 + $0x20] sm:$0xff] %v368
    %516 = vst [vmem:[#allocation3 + $0x28] sm:$0xff] %v478
    %517 = vst [vmem:[#allocation3 + $0x30] sm:$0xff] %v372
    %518 = vst [vmem:[#allocation3 + $0x38] sm:$0xff] %v374
    %519 = vst [vmem:[#allocation3 + $0x40] sm:$0xff] %v483
    %520 = vst [vmem:[#allocation3 + $0x48] sm:$0xff] %v378
    %521 = vst [vmem:[#allocation3 + $0x50] sm:$0xff] %v380
    %522 = vst [vmem:[#allocation3 + $0x58] sm:$0xff] %v488
    %523 = vst [vmem:[#allocation3 + $0x60] sm:$0xff] %v384
    %524 = vst [vmem:[#allocation3 + $0x68] sm:$0xff] %v386
    %525 = vst [vmem:[#allocation3 + $0x70] sm:$0xff] %v493
    %526 = vst [vmem:[#allocation3 + $0x78] sm:$0xff] %v390
    %527 = vst [vmem:[#allocation3 + $0x80] sm:$0xff] %v392
    %528 = vst [vmem:[#allocation3 + $0x88] sm:$0xff] %v498
    %529 = vst [vmem:[#allocation3 + $0x90] sm:$0xff] %v396
    %530 = vst [vmem:[#allocation3 + $0x98] sm:$0xff] %v398
    %531 = vst [vmem:[#allocation3 + $0xa0] sm:$0xff] %v503
    %532 = vst [vmem:[#allocation3 + $0xa8] sm:$0xff] %v402
    %533 = vst [vmem:[#allocation3 + $0xb0] sm:$0xff] %v404
    %534 = vst [vmem:[#allocation3 + $0xb8] sm:$0xff] %v508
    %v535 = vld [vmem:[%s5] sm:$0x3f]
    %v537 = vlaneseq
    %v538 = vshrl.u32 %v537, 7
    %v539 = vsub.s32 0, %v538
    %v540 = vrot.slane %v535, %v539
    %v541 = vlaneseq
    %v542 = vshrl.u32 %v541, 7
    %v543 = vsub.s32 1, %v542
    %v544 = vrot.slane %v535, %v543
    %v545 = vlaneseq
    %v546 = vshrl.u32 %v545, 7
    %v547 = vsub.s32 2, %v546
    %v548 = vrot.slane %v535, %v547
    %v549 = vlaneseq
    %v550 = vshrl.u32 %v549, 7
    %v551 = vsub.s32 3, %v550
    %v552 = vrot.slane %v535, %v551
    %v553 = vlaneseq
    %v554 = vshrl.u32 %v553, 7
    %v555 = vsub.s32 4, %v554
    %v556 = vrot.slane %v535, %v555
    %v557 = vlaneseq
    %v558 = vshrl.u32 %v557, 7
    %v559 = vsub.s32 5, %v558
    %v560 = vrot.slane %v535, %v559
    %v567 = vld [vmem:[%s7] sm:$0x7]
    %v569 = vlaneseq
    %v570 = vshrl.u32 %v569, 7
    %v571 = vsub.s32 0, %v570
    %v572 = vrot.slane %v567, %v571
    %v573 = vlaneseq
    %v574 = vshrl.u32 %v573, 7
    %v575 = vsub.s32 1, %v574
    %v576 = vrot.slane %v567, %v575
    %v577 = vlaneseq
    %v578 = vshrl.u32 %v577, 7
    %v579 = vsub.s32 2, %v578
    %v580 = vrot.slane %v567, %v579
    %v584 = vld [vmem:[#allocation6] sm:$0xff]
    %v585 = vld [vmem:[#allocation6 + $0x8] sm:$0xff]
    %v586 = vld [vmem:[#allocation6 + $0x10] sm:$0xff]
    %v587 = vld [vmem:[#allocation6 + $0x18] sm:$0xff]
    %v588 = vld [vmem:[#allocation6 + $0x20] sm:$0xff]
    %v589 = vld [vmem:[#allocation6 + $0x28] sm:$0xff]
    %v590 = vld [vmem:[#allocation6 + $0x30] sm:$0xff]
    %v591 = vld [vmem:[#allocation6 + $0x38] sm:$0xff]
    %v592 = vld [vmem:[#allocation6 + $0x40] sm:$0xff]
    %v593 = vld [vmem:[#allocation6 + $0x48] sm:$0xff]
    %v594 = vld [vmem:[#allocation6 + $0x50] sm:$0xff]
    %v595 = vld [vmem:[#allocation6 + $0x58] sm:$0xff]
    %v596 = vld [vmem:[#allocation6 + $0x60] sm:$0xff]
    %v597 = vld [vmem:[#allocation6 + $0x68] sm:$0xff]
    %v598 = vld [vmem:[#allocation6 + $0x70] sm:$0xff]
    %v599 = vld [vmem:[#allocation6 + $0x78] sm:$0xff]
    %v600 = vld [vmem:[#allocation6 + $0x80] sm:$0xff]
    %v601 = vld [vmem:[#allocation6 + $0x88] sm:$0xff]
    %v602 = vld [vmem:[#allocation6 + $0x90] sm:$0xff]
    %v603 = vld [vmem:[#allocation6 + $0x98] sm:$0xff]
    %v604 = vld [vmem:[#allocation6 + $0xa0] sm:$0xff]
    %v605 = vld [vmem:[#allocation6 + $0xa8] sm:$0xff]
    %v606 = vld [vmem:[#allocation6 + $0xb0] sm:$0xff]
    %v607 = vld [vmem:[#allocation6 + $0xb8] sm:$0xff]
    %v608 = vld [vmem:[#allocation6 + $0xc0] sm:$0xff]
    %v609 = vld [vmem:[#allocation6 + $0xc8] sm:$0xff]
    %v610 = vld [vmem:[#allocation6 + $0xd0] sm:$0xff]
    %v611 = vld [vmem:[#allocation6 + $0xd8] sm:$0xff]
    %v612 = vld [vmem:[#allocation6 + $0xe0] sm:$0xff]
    %v613 = vld [vmem:[#allocation6 + $0xe8] sm:$0xff]
    %v614 = vld [vmem:[#allocation6 + $0xf0] sm:$0xff]
    %v615 = vld [vmem:[#allocation6 + $0xf8] sm:$0xff]
    %v616 = vld [vmem:[#allocation6 + $0x100] sm:$0xff]
    %v617 = vld [vmem:[#allocation6 + $0x108] sm:$0xff]
    %v618 = vld [vmem:[#allocation6 + $0x110] sm:$0xff]
    %v619 = vld [vmem:[#allocation6 + $0x118] sm:$0xff]
    %v620 = vld [vmem:[#allocation6 + $0x120] sm:$0xff]
    %v621 = vld [vmem:[#allocation6 + $0x128] sm:$0xff]
    %v622 = vld [vmem:[#allocation6 + $0x130] sm:$0xff]
    %v623 = vld [vmem:[#allocation6 + $0x138] sm:$0xff]
    %v624 = vld [vmem:[#allocation6 + $0x140] sm:$0xff]
    %v625 = vld [vmem:[#allocation6 + $0x148] sm:$0xff]
    %v626 = vld [vmem:[#allocation6 + $0x150] sm:$0xff]
    %v627 = vld [vmem:[#allocation6 + $0x158] sm:$0xff]
    %v628 = vld [vmem:[#allocation6 + $0x160] sm:$0xff]
    %v629 = vld [vmem:[#allocation6 + $0x168] sm:$0xff]
    %v630 = vld [vmem:[#allocation6 + $0x170] sm:$0xff]
    %v631 = vld [vmem:[#allocation6 + $0x178] sm:$0xff]
    %v632 = vld [vmem:[#allocation6 + $0x180] sm:$0xff]
    %v633 = vld [vmem:[#allocation6 + $0x188] sm:$0xff]
    %v634 = vld [vmem:[#allocation6 + $0x190] sm:$0xff]
    %v635 = vld [vmem:[#allocation6 + $0x198] sm:$0xff]
    %v636 = vld [vmem:[#allocation6 + $0x1a0] sm:$0xff]
    %v637 = vld [vmem:[#allocation6 + $0x1a8] sm:$0xff]
    %v638 = vld [vmem:[#allocation6 + $0x1b0] sm:$0xff]
    %v639 = vld [vmem:[#allocation6 + $0x1b8] sm:$0xff]
    %v640 = vld [vmem:[#allocation6 + $0x1c0] sm:$0xff]
    %v641 = vld [vmem:[#allocation6 + $0x1c8] sm:$0xff]
    %v642 = vld [vmem:[#allocation6 + $0x1d0] sm:$0xff]
    %v643 = vld [vmem:[#allocation6 + $0x1d8] sm:$0xff]
    %v644 = vld [vmem:[#allocation6 + $0x1e0] sm:$0xff]
    %v645 = vld [vmem:[#allocation6 + $0x1e8] sm:$0xff]
    %v646 = vld [vmem:[#allocation6 + $0x1f0] sm:$0xff]
    %v647 = vld [vmem:[#allocation6 + $0x1f8] sm:$0xff]
    %v648 = vld [vmem:[#allocation6 + $0x200] sm:$0xff]
    %v649 = vld [vmem:[#allocation6 + $0x208] sm:$0xff]
    %v650 = vld [vmem:[#allocation6 + $0x210] sm:$0xff]
    %v651 = vld [vmem:[#allocation6 + $0x218] sm:$0xff]
    %v652 = vld [vmem:[#allocation6 + $0x220] sm:$0xff]
    %v653 = vld [vmem:[#allocation6 + $0x228] sm:$0xff]
    %v654 = vld [vmem:[#allocation6 + $0x230] sm:$0xff]
    %v655 = vld [vmem:[#allocation6 + $0x238] sm:$0xff]
    %v656 = vld [vmem:[#allocation6 + $0x240] sm:$0xff]
    %v657 = vld [vmem:[#allocation6 + $0x248] sm:$0xff]
    %v658 = vld [vmem:[#allocation6 + $0x250] sm:$0xff]
    %v659 = vld [vmem:[#allocation6 + $0x258] sm:$0xff]
    %v660 = vld [vmem:[#allocation6 + $0x260] sm:$0xff]
    %v661 = vld [vmem:[#allocation6 + $0x268] sm:$0xff]
    %v662 = vld [vmem:[#allocation6 + $0x270] sm:$0xff]
    %v663 = vld [vmem:[#allocation6 + $0x278] sm:$0xff]
    %v664 = vld [vmem:[#allocation6 + $0x280] sm:$0xff]
    %v665 = vld [vmem:[#allocation6 + $0x288] sm:$0xff]
    %v666 = vld [vmem:[#allocation6 + $0x290] sm:$0xff]
    %v667 = vld [vmem:[#allocation6 + $0x298] sm:$0xff]
    %v668 = vld [vmem:[#allocation6 + $0x2a0] sm:$0xff]
    %v669 = vld [vmem:[#allocation6 + $0x2a8] sm:$0xff]
    %v670 = vld [vmem:[#allocation6 + $0x2b0] sm:$0xff]
    %v671 = vld [vmem:[#allocation6 + $0x2b8] sm:$0xff]
    %v672 = vld [vmem:[#allocation6 + $0x2c0] sm:$0xff]
    %v673 = vld [vmem:[#allocation6 + $0x2c8] sm:$0xff]
    %v674 = vld [vmem:[#allocation6 + $0x2d0] sm:$0xff]
    %v675 = vld [vmem:[#allocation6 + $0x2d8] sm:$0xff]
    %v676 = vld [vmem:[#allocation6 + $0x2e0] sm:$0xff]
    %v677 = vld [vmem:[#allocation6 + $0x2e8] sm:$0xff]
    %v678 = vld [vmem:[#allocation6 + $0x2f0] sm:$0xff]
    %v679 = vld [vmem:[#allocation6 + $0x2f8] sm:$0xff]
    %v680 = vld [vmem:[#allocation6 + $0x300] sm:$0xff]
    %v681 = vld [vmem:[#allocation6 + $0x308] sm:$0xff]
    %v682 = vld [vmem:[#allocation6 + $0x310] sm:$0xff]
    %v683 = vld [vmem:[#allocation6 + $0x318] sm:$0xff]
    %v684 = vld [vmem:[#allocation6 + $0x320] sm:$0xff]
    %v685 = vld [vmem:[#allocation6 + $0x328] sm:$0xff]
    %v686 = vld [vmem:[#allocation6 + $0x330] sm:$0xff]
    %v687 = vld [vmem:[#allocation6 + $0x338] sm:$0xff]
    %v688 = vld [vmem:[#allocation6 + $0x340] sm:$0xff]
    %v689 = vld [vmem:[#allocation6 + $0x348] sm:$0xff]
    %v690 = vld [vmem:[#allocation6 + $0x350] sm:$0xff]
    %v691 = vld [vmem:[#allocation6 + $0x358] sm:$0xff]
    %v692 = vld [vmem:[#allocation6 + $0x360] sm:$0xff]
    %v693 = vld [vmem:[#allocation6 + $0x368] sm:$0xff]
    %v694 = vld [vmem:[#allocation6 + $0x370] sm:$0xff]
    %v695 = vld [vmem:[#allocation6 + $0x378] sm:$0xff]
    %v696 = vld [vmem:[#allocation6 + $0x380] sm:$0xff]
    %v697 = vld [vmem:[#allocation6 + $0x388] sm:$0xff]
    %v698 = vld [vmem:[#allocation6 + $0x390] sm:$0xff]
    %v699 = vld [vmem:[#allocation6 + $0x398] sm:$0xff]
    %v700 = vld [vmem:[#allocation6 + $0x3a0] sm:$0xff]
    %v701 = vld [vmem:[#allocation6 + $0x3a8] sm:$0xff]
    %v702 = vld [vmem:[#allocation6 + $0x3b0] sm:$0xff]
    %v703 = vld [vmem:[#allocation6 + $0x3b8] sm:$0xff]
    %v704 = vld [vmem:[#allocation6 + $0x3c0] sm:$0xff]
    %v705 = vld [vmem:[#allocation6 + $0x3c8] sm:$0xff]
    %v706 = vld [vmem:[#allocation6 + $0x3d0] sm:$0xff]
    %v707 = vld [vmem:[#allocation6 + $0x3d8] sm:$0xff]
    %v708 = vld [vmem:[#allocation6 + $0x3e0] sm:$0xff]
    %v709 = vld [vmem:[#allocation6 + $0x3e8] sm:$0xff]
    %v710 = vld [vmem:[#allocation6 + $0x3f0] sm:$0xff]
    %v711 = vld [vmem:[#allocation6 + $0x3f8] sm:$0xff]
    %v712 = vld [vmem:[#allocation6 + $0x400] sm:$0xff]
    %v713 = vld [vmem:[#allocation6 + $0x408] sm:$0xff]
    %v714 = vld [vmem:[#allocation6 + $0x410] sm:$0xff]
    %v715 = vld [vmem:[#allocation6 + $0x418] sm:$0xff]
    %v716 = vld [vmem:[#allocation6 + $0x420] sm:$0xff]
    %v717 = vld [vmem:[#allocation6 + $0x428] sm:$0xff]
    %v718 = vld [vmem:[#allocation6 + $0x430] sm:$0xff]
    %v719 = vld [vmem:[#allocation6 + $0x438] sm:$0xff]
    %v720 = vld [vmem:[#allocation6 + $0x440] sm:$0xff]
    %v721 = vld [vmem:[#allocation6 + $0x448] sm:$0xff]
    %v722 = vld [vmem:[#allocation6 + $0x450] sm:$0xff]
    %v723 = vld [vmem:[#allocation6 + $0x458] sm:$0xff]
    %v724 = vld [vmem:[#allocation6 + $0x460] sm:$0xff]
    %v725 = vld [vmem:[#allocation6 + $0x468] sm:$0xff]
    %v726 = vld [vmem:[#allocation6 + $0x470] sm:$0xff]
    %v727 = vld [vmem:[#allocation6 + $0x478] sm:$0xff]
    %v728 = vld [vmem:[#allocation6 + $0x480] sm:$0xff]
    %v729 = vld [vmem:[#allocation6 + $0x488] sm:$0xff]
    %v730 = vld [vmem:[#allocation6 + $0x490] sm:$0xff]
    %v731 = vld [vmem:[#allocation6 + $0x498] sm:$0xff]
    %v732 = vld [vmem:[#allocation6 + $0x4a0] sm:$0xff]
    %v733 = vld [vmem:[#allocation6 + $0x4a8] sm:$0xff]
    %v734 = vld [vmem:[#allocation6 + $0x4b0] sm:$0xff]
    %v735 = vld [vmem:[#allocation6 + $0x4b8] sm:$0xff]
    %v736 = vld [vmem:[#allocation6 + $0x4c0] sm:$0xff]
    %v737 = vld [vmem:[#allocation6 + $0x4c8] sm:$0xff]
    %v738 = vld [vmem:[#allocation6 + $0x4d0] sm:$0xff]
    %v739 = vld [vmem:[#allocation6 + $0x4d8] sm:$0xff]
    %v740 = vld [vmem:[#allocation6 + $0x4e0] sm:$0xff]
    %v741 = vld [vmem:[#allocation6 + $0x4e8] sm:$0xff]
    %v742 = vld [vmem:[#allocation6 + $0x4f0] sm:$0xff]
    %v743 = vld [vmem:[#allocation6 + $0x4f8] sm:$0xff]
    %v744 = vld [vmem:[#allocation6 + $0x500] sm:$0xff]
    %v745 = vld [vmem:[#allocation6 + $0x508] sm:$0xff]
    %v746 = vld [vmem:[#allocation6 + $0x510] sm:$0xff]
    %v747 = vld [vmem:[#allocation6 + $0x518] sm:$0xff]
    %v748 = vld [vmem:[#allocation6 + $0x520] sm:$0xff]
    %v749 = vld [vmem:[#allocation6 + $0x528] sm:$0xff]
    %v750 = vld [vmem:[#allocation6 + $0x530] sm:$0xff]
    %v751 = vld [vmem:[#allocation6 + $0x538] sm:$0xff]
    %v752 = vld [vmem:[#allocation6 + $0x540] sm:$0xff]
    %v753 = vld [vmem:[#allocation6 + $0x548] sm:$0xff]
    %v754 = vld [vmem:[#allocation6 + $0x550] sm:$0xff]
    %v755 = vld [vmem:[#allocation6 + $0x558] sm:$0xff]
    %v756 = vld [vmem:[#allocation6 + $0x560] sm:$0xff]
    %v757 = vld [vmem:[#allocation6 + $0x568] sm:$0xff]
    %v758 = vld [vmem:[#allocation6 + $0x570] sm:$0xff]
    %v759 = vld [vmem:[#allocation6 + $0x578] sm:$0xff]
    %v760 = vld [vmem:[#allocation6 + $0x580] sm:$0xff]
    %v761 = vld [vmem:[#allocation6 + $0x588] sm:$0xff]
    %v762 = vld [vmem:[#allocation6 + $0x590] sm:$0xff]
    %v763 = vld [vmem:[#allocation6 + $0x598] sm:$0xff]
    %v764 = vld [vmem:[#allocation6 + $0x5a0] sm:$0xff]
    %v765 = vld [vmem:[#allocation6 + $0x5a8] sm:$0xff]
    %v766 = vld [vmem:[#allocation6 + $0x5b0] sm:$0xff]
    %v767 = vld [vmem:[#allocation6 + $0x5b8] sm:$0xff]
    %v768 = vld [vmem:[#allocation6 + $0x5c0] sm:$0xff]
    %v769 = vld [vmem:[#allocation6 + $0x5c8] sm:$0xff]
    %v770 = vld [vmem:[#allocation6 + $0x5d0] sm:$0xff]
    %v771 = vld [vmem:[#allocation6 + $0x5d8] sm:$0xff]
    %v772 = vld [vmem:[#allocation6 + $0x5e0] sm:$0xff]
    %v773 = vld [vmem:[#allocation6 + $0x5e8] sm:$0xff]
    %v774 = vld [vmem:[#allocation6 + $0x5f0] sm:$0xff]
    %v775 = vld [vmem:[#allocation6 + $0x5f8] sm:$0xff]
    %776 = vmatprep.subr.mxu0 %v585
    %777 = vmatpush1.msra.mxu0 %v584
    %778 = vmatprep.subr.mxu0 %v591
    %779 = vmatpush1.msra.mxu0 %v590
    %780 = vmatprep.subr.mxu0 %v597
    %781 = vmatpush1.msra.mxu0 %v596
    %782 = vmatprep.subr.mxu0 %v603
    %783 = vmatpush1.msra.mxu0 %v602
    %784 = vmatprep.subr.mxu0 %v609
    %785 = vmatpush1.msra.mxu0 %v608
    %786 = vmatprep.subr.mxu0 %v615
    %787 = vmatpush1.msra.mxu0 %v614
    %788 = vmatprep.subr.mxu0 %v621
    %789 = vmatpush1.msra.mxu0 %v620
    %790 = vmatprep.subr.mxu0 %v627
    %791 = vmatpush1.msra.mxu0 %v626
    %792 = vmatprep.subr.mxu0 %v633
    %793 = vmatpush1.msra.mxu0 %v632
    %794 = vmatprep.subr.mxu0 %v639
    %795 = vmatpush1.msra.mxu0 %v638
    %796 = vmatprep.subr.mxu0 %v645
    %797 = vmatpush1.msra.mxu0 %v644
    %798 = vmatprep.subr.mxu0 %v651
    %799 = vmatpush1.msra.mxu0 %v650
    %800 = vmatprep.subr.mxu0 %v657
    %801 = vmatpush1.msra.mxu0 %v656
    %802 = vmatprep.subr.mxu0 %v663
    %803 = vmatpush1.msra.mxu0 %v662
    %804 = vmatprep.subr.mxu0 %v669
    %805 = vmatpush1.msra.mxu0 %v668
    %806 = vmatprep.subr.mxu0 %v675
    %807 = vmatpush1.msra.mxu0 %v674
    %808 = vmatprep.subr.mxu0 %v681
    %809 = vmatpush1.msra.mxu0 %v680
    %810 = vmatprep.subr.mxu0 %v687
    %811 = vmatpush1.msra.mxu0 %v686
    %812 = vmatprep.subr.mxu0 %v693
    %813 = vmatpush1.msra.mxu0 %v692
    %814 = vmatprep.subr.mxu0 %v699
    %815 = vmatpush1.msra.mxu0 %v698
    %816 = vmatprep.subr.mxu0 %v705
    %817 = vmatpush1.msra.mxu0 %v704
    %818 = vmatprep.subr.mxu0 %v711
    %819 = vmatpush1.msra.mxu0 %v710
    %820 = vmatprep.subr.mxu0 %v717
    %821 = vmatpush1.msra.mxu0 %v716
    %822 = vmatprep.subr.mxu0 %v723
    %823 = vmatpush1.msra.mxu0 %v722
    %824 = vmatprep.subr.mxu0 %v729
    %825 = vmatpush1.msra.mxu0 %v728
    %826 = vmatprep.subr.mxu0 %v735
    %827 = vmatpush1.msra.mxu0 %v734
    %828 = vmatprep.subr.mxu0 %v741
    %829 = vmatpush1.msra.mxu0 %v740
    %830 = vmatprep.subr.mxu0 %v747
    %831 = vmatpush1.msra.mxu0 %v746
    %832 = vmatprep.subr.mxu0 %v753
    %833 = vmatpush1.msra.mxu0 %v752
    %834 = vmatprep.subr.mxu0 %v759
    %835 = vmatpush1.msra.mxu0 %v758
    %836 = vmatprep.subr.mxu0 %v765
    %837 = vmatpush1.msra.mxu0 %v764
    %838 = vmatprep.subr.mxu0 %v771
    %839 = vmatpush1.msra.mxu0 %v770
    %840 = vmatprep.mubr.f32.mxu0 0.0
    %841 = vmatmul.mubr.f32.gmra.mrb[0].mxu0 0.0
    %v842 = vpop.f32.mrb[0].mxu0
    %v843 = vadd.f32 %v540, %v842
    %v844 = vpop.f32.mrb[0].mxu0
    %v845 = vadd.f32 %v544, %v844
    %846 = vdwg.mxu0
    %847 = vmatprep.subr.mxu0 %v587
    %848 = vmatpush1.msra.mxu0 %v586
    %849 = vmatprep.subr.mxu0 %v593
    %850 = vmatpush1.msra.mxu0 %v592
    %851 = vmatprep.subr.mxu0 %v599
    %852 = vmatpush1.msra.mxu0 %v598
    %853 = vmatprep.subr.mxu0 %v605
    %854 = vmatpush1.msra.mxu0 %v604
    %855 = vmatprep.subr.mxu0 %v611
    %856 = vmatpush1.msra.mxu0 %v610
    %857 = vmatprep.subr.mxu0 %v617
    %858 = vmatpush1.msra.mxu0 %v616
    %859 = vmatprep.subr.mxu0 %v623
    %860 = vmatpush1.msra.mxu0 %v622
    %861 = vmatprep.subr.mxu0 %v629
    %862 = vmatpush1.msra.mxu0 %v628
    %863 = vmatprep.subr.mxu0 %v635
    %864 = vmatpush1.msra.mxu0 %v634
    %865 = vmatprep.subr.mxu0 %v641
    %866 = vmatpush1.msra.mxu0 %v640
    %867 = vmatprep.subr.mxu0 %v647
    %868 = vmatpush1.msra.mxu0 %v646
    %869 = vmatprep.subr.mxu0 %v653
    %870 = vmatpush1.msra.mxu0 %v652
    %871 = vmatprep.subr.mxu0 %v659
    %872 = vmatpush1.msra.mxu0 %v658
    %873 = vmatprep.subr.mxu0 %v665
    %874 = vmatpush1.msra.mxu0 %v664
    %875 = vmatprep.subr.mxu0 %v671
    %876 = vmatpush1.msra.mxu0 %v670
    %877 = vmatprep.subr.mxu0 %v677
    %878 = vmatpush1.msra.mxu0 %v676
    %879 = vmatprep.subr.mxu0 %v683
    %880 = vmatpush1.msra.mxu0 %v682
    %881 = vmatprep.subr.mxu0 %v689
    %882 = vmatpush1.msra.mxu0 %v688
    %883 = vmatprep.subr.mxu0 %v695
    %884 = vmatpush1.msra.mxu0 %v694
    %885 = vmatprep.subr.mxu0 %v701
    %886 = vmatpush1.msra.mxu0 %v700
    %887 = vmatprep.subr.mxu0 %v707
    %888 = vmatpush1.msra.mxu0 %v706
    %889 = vmatprep.subr.mxu0 %v713
    %890 = vmatpush1.msra.mxu0 %v712
    %891 = vmatprep.subr.mxu0 %v719
    %892 = vmatpush1.msra.mxu0 %v718
    %893 = vmatprep.subr.mxu0 %v725
    %894 = vmatpush1.msra.mxu0 %v724
    %895 = vmatprep.subr.mxu0 %v731
    %896 = vmatpush1.msra.mxu0 %v730
    %897 = vmatprep.subr.mxu0 %v737
    %898 = vmatpush1.msra.mxu0 %v736
    %899 = vmatprep.subr.mxu0 %v743
    %900 = vmatpush1.msra.mxu0 %v742
    %901 = vmatprep.subr.mxu0 %v749
    %902 = vmatpush1.msra.mxu0 %v748
    %903 = vmatprep.subr.mxu0 %v755
    %904 = vmatpush1.msra.mxu0 %v754
    %905 = vmatprep.subr.mxu0 %v761
    %906 = vmatpush1.msra.mxu0 %v760
    %907 = vmatprep.subr.mxu0 %v767
    %908 = vmatpush1.msra.mxu0 %v766
    %909 = vmatprep.subr.mxu0 %v773
    %910 = vmatpush1.msra.mxu0 %v772
    %911 = vmatprep.mubr.f32.mxu0 0.0
    %912 = vmatmul.mubr.f32.gmra.mrb[0].mxu0 0.0
    %v913 = vpop.f32.mrb[0].mxu0
    %v914 = vadd.f32 %v548, %v913
    %v915 = vpop.f32.mrb[0].mxu0
    %v916 = vadd.f32 %v552, %v915
    %917 = vdwg.mxu0
    %918 = vmatprep.subr.mxu0 %v589
    %919 = vmatpush1.msra.mxu0 %v588
    %920 = vmatprep.subr.mxu0 %v595
    %921 = vmatpush1.msra.mxu0 %v594
    %922 = vmatprep.subr.mxu0 %v601
    %923 = vmatpush1.msra.mxu0 %v600
    %924 = vmatprep.subr.mxu0 %v607
    %925 = vmatpush1.msra.mxu0 %v606
    %926 = vmatprep.subr.mxu0 %v613
    %927 = vmatpush1.msra.mxu0 %v612
    %928 = vmatprep.subr.mxu0 %v619
    %929 = vmatpush1.msra.mxu0 %v618
    %930 = vmatprep.subr.mxu0 %v625
    %931 = vmatpush1.msra.mxu0 %v624
    %932 = vmatprep.subr.mxu0 %v631
    %933 = vmatpush1.msra.mxu0 %v630
    %934 = vmatprep.subr.mxu0 %v637
    %935 = vmatpush1.msra.mxu0 %v636
    %936 = vmatprep.subr.mxu0 %v643
    %937 = vmatpush1.msra.mxu0 %v642
    %938 = vmatprep.subr.mxu0 %v649
    %939 = vmatpush1.msra.mxu0 %v648
    %940 = vmatprep.subr.mxu0 %v655
    %941 = vmatpush1.msra.mxu0 %v654
    %942 = vmatprep.subr.mxu0 %v661
    %943 = vmatpush1.msra.mxu0 %v660
    %944 = vmatprep.subr.mxu0 %v667
    %945 = vmatpush1.msra.mxu0 %v666
    %946 = vmatprep.subr.mxu0 %v673
    %947 = vmatpush1.msra.mxu0 %v672
    %948 = vmatprep.subr.mxu0 %v679
    %949 = vmatpush1.msra.mxu0 %v678
    %950 = vmatprep.subr.mxu0 %v685
    %951 = vmatpush1.msra.mxu0 %v684
    %952 = vmatprep.subr.mxu0 %v691
    %953 = vmatpush1.msra.mxu0 %v690
    %954 = vmatprep.subr.mxu0 %v697
    %955 = vmatpush1.msra.mxu0 %v696
    %956 = vmatprep.subr.mxu0 %v703
    %957 = vmatpush1.msra.mxu0 %v702
    %958 = vmatprep.subr.mxu0 %v709
    %959 = vmatpush1.msra.mxu0 %v708
    %960 = vmatprep.subr.mxu0 %v715
    %961 = vmatpush1.msra.mxu0 %v714
    %962 = vmatprep.subr.mxu0 %v721
    %963 = vmatpush1.msra.mxu0 %v720
    %964 = vmatprep.subr.mxu0 %v727
    %965 = vmatpush1.msra.mxu0 %v726
    %966 = vmatprep.subr.mxu0 %v733
    %967 = vmatpush1.msra.mxu0 %v732
    %968 = vmatprep.subr.mxu0 %v739
    %969 = vmatpush1.msra.mxu0 %v738
    %970 = vmatprep.subr.mxu0 %v745
    %971 = vmatpush1.msra.mxu0 %v744
    %972 = vmatprep.subr.mxu0 %v751
    %973 = vmatpush1.msra.mxu0 %v750
    %974 = vmatprep.subr.mxu0 %v757
    %975 = vmatpush1.msra.mxu0 %v756
    %976 = vmatprep.subr.mxu0 %v763
    %977 = vmatpush1.msra.mxu0 %v762
    %978 = vmatprep.subr.mxu0 %v769
    %979 = vmatpush1.msra.mxu0 %v768
    %980 = vmatprep.subr.mxu0 %v775
    %981 = vmatpush1.msra.mxu0 %v774
    %982 = vmatprep.mubr.f32.mxu0 0.0
    %983 = vmatmul.mubr.f32.gmra.mrb[0].mxu0 0.0
    %v984 = vpop.f32.mrb[0].mxu0
    %v985 = vadd.f32 %v556, %v984
    %v986 = vpop.f32.mrb[0].mxu0
    %v987 = vadd.f32 %v560, %v986
    %988 = vdwg.mxu0
    %v989 = vld [vmem:[#allocation3] sm:$0xff]
    %v990 = vld [vmem:[#allocation3 + $0x8] sm:$0xff]
    %v991 = vld [vmem:[#allocation3 + $0x10] sm:$0xff]
    %v992 = vadd.f32 %v989, %v843
    %v993 = vadd.f32 %v990, %v845
    %v994 = vxor.u32 %v992, 2147483648
    %v995 = vxor.u32 %v993, 2147483648
    %v996 = vmul.f32 %v994, 1.442695
    %v997 = vpow.pop %v996
    %v998 = vmul.f32 %v995, 1.442695
    %v999 = vpow.pop %v998
    %v1000 = vadd.f32 %v997, 1.0
    %v1001 = vadd.f32 %v999, 1.0
    %v1002 = vrcp.pop %v1000
    %v1003 = vmul.f32 1.0, %v1002
    %v1004 = vrcp.pop %v1001
    %v1005 = vmul.f32 1.0, %v1004
    %v1006 = vmul.f32 %v1003, %v914
    %v1007 = vadd.f32 %v991, %v1006
    %v1008 = vtanh.pop %v1007
    %v1009 = vsub.f32 1.0, %v1005
    %v1010 = vmul.f32 %v1009, %v1008
    %v1011 = vmul.f32 %v1005, 0.0
    %v1012 = vadd.f32 %v1010, %v1011
    %v1013 = vld [vmem:[#allocation8] sm:$0xff]
    %v1014 = vld [vmem:[#allocation8 + $0x8] sm:$0xff]
    %v1015 = vld [vmem:[#allocation8 + $0x10] sm:$0xff]
    %v1016 = vld [vmem:[#allocation8 + $0x18] sm:$0xff]
    %v1017 = vld [vmem:[#allocation8 + $0x20] sm:$0xff]
    %v1018 = vld [vmem:[#allocation8 + $0x28] sm:$0xff]
    %v1019 = vld [vmem:[#allocation8 + $0x30] sm:$0xff]
    %v1020 = vld [vmem:[#allocation8 + $0x38] sm:$0xff]
    %v1021 = vld [vmem:[#allocation8 + $0x40] sm:$0xff]
    %v1022 = vld [vmem:[#allocation8 + $0x48] sm:$0xff]
    %v1023 = vld [vmem:[#allocation8 + $0x50] sm:$0xff]
    %v1024 = vld [vmem:[#allocation8 + $0x58] sm:$0xff]
    %v1025 = vld [vmem:[#allocation8 + $0x60] sm:$0xff]
    %v1026 = vld [vmem:[#allocation8 + $0x68] sm:$0xff]
    %v1027 = vld [vmem:[#allocation8 + $0x70] sm:$0xff]
    %v1028 = vld [vmem:[#allocation8 + $0x78] sm:$0xff]
    %v1029 = vld [vmem:[#allocation8 + $0x80] sm:$0xff]
    %v1030 = vld [vmem:[#allocation8 + $0x88] sm:$0xff]
    %v1031 = vld [vmem:[#allocation8 + $0x90] sm:$0xff]
    %v1032 = vld [vmem:[#allocation8 + $0x98] sm:$0xff]
    %v1033 = vld [vmem:[#allocation8 + $0xa0] sm:$0xff]
    %v1034 = vld [vmem:[#allocation8 + $0xa8] sm:$0xff]
    %v1035 = vld [vmem:[#allocation8 + $0xb0] sm:$0xff]
    %v1036 = vld [vmem:[#allocation8 + $0xb8] sm:$0xff]
    %v1037 = vld [vmem:[#allocation8 + $0xc0] sm:$0xff]
    %v1038 = vld [vmem:[#allocation8 + $0xc8] sm:$0xff]
    %v1039 = vld [vmem:[#allocation8 + $0xd0] sm:$0xff]
    %v1040 = vld [vmem:[#allocation8 + $0xd8] sm:$0xff]
    %v1041 = vld [vmem:[#allocation8 + $0xe0] sm:$0xff]
    %v1042 = vld [vmem:[#allocation8 + $0xe8] sm:$0xff]
    %v1043 = vld [vmem:[#allocation8 + $0xf0] sm:$0xff]
    %v1044 = vld [vmem:[#allocation8 + $0xf8] sm:$0xff]
    %v1045 = vld [vmem:[#allocation8 + $0x100] sm:$0xff]
    %v1046 = vld [vmem:[#allocation8 + $0x108] sm:$0xff]
    %v1047 = vld [vmem:[#allocation8 + $0x110] sm:$0xff]
    %v1048 = vld [vmem:[#allocation8 + $0x118] sm:$0xff]
    %v1049 = vld [vmem:[#allocation8 + $0x120] sm:$0xff]
    %v1050 = vld [vmem:[#allocation8 + $0x128] sm:$0xff]
    %v1051 = vld [vmem:[#allocation8 + $0x130] sm:$0xff]
    %v1052 = vld [vmem:[#allocation8 + $0x138] sm:$0xff]
    %v1053 = vld [vmem:[#allocation8 + $0x140] sm:$0xff]
    %v1054 = vld [vmem:[#allocation8 + $0x148] sm:$0xff]
    %v1055 = vld [vmem:[#allocation8 + $0x150] sm:$0xff]
    %v1056 = vld [vmem:[#allocation8 + $0x158] sm:$0xff]
    %v1057 = vld [vmem:[#allocation8 + $0x160] sm:$0xff]
    %v1058 = vld [vmem:[#allocation8 + $0x168] sm:$0xff]
    %v1059 = vld [vmem:[#allocation8 + $0x170] sm:$0xff]
    %v1060 = vld [vmem:[#allocation8 + $0x178] sm:$0xff]
    %1061 = vmatprep.subr.mxu0 %v1014
    %1062 = vmatpush1.msra.mxu0 %v1013
    %1063 = vmatprep.subr.mxu0 %v1017
    %1064 = vmatpush1.msra.mxu0 %v1016
    %1065 = vmatprep.subr.mxu0 %v1020
    %1066 = vmatpush1.msra.mxu0 %v1019
    %1067 = vmatprep.subr.mxu0 %v1023
    %1068 = vmatpush1.msra.mxu0 %v1022
    %1069 = vmatprep.subr.mxu0 %v1026
    %1070 = vmatpush1.msra.mxu0 %v1025
    %1071 = vmatprep.subr.mxu0 %v1029
    %1072 = vmatpush1.msra.mxu0 %v1028
    %1073 = vmatprep.subr.mxu0 %v1032
    %1074 = vmatpush1.msra.mxu0 %v1031
    %1075 = vmatprep.subr.mxu0 %v1035
    %1076 = vmatpush1.msra.mxu0 %v1034
    %1077 = vmatprep.subr.mxu0 %v1038
    %1078 = vmatpush1.msra.mxu0 %v1037
    %1079 = vmatprep.subr.mxu0 %v1041
    %1080 = vmatpush1.msra.mxu0 %v1040
    %1081 = vmatprep.subr.mxu0 %v1044
    %1082 = vmatpush1.msra.mxu0 %v1043
    %1083 = vmatprep.subr.mxu0 %v1047
    %1084 = vmatpush1.msra.mxu0 %v1046
    %1085 = vmatprep.subr.mxu0 %v1050
    %1086 = vmatpush1.msra.mxu0 %v1049
    %1087 = vmatprep.subr.mxu0 %v1053
    %1088 = vmatpush1.msra.mxu0 %v1052
    %1089 = vmatprep.subr.mxu0 %v1056
    %1090 = vmatpush1.msra.mxu0 %v1055
    %1091 = vmatprep.subr.mxu0 %v1059
    %1092 = vmatpush1.msra.mxu0 %v1058
    %1093 = vmatprep.subr.mxu0 0.0
    %1094 = vmatpush1.msra.mxu0 0.0
    %1095 = vmatprep.subr.mxu0 0.0
    %1096 = vmatpush1.msra.mxu0 0.0
    %1097 = vmatprep.subr.mxu0 0.0
    %1098 = vmatpush1.msra.mxu0 0.0
    %1099 = vmatprep.subr.mxu0 0.0
    %1100 = vmatpush1.msra.mxu0 0.0
    %1101 = vmatprep.subr.mxu0 0.0
    %1102 = vmatpush1.msra.mxu0 0.0
    %1103 = vmatprep.subr.mxu0 0.0
    %1104 = vmatpush1.msra.mxu0 0.0
    %1105 = vmatprep.subr.mxu0 0.0
    %1106 = vmatpush1.msra.mxu0 0.0
    %1107 = vmatprep.subr.mxu0 0.0
    %1108 = vmatpush1.msra.mxu0 0.0
    %1109 = vmatprep.subr.mxu0 0.0
    %1110 = vmatpush1.msra.mxu0 0.0
    %1111 = vmatprep.subr.mxu0 0.0
    %1112 = vmatpush1.msra.mxu0 0.0
    %1113 = vmatprep.subr.mxu0 0.0
    %1114 = vmatpush1.msra.mxu0 0.0
    %1115 = vmatprep.subr.mxu0 0.0
    %1116 = vmatpush1.msra.mxu0 0.0
    %1117 = vmatprep.subr.mxu0 0.0
    %1118 = vmatpush1.msra.mxu0 0.0
    %1119 = vmatprep.subr.mxu0 0.0
    %1120 = vmatpush1.msra.mxu0 0.0
    %1121 = vmatprep.subr.mxu0 0.0
    %1122 = vmatpush1.msra.mxu0 0.0
    %1123 = vmatprep.subr.mxu0 0.0
    %1124 = vmatpush1.msra.mxu0 0.0
    %1125 = vmatprep.mubr.f32.mxu0 0.0
    %1126 = vmatmul.mubr.f32.gmra.mrb[0].mxu0 %v1012
    %v1127 = vpop.f32.mrb[0].mxu0
    %v1128 = vadd.f32 %v572, %v1127
    %v1129 = vpop.f32.mrb[0].mxu0
    %v1130 = vadd.f32 %v576, %v1129
    %1131 = vdwg.mxu0
    %1132 = vmatprep.subr.mxu0 0.0
    %1133 = vmatpush1.msra.mxu0 %v1015
    %1134 = vmatprep.subr.mxu0 0.0
    %1135 = vmatpush1.msra.mxu0 %v1018
    %1136 = vmatprep.subr.mxu0 0.0
    %1137 = vmatpush1.msra.mxu0 %v1021
    %1138 = vmatprep.subr.mxu0 0.0
    %1139 = vmatpush1.msra.mxu0 %v1024
    %1140 = vmatprep.subr.mxu0 0.0
    %1141 = vmatpush1.msra.mxu0 %v1027
    %1142 = vmatprep.subr.mxu0 0.0
    %1143 = vmatpush1.msra.mxu0 %v1030
    %1144 = vmatprep.subr.mxu0 0.0
    %1145 = vmatpush1.msra.mxu0 %v1033
    %1146 = vmatprep.subr.mxu0 0.0
    %1147 = vmatpush1.msra.mxu0 %v1036
    %1148 = vmatprep.subr.mxu0 0.0
    %1149 = vmatpush1.msra.mxu0 %v1039
    %1150 = vmatprep.subr.mxu0 0.0
    %1151 = vmatpush1.msra.mxu0 %v1042
    %1152 = vmatprep.subr.mxu0 0.0
    %1153 = vmatpush1.msra.mxu0 %v1045
    %1154 = vmatprep.subr.mxu0 0.0
    %1155 = vmatpush1.msra.mxu0 %v1048
    %1156 = vmatprep.subr.mxu0 0.0
    %1157 = vmatpush1.msra.mxu0 %v1051
    %1158 = vmatprep.subr.mxu0 0.0
    %1159 = vmatpush1.msra.mxu0 %v1054
    %1160 = vmatprep.subr.mxu0 0.0
    %1161 = vmatpush1.msra.mxu0 %v1057
    %1162 = vmatprep.subr.mxu0 0.0
    %1163 = vmatpush1.msra.mxu0 %v1060
    %1164 = vmatprep.subr.mxu0 0.0
    %1165 = vmatpush1.msra.mxu0 0.0
    %1166 = vmatprep.subr.mxu0 0.0
    %1167 = vmatpush1.msra.mxu0 0.0
    %1168 = vmatprep.subr.mxu0 0.0
    %1169 = vmatpush1.msra.mxu0 0.0
    %1170 = vmatprep.subr.mxu0 0.0
    %1171 = vmatpush1.msra.mxu0 0.0
    %1172 = vmatprep.subr.mxu0 0.0
    %1173 = vmatpush1.msra.mxu0 0.0
    %1174 = vmatprep.subr.mxu0 0.0
    %1175 = vmatpush1.msra.mxu0 0.0
    %1176 = vmatprep.subr.mxu0 0.0
    %1177 = vmatpush1.msra.mxu0 0.0
    %1178 = vmatprep.subr.mxu0 0.0
    %1179 = vmatpush1.msra.mxu0 0.0
    %1180 = vmatprep.subr.mxu0 0.0
    %1181 = vmatpush1.msra.mxu0 0.0
    %1182 = vmatprep.subr.mxu0 0.0
    %1183 = vmatpush1.msra.mxu0 0.0
    %1184 = vmatprep.subr.mxu0 0.0
    %1185 = vmatpush1.msra.mxu0 0.0
    %1186 = vmatprep.subr.mxu0 0.0
    %1187 = vmatpush1.msra.mxu0 0.0
    %1188 = vmatprep.subr.mxu0 0.0
    %1189 = vmatpush1.msra.mxu0 0.0
    %1190 = vmatprep.subr.mxu0 0.0
    %1191 = vmatpush1.msra.mxu0 0.0
    %1192 = vmatprep.subr.mxu0 0.0
    %1193 = vmatpush1.msra.mxu0 0.0
    %1194 = vmatprep.subr.mxu0 0.0
    %1195 = vmatpush1.msra.mxu0 0.0
    %1196 = vmatprep.mubr.f32.mxu0 0.0
    %1197 = vmatmul.mubr.f32.gmra.mrb[0].mxu0 %v1012
    %v1198 = vpop.f32.mrb[0].mxu0
    %v1199 = vadd.f32 %v580, %v1198
    %v1200 = vpop.f32.mrb[0].mxu0
    %1201 = vdwg.mxu0
    %v1202 = vadd.f32 %v1128, %v916
    %v1203 = vadd.f32 %v1130, %v985
    %v1204 = vxor.u32 %v1202, 2147483648
    %v1205 = vxor.u32 %v1203, 2147483648
    %v1206 = vmul.f32 %v1204, 1.442695
    %v1207 = vpow.pop %v1206
    %v1208 = vmul.f32 %v1205, 1.442695
    %v1209 = vpow.pop %v1208
    %v1210 = vadd.f32 %v1207, 1.0
    %v1211 = vadd.f32 %v1209, 1.0
    %v1212 = vrcp.pop %v1210
    %v1213 = vmul.f32 1.0, %v1212
    %v1214 = vrcp.pop %v1211
    %v1215 = vmul.f32 1.0, %v1214
    %v1216 = vmul.f32 %v1213, %v987
    %v1217 = vadd.f32 %v1199, %v1216
    %v1218 = vtanh.pop %v1217
    %v1219 = vsub.f32 1.0, %v1215
    %v1220 = vmul.f32 %v1219, %v1218
    %v1221 = vmul.f32 %v1215, 0.0
    %v1222 = vadd.f32 %v1220, %v1221
    %1223 = vmatprep.subr.mxu0 %v585
    %1224 = vmatpush1.msra.mxu0 %v584
    %1225 = vmatprep.subr.mxu0 %v591
    %1226 = vmatpush1.msra.mxu0 %v590
    %1227 = vmatprep.subr.mxu0 %v597
    %1228 = vmatpush1.msra.mxu0 %v596
    %1229 = vmatprep.subr.mxu0 %v603
    %1230 = vmatpush1.msra.mxu0 %v602
    %1231 = vmatprep.subr.mxu0 %v609
    %1232 = vmatpush1.msra.mxu0 %v608
    %1233 = vmatprep.subr.mxu0 %v615
    %1234 = vmatpush1.msra.mxu0 %v614
    %1235 = vmatprep.subr.mxu0 %v621
    %1236 = vmatpush1.msra.mxu0 %v620
    %1237 = vmatprep.subr.mxu0 %v627
    %1238 = vmatpush1.msra.mxu0 %v626
    %1239 = vmatprep.subr.mxu0 %v633
    %1240 = vmatpush1.msra.mxu0 %v632
    %1241 = vmatprep.subr.mxu0 %v639
    %1242 = vmatpush1.msra.mxu0 %v638
    %1243 = vmatprep.subr.mxu0 %v645
    %1244 = vmatpush1.msra.mxu0 %v644
    %1245 = vmatprep.subr.mxu0 %v651
    %1246 = vmatpush1.msra.mxu0 %v650
    %1247 = vmatprep.subr.mxu0 %v657
    %1248 = vmatpush1.msra.mxu0 %v656
    %1249 = vmatprep.subr.mxu0 %v663
    %1250 = vmatpush1.msra.mxu0 %v662
    %1251 = vmatprep.subr.mxu0 %v669
    %1252 = vmatpush1.msra.mxu0 %v668
    %1253 = vmatprep.subr.mxu0 %v675
    %1254 = vmatpush1.msra.mxu0 %v674
    %1255 = vmatprep.subr.mxu0 %v681
    %1256 = vmatpush1.msra.mxu0 %v680
    %1257 = vmatprep.subr.mxu0 %v687
    %1258 = vmatpush1.msra.mxu0 %v686
    %1259 = vmatprep.subr.mxu0 %v693
    %1260 = vmatpush1.msra.mxu0 %v692
    %1261 = vmatprep.subr.mxu0 %v699
    %1262 = vmatpush1.msra.mxu0 %v698
    %1263 = vmatprep.subr.mxu0 %v705
    %1264 = vmatpush1.msra.mxu0 %v704
    %1265 = vmatprep.subr.mxu0 %v711
    %1266 = vmatpush1.msra.mxu0 %v710
    %1267 = vmatprep.subr.mxu0 %v717
    %1268 = vmatpush1.msra.mxu0 %v716
    %1269 = vmatprep.subr.mxu0 %v723
    %1270 = vmatpush1.msra.mxu0 %v722
    %1271 = vmatprep.subr.mxu0 %v729
    %1272 = vmatpush1.msra.mxu0 %v728
    %1273 = vmatprep.subr.mxu0 %v735
    %1274 = vmatpush1.msra.mxu0 %v734
    %1275 = vmatprep.subr.mxu0 %v741
    %1276 = vmatpush1.msra.mxu0 %v740
    %1277 = vmatprep.subr.mxu0 %v747
    %1278 = vmatpush1.msra.mxu0 %v746
    %1279 = vmatprep.subr.mxu0 %v753
    %1280 = vmatpush1.msra.mxu0 %v752
    %1281 = vmatprep.subr.mxu0 %v759
    %1282 = vmatpush1.msra.mxu0 %v758
    %1283 = vmatprep.subr.mxu0 %v765
    %1284 = vmatpush1.msra.mxu0 %v764
    %1285 = vmatprep.subr.mxu0 %v771
    %1286 = vmatpush1.msra.mxu0 %v770
    %1287 = vmatprep.mubr.f32.mxu0 %v1222
    %1288 = vmatmul.mubr.f32.gmra.mrb[0].mxu0 %v1012
    %v1289 = vpop.f32.mrb[0].mxu0
    %v1290 = vadd.f32 %v540, %v1289
    %v1291 = vpop.f32.mrb[0].mxu0
    %v1292 = vadd.f32 %v544, %v1291
    %1293 = vdwg.mxu0
    %1294 = vmatprep.subr.mxu0 %v587
    %1295 = vmatpush1.msra.mxu0 %v586
    %1296 = vmatprep.subr.mxu0 %v593
    %1297 = vmatpush1.msra.mxu0 %v592
    %1298 = vmatprep.subr.mxu0 %v599
    %1299 = vmatpush1.msra.mxu0 %v598
    %1300 = vmatprep.subr.mxu0 %v605
    %1301 = vmatpush1.msra.mxu0 %v604
    %1302 = vmatprep.subr.mxu0 %v611
    %1303 = vmatpush1.msra.mxu0 %v610
    %1304 = vmatprep.subr.mxu0 %v617
    %1305 = vmatpush1.msra.mxu0 %v616
    %1306 = vmatprep.subr.mxu0 %v623
    %1307 = vmatpush1.msra.mxu0 %v622
    %1308 = vmatprep.subr.mxu0 %v629
    %1309 = vmatpush1.msra.mxu0 %v628
    %1310 = vmatprep.subr.mxu0 %v635
    %1311 = vmatpush1.msra.mxu0 %v634
    %1312 = vmatprep.subr.mxu0 %v641
    %1313 = vmatpush1.msra.mxu0 %v640
    %1314 = vmatprep.subr.mxu0 %v647
    %1315 = vmatpush1.msra.mxu0 %v646
    %1316 = vmatprep.subr.mxu0 %v653
    %1317 = vmatpush1.msra.mxu0 %v652
    %1318 = vmatprep.subr.mxu0 %v659
    %1319 = vmatpush1.msra.mxu0 %v658
    %1320 = vmatprep.subr.mxu0 %v665
    %1321 = vmatpush1.msra.mxu0 %v664
    %1322 = vmatprep.subr.mxu0 %v671
    %1323 = vmatpush1.msra.mxu0 %v670
    %1324 = vmatprep.subr.mxu0 %v677
    %1325 = vmatpush1.msra.mxu0 %v676
    %1326 = vmatprep.subr.mxu0 %v683
    %1327 = vmatpush1.msra.mxu0 %v682
    %1328 = vmatprep.subr.mxu0 %v689
    %1329 = vmatpush1.msra.mxu0 %v688
    %1330 = vmatprep.subr.mxu0 %v695
    %1331 = vmatpush1.msra.mxu0 %v694
    %1332 = vmatprep.subr.mxu0 %v701
    %1333 = vmatpush1.msra.mxu0 %v700
    %1334 = vmatprep.subr.mxu0 %v707
    %1335 = vmatpush1.msra.mxu0 %v706
    %1336 = vmatprep.subr.mxu0 %v713
    %1337 = vmatpush1.msra.mxu0 %v712
    %1338 = vmatprep.subr.mxu0 %v719
    %1339 = vmatpush1.msra.mxu0 %v718
    %1340 = vmatprep.subr.mxu0 %v725
    %1341 = vmatpush1.msra.mxu0 %v724
    %1342 = vmatprep.subr.mxu0 %v731
    %1343 = vmatpush1.msra.mxu0 %v730
    %1344 = vmatprep.subr.mxu0 %v737
    %1345 = vmatpush1.msra.mxu0 %v736
    %1346 = vmatprep.subr.mxu0 %v743
    %1347 = vmatpush1.msra.mxu0 %v742
    %1348 = vmatprep.subr.mxu0 %v749
    %1349 = vmatpush1.msra.mxu0 %v748
    %1350 = vmatprep.subr.mxu0 %v755
    %1351 = vmatpush1.msra.mxu0 %v754
    %1352 = vmatprep.subr.mxu0 %v761
    %1353 = vmatpush1.msra.mxu0 %v760
    %1354 = vmatprep.subr.mxu0 %v767
    %1355 = vmatpush1.msra.mxu0 %v766
    %1356 = vmatprep.subr.mxu0 %v773
    %1357 = vmatpush1.msra.mxu0 %v772
    %1358 = vmatprep.mubr.f32.mxu0 %v1222
    %1359 = vmatmul.mubr.f32.gmra.mrb[0].mxu0 %v1012
    %v1360 = vpop.f32.mrb[0].mxu0
    %v1361 = vadd.f32 %v548, %v1360
    %v1362 = vpop.f32.mrb[0].mxu0
    %v1363 = vadd.f32 %v552, %v1362
    %1364 = vdwg.mxu0
    %1365 = vmatprep.subr.mxu0 %v589
    %1366 = vmatpush1.msra.mxu0 %v588
    %1367 = vmatprep.subr.mxu0 %v595
    %1368 = vmatpush1.msra.mxu0 %v594
    %1369 = vmatprep.subr.mxu0 %v601
    %1370 = vmatpush1.msra.mxu0 %v600
    %1371 = vmatprep.subr.mxu0 %v607
    %1372 = vmatpush1.msra.mxu0 %v606
    %1373 = vmatprep.subr.mxu0 %v613
    %1374 = vmatpush1.msra.mxu0 %v612
    %1375 = vmatprep.subr.mxu0 %v619
    %1376 = vmatpush1.msra.mxu0 %v618
    %1377 = vmatprep.subr.mxu0 %v625
    %1378 = vmatpush1.msra.mxu0 %v624
    %1379 = vmatprep.subr.mxu0 %v631
    %1380 = vmatpush1.msra.mxu0 %v630
    %1381 = vmatprep.subr.mxu0 %v637
    %1382 = vmatpush1.msra.mxu0 %v636
    %1383 = vmatprep.subr.mxu0 %v643
    %1384 = vmatpush1.msra.mxu0 %v642
    %1385 = vmatprep.subr.mxu0 %v649
    %1386 = vmatpush1.msra.mxu0 %v648
    %1387 = vmatprep.subr.mxu0 %v655
    %1388 = vmatpush1.msra.mxu0 %v654
    %1389 = vmatprep.subr.mxu0 %v661
    %1390 = vmatpush1.msra.mxu0 %v660
    %1391 = vmatprep.subr.mxu0 %v667
    %1392 = vmatpush1.msra.mxu0 %v666
    %1393 = vmatprep.subr.mxu0 %v673
    %1394 = vmatpush1.msra.mxu0 %v672
    %1395 = vmatprep.subr.mxu0 %v679
    %1396 = vmatpush1.msra.mxu0 %v678
    %1397 = vmatprep.subr.mxu0 %v685
    %1398 = vmatpush1.msra.mxu0 %v684
    %1399 = vmatprep.subr.mxu0 %v691
    %1400 = vmatpush1.msra.mxu0 %v690
    %1401 = vmatprep.subr.mxu0 %v697
    %1402 = vmatpush1.msra.mxu0 %v696
    %1403 = vmatprep.subr.mxu0 %v703
    %1404 = vmatpush1.msra.mxu0 %v702
    %1405 = vmatprep.subr.mxu0 %v709
    %1406 = vmatpush1.msra.mxu0 %v708
    %1407 = vmatprep.subr.mxu0 %v715
    %1408 = vmatpush1.msra.mxu0 %v714
    %1409 = vmatprep.subr.mxu0 %v721
    %1410 = vmatpush1.msra.mxu0 %v720
    %1411 = vmatprep.subr.mxu0 %v727
    %1412 = vmatpush1.msra.mxu0 %v726
    %1413 = vmatprep.subr.mxu0 %v733
    %1414 = vmatpush1.msra.mxu0 %v732
    %1415 = vmatprep.subr.mxu0 %v739
    %1416 = vmatpush1.msra.mxu0 %v738
    %1417 = vmatprep.subr.mxu0 %v745
    %1418 = vmatpush1.msra.mxu0 %v744
    %1419 = vmatprep.subr.mxu0 %v751
    %1420 = vmatpush1.msra.mxu0 %v750
    %1421 = vmatprep.subr.mxu0 %v757
    %1422 = vmatpush1.msra.mxu0 %v756
    %1423 = vmatprep.subr.mxu0 %v763
    %1424 = vmatpush1.msra.mxu0 %v762
    %1425 = vmatprep.subr.mxu0 %v769
    %1426 = vmatpush1.msra.mxu0 %v768
    %1427 = vmatprep.subr.mxu0 %v775
    %1428 = vmatpush1.msra.mxu0 %v774
    %1429 = vmatprep.mubr.f32.mxu0 %v1222
    %1430 = vmatmul.mubr.f32.gmra.mrb[0].mxu0 %v1012
    %v1431 = vpop.f32.mrb[0].mxu0
    %v1432 = vadd.f32 %v556, %v1431
    %v1433 = vpop.f32.mrb[0].mxu0
    %v1434 = vadd.f32 %v560, %v1433
    %1435 = vdwg.mxu0
    %s1436 = scalar_lea.vmem [#allocation3], 24
    %v1437 = vld [vmem:[%s1436] sm:$0xff]
    %v1438 = vld [vmem:[%s1436 + $0x8] sm:$0xff]
    %v1439 = vld [vmem:[%s1436 + $0x10] sm:$0xff]
    %v1440 = vadd.f32 %v1437, %v1290
    %v1441 = vadd.f32 %v1438, %v1292
    %v1442 = vxor.u32 %v1440, 2147483648
    %v1443 = vxor.u32 %v1441, 2147483648
    %v1444 = vmul.f32 %v1442, 1.442695
    %v1445 = vpow.pop %v1444
    %v1446 = vmul.f32 %v1443, 1.442695
    %v1447 = vpow.pop %v1446
    %v1448 = vadd.f32 %v1445, 1.0
    %v1449 = vadd.f32 %v1447, 1.0
    %v1450 = vrcp.pop %v1448
    %v1451 = vmul.f32 1.0, %v1450
    %v1452 = vrcp.pop %v1449
    %v1453 = vmul.f32 1.0, %v1452
    %v1454 = vmul.f32 %v1451, %v1361
    %v1455 = vadd.f32 %v1439, %v1454
    %v1456 = vtanh.pop %v1455
    %v1457 = vsub.f32 1.0, %v1453
    %v1458 = vmul.f32 %v1457, %v1456
    %v1459 = vmul.f32 %v1453, %v1012
    %v1460 = vadd.f32 %v1458, %v1459
    %1461 = vmatprep.subr.mxu0 %v1014
    %1462 = vmatpush1.msra.mxu0 %v1013
    %1463 = vmatprep.subr.mxu0 %v1017
    %1464 = vmatpush1.msra.mxu0 %v1016
    %1465 = vmatprep.subr.mxu0 %v1020
    %1466 = vmatpush1.msra.mxu0 %v1019
    %1467 = vmatprep.subr.mxu0 %v1023
    %1468 = vmatpush1.msra.mxu0 %v1022
    %1469 = vmatprep.subr.mxu0 %v1026
    %1470 = vmatpush1.msra.mxu0 %v1025
    %1471 = vmatprep.subr.mxu0 %v1029
    %1472 = vmatpush1.msra.mxu0 %v1028
    %1473 = vmatprep.subr.mxu0 %v1032
    %1474 = vmatpush1.msra.mxu0 %v1031
    %1475 = vmatprep.subr.mxu0 %v1035
    %1476 = vmatpush1.msra.mxu0 %v1034
    %1477 = vmatprep.subr.mxu0 %v1038
    %1478 = vmatpush1.msra.mxu0 %v1037
    %1479 = vmatprep.subr.mxu0 %v1041
    %1480 = vmatpush1.msra.mxu0 %v1040
    %1481 = vmatprep.subr.mxu0 %v1044
    %1482 = vmatpush1.msra.mxu0 %v1043
    %1483 = vmatprep.subr.mxu0 %v1047
    %1484 = vmatpush1.msra.mxu0 %v1046
    %1485 = vmatprep.subr.mxu0 %v1050
    %1486 = vmatpush1.msra.mxu0 %v1049
    %1487 = vmatprep.subr.mxu0 %v1053
    %1488 = vmatpush1.msra.mxu0 %v1052
    %1489 = vmatprep.subr.mxu0 %v1056
    %1490 = vmatpush1.msra.mxu0 %v1055
    %1491 = vmatprep.subr.mxu0 %v1059
    %1492 = vmatpush1.msra.mxu0 %v1058
    %1493 = vmatprep.subr.mxu0 0.0
    %1494 = vmatpush1.msra.mxu0 0.0
    %1495 = vmatprep.subr.mxu0 0.0
    %1496 = vmatpush1.msra.mxu0 0.0
    %1497 = vmatprep.subr.mxu0 0.0
    %1498 = vmatpush1.msra.mxu0 0.0
    %1499 = vmatprep.subr.mxu0 0.0
    %1500 = vmatpush1.msra.mxu0 0.0
    %1501 = vmatprep.subr.mxu0 0.0
    %1502 = vmatpush1.msra.mxu0 0.0
    %1503 = vmatprep.subr.mxu0 0.0
    %1504 = vmatpush1.msra.mxu0 0.0
    %1505 = vmatprep.subr.mxu0 0.0
    %1506 = vmatpush1.msra.mxu0 0.0
    %1507 = vmatprep.subr.mxu0 0.0
    %1508 = vmatpush1.msra.mxu0 0.0
    %1509 = vmatprep.subr.mxu0 0.0
    %1510 = vmatpush1.msra.mxu0 0.0
    %1511 = vmatprep.subr.mxu0 0.0
    %1512 = vmatpush1.msra.mxu0 0.0
    %1513 = vmatprep.subr.mxu0 0.0
    %1514 = vmatpush1.msra.mxu0 0.0
    %1515 = vmatprep.subr.mxu0 0.0
    %1516 = vmatpush1.msra.mxu0 0.0
    %1517 = vmatprep.subr.mxu0 0.0
    %1518 = vmatpush1.msra.mxu0 0.0
    %1519 = vmatprep.subr.mxu0 0.0
    %1520 = vmatpush1.msra.mxu0 0.0
    %1521 = vmatprep.subr.mxu0 0.0
    %1522 = vmatpush1.msra.mxu0 0.0
    %1523 = vmatprep.subr.mxu0 0.0
    %1524 = vmatpush1.msra.mxu0 0.0
    %1525 = vmatprep.mubr.f32.mxu0 0.0
    %1526 = vmatmul.mubr.f32.gmra.mrb[0].mxu0 %v1460
    %v1527 = vpop.f32.mrb[0].mxu0
    %v1528 = vadd.f32 %v572, %v1527
    %v1529 = vpop.f32.mrb[0].mxu0
    %v1530 = vadd.f32 %v576, %v1529
    %1531 = vdwg.mxu0
    %1532 = vmatprep.subr.mxu0 0.0
    %1533 = vmatpush1.msra.mxu0 %v1015
    %1534 = vmatprep.subr.mxu0 0.0
    %1535 = vmatpush1.msra.mxu0 %v1018
    %1536 = vmatprep.subr.mxu0 0.0
    %1537 = vmatpush1.msra.mxu0 %v1021
    %1538 = vmatprep.subr.mxu0 0.0
    %1539 = vmatpush1.msra.mxu0 %v1024
    %1540 = vmatprep.subr.mxu0 0.0
    %1541 = vmatpush1.msra.mxu0 %v1027
    %1542 = vmatprep.subr.mxu0 0.0
    %1543 = vmatpush1.msra.mxu0 %v1030
    %1544 = vmatprep.subr.mxu0 0.0
    %1545 = vmatpush1.msra.mxu0 %v1033
    %1546 = vmatprep.subr.mxu0 0.0
    %1547 = vmatpush1.msra.mxu0 %v1036
    %1548 = vmatprep.subr.mxu0 0.0
    %1549 = vmatpush1.msra.mxu0 %v1039
    %1550 = vmatprep.subr.mxu0 0.0
    %1551 = vmatpush1.msra.mxu0 %v1042
    %1552 = vmatprep.subr.mxu0 0.0
    %1553 = vmatpush1.msra.mxu0 %v1045
    %1554 = vmatprep.subr.mxu0 0.0
    %1555 = vmatpush1.msra.mxu0 %v1048
    %1556 = vmatprep.subr.mxu0 0.0
    %1557 = vmatpush1.msra.mxu0 %v1051
    %1558 = vmatprep.subr.mxu0 0.0
    %1559 = vmatpush1.msra.mxu0 %v1054
    %1560 = vmatprep.subr.mxu0 0.0
    %1561 = vmatpush1.msra.mxu0 %v1057
    %1562 = vmatprep.subr.mxu0 0.0
    %1563 = vmatpush1.msra.mxu0 %v1060
    %1564 = vmatprep.subr.mxu0 0.0
    %1565 = vmatpush1.msra.mxu0 0.0
    %1566 = vmatprep.subr.mxu0 0.0
    %1567 = vmatpush1.msra.mxu0 0.0
    %1568 = vmatprep.subr.mxu0 0.0
    %1569 = vmatpush1.msra.mxu0 0.0
    %1570 = vmatprep.subr.mxu0 0.0
    %1571 = vmatpush1.msra.mxu0 0.0
    %1572 = vmatprep.subr.mxu0 0.0
    %1573 = vmatpush1.msra.mxu0 0.0
    %1574 = vmatprep.subr.mxu0 0.0
    %1575 = vmatpush1.msra.mxu0 0.0
    %1576 = vmatprep.subr.mxu0 0.0
    %1577 = vmatpush1.msra.mxu0 0.0
    %1578 = vmatprep.subr.mxu0 0.0
    %1579 = vmatpush1.msra.mxu0 0.0
    %1580 = vmatprep.subr.mxu0 0.0
    %1581 = vmatpush1.msra.mxu0 0.0
    %1582 = vmatprep.subr.mxu0 0.0
    %1583 = vmatpush1.msra.mxu0 0.0
    %1584 = vmatprep.subr.mxu0 0.0
    %1585 = vmatpush1.msra.mxu0 0.0
    %1586 = vmatprep.subr.mxu0 0.0
    %1587 = vmatpush1.msra.mxu0 0.0
    %1588 = vmatprep.subr.mxu0 0.0
    %1589 = vmatpush1.msra.mxu0 0.0
    %1590 = vmatprep.subr.mxu0 0.0
    %1591 = vmatpush1.msra.mxu0 0.0
    %1592 = vmatprep.subr.mxu0 0.0
    %1593 = vmatpush1.msra.mxu0 0.0
    %1594 = vmatprep.subr.mxu0 0.0
    %1595 = vmatpush1.msra.mxu0 0.0
    %1596 = vmatprep.mubr.f32.mxu0 0.0
    %1597 = vmatmul.mubr.f32.gmra.mrb[0].mxu0 %v1460
    %v1598 = vpop.f32.mrb[0].mxu0
    %v1599 = vadd.f32 %v580, %v1598
    %v1600 = vpop.f32.mrb[0].mxu0
    %1601 = vdwg.mxu0
    %v1602 = vadd.f32 %v1528, %v1363
    %v1603 = vadd.f32 %v1530, %v1432
    %v1604 = vxor.u32 %v1602, 2147483648
    %v1605 = vxor.u32 %v1603, 2147483648
    %v1606 = vmul.f32 %v1604, 1.442695
    %v1607 = vpow.pop %v1606
    %v1608 = vmul.f32 %v1605, 1.442695
    %v1609 = vpow.pop %v1608
    %v1610 = vadd.f32 %v1607, 1.0
    %v1611 = vadd.f32 %v1609, 1.0
    %v1612 = vrcp.pop %v1610
    %v1613 = vmul.f32 1.0, %v1612
    %v1614 = vrcp.pop %v1611
    %v1615 = vmul.f32 1.0, %v1614
    %v1616 = vmul.f32 %v1613, %v1434
    %v1617 = vadd.f32 %v1599, %v1616
    %v1618 = vtanh.pop %v1617
    %v1619 = vsub.f32 1.0, %v1615
    %v1620 = vmul.f32 %v1619, %v1618
    %v1621 = vmul.f32 %v1615, %v1222
    %v1622 = vadd.f32 %v1620, %v1621
    %1623 = vmatprep.subr.mxu0 %v585
    %1624 = vmatpush1.msra.mxu0 %v584
    %1625 = vmatprep.subr.mxu0 %v591
    %1626 = vmatpush1.msra.mxu0 %v590
    %1627 = vmatprep.subr.mxu0 %v597
    %1628 = vmatpush1.msra.mxu0 %v596
    %1629 = vmatprep.subr.mxu0 %v603
    %1630 = vmatpush1.msra.mxu0 %v602
    %1631 = vmatprep.subr.mxu0 %v609
    %1632 = vmatpush1.msra.mxu0 %v608
    %1633 = vmatprep.subr.mxu0 %v615
    %1634 = vmatpush1.msra.mxu0 %v614
    %1635 = vmatprep.subr.mxu0 %v621
    %1636 = vmatpush1.msra.mxu0 %v620
    %1637 = vmatprep.subr.mxu0 %v627
    %1638 = vmatpush1.msra.mxu0 %v626
    %1639 = vmatprep.subr.mxu0 %v633
    %1640 = vmatpush1.msra.mxu0 %v632
    %1641 = vmatprep.subr.mxu0 %v639
    %1642 = vmatpush1.msra.mxu0 %v638
    %1643 = vmatprep.subr.mxu0 %v645
    %1644 = vmatpush1.msra.mxu0 %v644
    %1645 = vmatprep.subr.mxu0 %v651
    %1646 = vmatpush1.msra.mxu0 %v650
    %1647 = vmatprep.subr.mxu0 %v657
    %1648 = vmatpush1.msra.mxu0 %v656
    %1649 = vmatprep.subr.mxu0 %v663
    %1650 = vmatpush1.msra.mxu0 %v662
    %1651 = vmatprep.subr.mxu0 %v669
    %1652 = vmatpush1.msra.mxu0 %v668
    %1653 = vmatprep.subr.mxu0 %v675
    %1654 = vmatpush1.msra.mxu0 %v674
    %1655 = vmatprep.subr.mxu0 %v681
    %1656 = vmatpush1.msra.mxu0 %v680
    %1657 = vmatprep.subr.mxu0 %v687
    %1658 = vmatpush1.msra.mxu0 %v686
    %1659 = vmatprep.subr.mxu0 %v693
    %1660 = vmatpush1.msra.mxu0 %v692
    %1661 = vmatprep.subr.mxu0 %v699
    %1662 = vmatpush1.msra.mxu0 %v698
    %1663 = vmatprep.subr.mxu0 %v705
    %1664 = vmatpush1.msra.mxu0 %v704
    %1665 = vmatprep.subr.mxu0 %v711
    %1666 = vmatpush1.msra.mxu0 %v710
    %1667 = vmatprep.subr.mxu0 %v717
    %1668 = vmatpush1.msra.mxu0 %v716
    %1669 = vmatprep.subr.mxu0 %v723
    %1670 = vmatpush1.msra.mxu0 %v722
    %1671 = vmatprep.subr.mxu0 %v729
    %1672 = vmatpush1.msra.mxu0 %v728
    %1673 = vmatprep.subr.mxu0 %v735
    %1674 = vmatpush1.msra.mxu0 %v734
    %1675 = vmatprep.subr.mxu0 %v741
    %1676 = vmatpush1.msra.mxu0 %v740
    %1677 = vmatprep.subr.mxu0 %v747
    %1678 = vmatpush1.msra.mxu0 %v746
    %1679 = vmatprep.subr.mxu0 %v753
    %1680 = vmatpush1.msra.mxu0 %v752
    %1681 = vmatprep.subr.mxu0 %v759
    %1682 = vmatpush1.msra.mxu0 %v758
    %1683 = vmatprep.subr.mxu0 %v765
    %1684 = vmatpush1.msra.mxu0 %v764
    %1685 = vmatprep.subr.mxu0 %v771
    %1686 = vmatpush1.msra.mxu0 %v770
    %1687 = vmatprep.mubr.f32.mxu0 %v1622
    %1688 = vmatmul.mubr.f32.gmra.mrb[0].mxu0 %v1460
    %v1689 = vpop.f32.mrb[0].mxu0
    %v1690 = vadd.f32 %v540, %v1689
    %v1691 = vpop.f32.mrb[0].mxu0
    %v1692 = vadd.f32 %v544, %v1691
    %1693 = vdwg.mxu0
    %1694 = vmatprep.subr.mxu0 %v587
    %1695 = vmatpush1.msra.mxu0 %v586
    %1696 = vmatprep.subr.mxu0 %v593
    %1697 = vmatpush1.msra.mxu0 %v592
    %1698 = vmatprep.subr.mxu0 %v599
    %1699 = vmatpush1.msra.mxu0 %v598
    %1700 = vmatprep.subr.mxu0 %v605
    %1701 = vmatpush1.msra.mxu0 %v604
    %1702 = vmatprep.subr.mxu0 %v611
    %1703 = vmatpush1.msra.mxu0 %v610
    %1704 = vmatprep.subr.mxu0 %v617
    %1705 = vmatpush1.msra.mxu0 %v616
    %1706 = vmatprep.subr.mxu0 %v623
    %1707 = vmatpush1.msra.mxu0 %v622
    %1708 = vmatprep.subr.mxu0 %v629
    %1709 = vmatpush1.msra.mxu0 %v628
    %1710 = vmatprep.subr.mxu0 %v635
    %1711 = vmatpush1.msra.mxu0 %v634
    %1712 = vmatprep.subr.mxu0 %v641
    %1713 = vmatpush1.msra.mxu0 %v640
    %1714 = vmatprep.subr.mxu0 %v647
    %1715 = vmatpush1.msra.mxu0 %v646
    %1716 = vmatprep.subr.mxu0 %v653
    %1717 = vmatpush1.msra.mxu0 %v652
    %1718 = vmatprep.subr.mxu0 %v659
    %1719 = vmatpush1.msra.mxu0 %v658
    %1720 = vmatprep.subr.mxu0 %v665
    %1721 = vmatpush1.msra.mxu0 %v664
    %1722 = vmatprep.subr.mxu0 %v671
    %1723 = vmatpush1.msra.mxu0 %v670
    %1724 = vmatprep.subr.mxu0 %v677
    %1725 = vmatpush1.msra.mxu0 %v676
    %1726 = vmatprep.subr.mxu0 %v683
    %1727 = vmatpush1.msra.mxu0 %v682
    %1728 = vmatprep.subr.mxu0 %v689
    %1729 = vmatpush1.msra.mxu0 %v688
    %1730 = vmatprep.subr.mxu0 %v695
    %1731 = vmatpush1.msra.mxu0 %v694
    %1732 = vmatprep.subr.mxu0 %v701
    %1733 = vmatpush1.msra.mxu0 %v700
    %1734 = vmatprep.subr.mxu0 %v707
    %1735 = vmatpush1.msra.mxu0 %v706
    %1736 = vmatprep.subr.mxu0 %v713
    %1737 = vmatpush1.msra.mxu0 %v712
    %1738 = vmatprep.subr.mxu0 %v719
    %1739 = vmatpush1.msra.mxu0 %v718
    %1740 = vmatprep.subr.mxu0 %v725
    %1741 = vmatpush1.msra.mxu0 %v724
    %1742 = vmatprep.subr.mxu0 %v731
    %1743 = vmatpush1.msra.mxu0 %v730
    %1744 = vmatprep.subr.mxu0 %v737
    %1745 = vmatpush1.msra.mxu0 %v736
    %1746 = vmatprep.subr.mxu0 %v743
    %1747 = vmatpush1.msra.mxu0 %v742
    %1748 = vmatprep.subr.mxu0 %v749
    %1749 = vmatpush1.msra.mxu0 %v748
    %1750 = vmatprep.subr.mxu0 %v755
    %1751 = vmatpush1.msra.mxu0 %v754
    %1752 = vmatprep.subr.mxu0 %v761
    %1753 = vmatpush1.msra.mxu0 %v760
    %1754 = vmatprep.subr.mxu0 %v767
    %1755 = vmatpush1.msra.mxu0 %v766
    %1756 = vmatprep.subr.mxu0 %v773
    %1757 = vmatpush1.msra.mxu0 %v772
    %1758 = vmatprep.mubr.f32.mxu0 %v1622
    %1759 = vmatmul.mubr.f32.gmra.mrb[0].mxu0 %v1460
    %v1760 = vpop.f32.mrb[0].mxu0
    %v1761 = vadd.f32 %v548, %v1760
    %v1762 = vpop.f32.mrb[0].mxu0
    %v1763 = vadd.f32 %v552, %v1762
    %1764 = vdwg.mxu0
    %1765 = vmatprep.subr.mxu0 %v589
    %1766 = vmatpush1.msra.mxu0 %v588
    %1767 = vmatprep.subr.mxu0 %v595
    %1768 = vmatpush1.msra.mxu0 %v594
    %1769 = vmatprep.subr.mxu0 %v601
    %1770 = vmatpush1.msra.mxu0 %v600
    %1771 = vmatprep.subr.mxu0 %v607
    %1772 = vmatpush1.msra.mxu0 %v606
    %1773 = vmatprep.subr.mxu0 %v613
    %1774 = vmatpush1.msra.mxu0 %v612
    %1775 = vmatprep.subr.mxu0 %v619
    %1776 = vmatpush1.msra.mxu0 %v618
    %1777 = vmatprep.subr.mxu0 %v625
    %1778 = vmatpush1.msra.mxu0 %v624
    %1779 = vmatprep.subr.mxu0 %v631
    %1780 = vmatpush1.msra.mxu0 %v630
    %1781 = vmatprep.subr.mxu0 %v637
    %1782 = vmatpush1.msra.mxu0 %v636
    %1783 = vmatprep.subr.mxu0 %v643
    %1784 = vmatpush1.msra.mxu0 %v642
    %1785 = vmatprep.subr.mxu0 %v649
    %1786 = vmatpush1.msra.mxu0 %v648
    %1787 = vmatprep.subr.mxu0 %v655
    %1788 = vmatpush1.msra.mxu0 %v654
    %1789 = vmatprep.subr.mxu0 %v661
    %1790 = vmatpush1.msra.mxu0 %v660
    %1791 = vmatprep.subr.mxu0 %v667
    %1792 = vmatpush1.msra.mxu0 %v666
    %1793 = vmatprep.subr.mxu0 %v673
    %1794 = vmatpush1.msra.mxu0 %v672
    %1795 = vmatprep.subr.mxu0 %v679
    %1796 = vmatpush1.msra.mxu0 %v678
    %1797 = vmatprep.subr.mxu0 %v685
    %1798 = vmatpush1.msra.mxu0 %v684
    %1799 = vmatprep.subr.mxu0 %v691
    %1800 = vmatpush1.msra.mxu0 %v690
    %1801 = vmatprep.subr.mxu0 %v697
    %1802 = vmatpush1.msra.mxu0 %v696
    %1803 = vmatprep.subr.mxu0 %v703
    %1804 = vmatpush1.msra.mxu0 %v702
    %1805 = vmatprep.subr.mxu0 %v709
    %1806 = vmatpush1.msra.mxu0 %v708
    %1807 = vmatprep.subr.mxu0 %v715
    %1808 = vmatpush1.msra.mxu0 %v714
    %1809 = vmatprep.subr.mxu0 %v721
    %1810 = vmatpush1.msra.mxu0 %v720
    %1811 = vmatprep.subr.mxu0 %v727
    %1812 = vmatpush1.msra.mxu0 %v726
    %1813 = vmatprep.subr.mxu0 %v733
    %1814 = vmatpush1.msra.mxu0 %v732
    %1815 = vmatprep.subr.mxu0 %v739
    %1816 = vmatpush1.msra.mxu0 %v738
    %1817 = vmatprep.subr.mxu0 %v745
    %1818 = vmatpush1.msra.mxu0 %v744
    %1819 = vmatprep.subr.mxu0 %v751
    %1820 = vmatpush1.msra.mxu0 %v750
    %1821 = vmatprep.subr.mxu0 %v757
    %1822 = vmatpush1.msra.mxu0 %v756
    %1823 = vmatprep.subr.mxu0 %v763
    %1824 = vmatpush1.msra.mxu0 %v762
    %1825 = vmatprep.subr.mxu0 %v769
    %1826 = vmatpush1.msra.mxu0 %v768
    %1827 = vmatprep.subr.mxu0 %v775
    %1828 = vmatpush1.msra.mxu0 %v774
    %1829 = vmatprep.mubr.f32.mxu0 %v1622
    %1830 = vmatmul.mubr.f32.gmra.mrb[0].mxu0 %v1460
    %v1831 = vpop.f32.mrb[0].mxu0
    %v1832 = vadd.f32 %v556, %v1831
    %v1833 = vpop.f32.mrb[0].mxu0
    %v1834 = vadd.f32 %v560, %v1833
    %1835 = vdwg.mxu0
    %s1836 = scalar_lea.vmem [#allocation3], 48
    %v1837 = vld [vmem:[%s1836] sm:$0xff]
    %v1838 = vld [vmem:[%s1836 + $0x8] sm:$0xff]
    %v1839 = vld [vmem:[%s1836 + $0x10] sm:$0xff]
    %v1840 = vadd.f32 %v1837, %v1690
    %v1841 = vadd.f32 %v1838, %v1692
    %v1842 = vxor.u32 %v1840, 2147483648
    %v1843 = vxor.u32 %v1841, 2147483648
    %v1844 = vmul.f32 %v1842, 1.442695
    %v1845 = vpow.pop %v1844
    %v1846 = vmul.f32 %v1843, 1.442695
    %v1847 = vpow.pop %v1846
    %v1848 = vadd.f32 %v1845, 1.0
    %v1849 = vadd.f32 %v1847, 1.0
    %v1850 = vrcp.pop %v1848
    %v1851 = vmul.f32 1.0, %v1850
    %v1852 = vrcp.pop %v1849
    %v1853 = vmul.f32 1.0, %v1852
    %v1854 = vmul.f32 %v1851, %v1761
    %v1855 = vadd.f32 %v1839, %v1854
    %v1856 = vtanh.pop %v1855
    %v1857 = vsub.f32 1.0, %v1853
    %v1858 = vmul.f32 %v1857, %v1856
    %v1859 = vmul.f32 %v1853, %v1460
    %v1860 = vadd.f32 %v1858, %v1859
    %1861 = vmatprep.subr.mxu0 %v1014
    %1862 = vmatpush1.msra.mxu0 %v1013
    %1863 = vmatprep.subr.mxu0 %v1017
    %1864 = vmatpush1.msra.mxu0 %v1016
    %1865 = vmatprep.subr.mxu0 %v1020
    %1866 = vmatpush1.msra.mxu0 %v1019
    %1867 = vmatprep.subr.mxu0 %v1023
    %1868 = vmatpush1.msra.mxu0 %v1022
    %1869 = vmatprep.subr.mxu0 %v1026
    %1870 = vmatpush1.msra.mxu0 %v1025
    %1871 = vmatprep.subr.mxu0 %v1029
    %1872 = vmatpush1.msra.mxu0 %v1028
    %1873 = vmatprep.subr.mxu0 %v1032
    %1874 = vmatpush1.msra.mxu0 %v1031
    %1875 = vmatprep.subr.mxu0 %v1035
    %1876 = vmatpush1.msra.mxu0 %v1034
    %1877 = vmatprep.subr.mxu0 %v1038
    %1878 = vmatpush1.msra.mxu0 %v1037
    %1879 = vmatprep.subr.mxu0 %v1041
    %1880 = vmatpush1.msra.mxu0 %v1040
    %1881 = vmatprep.subr.mxu0 %v1044
    %1882 = vmatpush1.msra.mxu0 %v1043
    %1883 = vmatprep.subr.mxu0 %v1047
    %1884 = vmatpush1.msra.mxu0 %v1046
    %1885 = vmatprep.subr.mxu0 %v1050
    %1886 = vmatpush1.msra.mxu0 %v1049
    %1887 = vmatprep.subr.mxu0 %v1053
    %1888 = vmatpush1.msra.mxu0 %v1052
    %1889 = vmatprep.subr.mxu0 %v1056
    %1890 = vmatpush1.msra.mxu0 %v1055
    %1891 = vmatprep.subr.mxu0 %v1059
    %1892 = vmatpush1.msra.mxu0 %v1058
    %1893 = vmatprep.subr.mxu0 0.0
    %1894 = vmatpush1.msra.mxu0 0.0
    %1895 = vmatprep.subr.mxu0 0.0
    %1896 = vmatpush1.msra.mxu0 0.0
    %1897 = vmatprep.subr.mxu0 0.0
    %1898 = vmatpush1.msra.mxu0 0.0
    %1899 = vmatprep.subr.mxu0 0.0
    %1900 = vmatpush1.msra.mxu0 0.0
    %1901 = vmatprep.subr.mxu0 0.0
    %1902 = vmatpush1.msra.mxu0 0.0
    %1903 = vmatprep.subr.mxu0 0.0
    %1904 = vmatpush1.msra.mxu0 0.0
    %1905 = vmatprep.subr.mxu0 0.0
    %1906 = vmatpush1.msra.mxu0 0.0
    %1907 = vmatprep.subr.mxu0 0.0
    %1908 = vmatpush1.msra.mxu0 0.0
    %1909 = vmatprep.subr.mxu0 0.0
    %1910 = vmatpush1.msra.mxu0 0.0
    %1911 = vmatprep.subr.mxu0 0.0
    %1912 = vmatpush1.msra.mxu0 0.0
    %1913 = vmatprep.subr.mxu0 0.0
    %1914 = vmatpush1.msra.mxu0 0.0
    %1915 = vmatprep.subr.mxu0 0.0
    %1916 = vmatpush1.msra.mxu0 0.0
    %1917 = vmatprep.subr.mxu0 0.0
    %1918 = vmatpush1.msra.mxu0 0.0
    %1919 = vmatprep.subr.mxu0 0.0
    %1920 = vmatpush1.msra.mxu0 0.0
    %1921 = vmatprep.subr.mxu0 0.0
    %1922 = vmatpush1.msra.mxu0 0.0
    %1923 = vmatprep.subr.mxu0 0.0
    %1924 = vmatpush1.msra.mxu0 0.0
    %1925 = vmatprep.mubr.f32.mxu0 0.0
    %1926 = vmatmul.mubr.f32.gmra.mrb[0].mxu0 %v1860
    %v1927 = vpop.f32.mrb[0].mxu0
    %v1928 = vadd.f32 %v572, %v1927
    %v1929 = vpop.f32.mrb[0].mxu0
    %v1930 = vadd.f32 %v576, %v1929
    %1931 = vdwg.mxu0
    %1932 = vmatprep.subr.mxu0 0.0
    %1933 = vmatpush1.msra.mxu0 %v1015
    %1934 = vmatprep.subr.mxu0 0.0
    %1935 = vmatpush1.msra.mxu0 %v1018
    %1936 = vmatprep.subr.mxu0 0.0
    %1937 = vmatpush1.msra.mxu0 %v1021
    %1938 = vmatprep.subr.mxu0 0.0
    %1939 = vmatpush1.msra.mxu0 %v1024
    %1940 = vmatprep.subr.mxu0 0.0
    %1941 = vmatpush1.msra.mxu0 %v1027
    %1942 = vmatprep.subr.mxu0 0.0
    %1943 = vmatpush1.msra.mxu0 %v1030
    %1944 = vmatprep.subr.mxu0 0.0
    %1945 = vmatpush1.msra.mxu0 %v1033
    %1946 = vmatprep.subr.mxu0 0.0
    %1947 = vmatpush1.msra.mxu0 %v1036
    %1948 = vmatprep.subr.mxu0 0.0
    %1949 = vmatpush1.msra.mxu0 %v1039
    %1950 = vmatprep.subr.mxu0 0.0
    %1951 = vmatpush1.msra.mxu0 %v1042
    %1952 = vmatprep.subr.mxu0 0.0
    %1953 = vmatpush1.msra.mxu0 %v1045
    %1954 = vmatprep.subr.mxu0 0.0
    %1955 = vmatpush1.msra.mxu0 %v1048
    %1956 = vmatprep.subr.mxu0 0.0
    %1957 = vmatpush1.msra.mxu0 %v1051
    %1958 = vmatprep.subr.mxu0 0.0
    %1959 = vmatpush1.msra.mxu0 %v1054
    %1960 = vmatprep.subr.mxu0 0.0
    %1961 = vmatpush1.msra.mxu0 %v1057
    %1962 = vmatprep.subr.mxu0 0.0
    %1963 = vmatpush1.msra.mxu0 %v1060
    %1964 = vmatprep.subr.mxu0 0.0
    %1965 = vmatpush1.msra.mxu0 0.0
    %1966 = vmatprep.subr.mxu0 0.0
    %1967 = vmatpush1.msra.mxu0 0.0
    %1968 = vmatprep.subr.mxu0 0.0
    %1969 = vmatpush1.msra.mxu0 0.0
    %1970 = vmatprep.subr.mxu0 0.0
    %1971 = vmatpush1.msra.mxu0 0.0
    %1972 = vmatprep.subr.mxu0 0.0
    %1973 = vmatpush1.msra.mxu0 0.0
    %1974 = vmatprep.subr.mxu0 0.0
    %1975 = vmatpush1.msra.mxu0 0.0
    %1976 = vmatprep.subr.mxu0 0.0
    %1977 = vmatpush1.msra.mxu0 0.0
    %1978 = vmatprep.subr.mxu0 0.0
    %1979 = vmatpush1.msra.mxu0 0.0
    %1980 = vmatprep.subr.mxu0 0.0
    %1981 = vmatpush1.msra.mxu0 0.0
    %1982 = vmatprep.subr.mxu0 0.0
    %1983 = vmatpush1.msra.mxu0 0.0
    %1984 = vmatprep.subr.mxu0 0.0
    %1985 = vmatpush1.msra.mxu0 0.0
    %1986 = vmatprep.subr.mxu0 0.0
    %1987 = vmatpush1.msra.mxu0 0.0
    %1988 = vmatprep.subr.mxu0 0.0
    %1989 = vmatpush1.msra.mxu0 0.0
    %1990 = vmatprep.subr.mxu0 0.0
    %1991 = vmatpush1.msra.mxu0 0.0
    %1992 = vmatprep.subr.mxu0 0.0
    %1993 = vmatpush1.msra.mxu0 0.0
    %1994 = vmatprep.subr.mxu0 0.0
    %1995 = vmatpush1.msra.mxu0 0.0
    %1996 = vmatprep.mubr.f32.mxu0 0.0
    %1997 = vmatmul.mubr.f32.gmra.mrb[0].mxu0 %v1860
    %v1998 = vpop.f32.mrb[0].mxu0
    %v1999 = vadd.f32 %v580, %v1998
    %v2000 = vpop.f32.mrb[0].mxu0
    %2001 = vdwg.mxu0
    %v2002 = vadd.f32 %v1928, %v1763
    %v2003 = vadd.f32 %v1930, %v1832
    %v2004 = vxor.u32 %v2002, 2147483648
    %v2005 = vxor.u32 %v2003, 2147483648
    %v2006 = vmul.f32 %v2004, 1.442695
    %v2007 = vpow.pop %v2006
    %v2008 = vmul.f32 %v2005, 1.442695
    %v2009 = vpow.pop %v2008
    %v2010 = vadd.f32 %v2007, 1.0
    %v2011 = vadd.f32 %v2009, 1.0
    %v2012 = vrcp.pop %v2010
    %v2013 = vmul.f32 1.0, %v2012
    %v2014 = vrcp.pop %v2011
    %v2015 = vmul.f32 1.0, %v2014
    %v2016 = vmul.f32 %v2013, %v1834
    %v2017 = vadd.f32 %v1999, %v2016
    %v2018 = vtanh.pop %v2017
    %v2019 = vsub.f32 1.0, %v2015
    %v2020 = vmul.f32 %v2019, %v2018
    %v2021 = vmul.f32 %v2015, %v1622
    %v2022 = vadd.f32 %v2020, %v2021
    %2023 = vmatprep.subr.mxu0 %v585
    %2024 = vmatpush1.msra.mxu0 %v584
    %2025 = vmatprep.subr.mxu0 %v591
    %2026 = vmatpush1.msra.mxu0 %v590
    %2027 = vmatprep.subr.mxu0 %v597
    %2028 = vmatpush1.msra.mxu0 %v596
    %2029 = vmatprep.subr.mxu0 %v603
    %2030 = vmatpush1.msra.mxu0 %v602
    %2031 = vmatprep.subr.mxu0 %v609
    %2032 = vmatpush1.msra.mxu0 %v608
    %2033 = vmatprep.subr.mxu0 %v615
    %2034 = vmatpush1.msra.mxu0 %v614
    %2035 = vmatprep.subr.mxu0 %v621
    %2036 = vmatpush1.msra.mxu0 %v620
    %2037 = vmatprep.subr.mxu0 %v627
    %2038 = vmatpush1.msra.mxu0 %v626
    %2039 = vmatprep.subr.mxu0 %v633
    %2040 = vmatpush1.msra.mxu0 %v632
    %2041 = vmatprep.subr.mxu0 %v639
    %2042 = vmatpush1.msra.mxu0 %v638
    %2043 = vmatprep.subr.mxu0 %v645
    %2044 = vmatpush1.msra.mxu0 %v644
    %2045 = vmatprep.subr.mxu0 %v651
    %2046 = vmatpush1.msra.mxu0 %v650
    %2047 = vmatprep.subr.mxu0 %v657
    %2048 = vmatpush1.msra.mxu0 %v656
    %2049 = vmatprep.subr.mxu0 %v663
    %2050 = vmatpush1.msra.mxu0 %v662
    %2051 = vmatprep.subr.mxu0 %v669
    %2052 = vmatpush1.msra.mxu0 %v668
    %2053 = vmatprep.subr.mxu0 %v675
    %2054 = vmatpush1.msra.mxu0 %v674
    %2055 = vmatprep.subr.mxu0 %v681
    %2056 = vmatpush1.msra.mxu0 %v680
    %2057 = vmatprep.subr.mxu0 %v687
    %2058 = vmatpush1.msra.mxu0 %v686
    %2059 = vmatprep.subr.mxu0 %v693
    %2060 = vmatpush1.msra.mxu0 %v692
    %2061 = vmatprep.subr.mxu0 %v699
    %2062 = vmatpush1.msra.mxu0 %v698
    %2063 = vmatprep.subr.mxu0 %v705
    %2064 = vmatpush1.msra.mxu0 %v704
    %2065 = vmatprep.subr.mxu0 %v711
    %2066 = vmatpush1.msra.mxu0 %v710
    %2067 = vmatprep.subr.mxu0 %v717
    %2068 = vmatpush1.msra.mxu0 %v716
    %2069 = vmatprep.subr.mxu0 %v723
    %2070 = vmatpush1.msra.mxu0 %v722
    %2071 = vmatprep.subr.mxu0 %v729
    %2072 = vmatpush1.msra.mxu0 %v728
    %2073 = vmatprep.subr.mxu0 %v735
    %2074 = vmatpush1.msra.mxu0 %v734
    %2075 = vmatprep.subr.mxu0 %v741
    %2076 = vmatpush1.msra.mxu0 %v740
    %2077 = vmatprep.subr.mxu0 %v747
    %2078 = vmatpush1.msra.mxu0 %v746
    %2079 = vmatprep.subr.mxu0 %v753
    %2080 = vmatpush1.msra.mxu0 %v752
    %2081 = vmatprep.subr.mxu0 %v759
    %2082 = vmatpush1.msra.mxu0 %v758
    %2083 = vmatprep.subr.mxu0 %v765
    %2084 = vmatpush1.msra.mxu0 %v764
    %2085 = vmatprep.subr.mxu0 %v771
    %2086 = vmatpush1.msra.mxu0 %v770
    %2087 = vmatprep.mubr.f32.mxu0 %v2022
    %2088 = vmatmul.mubr.f32.gmra.mrb[0].mxu0 %v1860
    %v2089 = vpop.f32.mrb[0].mxu0
    %v2090 = vadd.f32 %v540, %v2089
    %v2091 = vpop.f32.mrb[0].mxu0
    %v2092 = vadd.f32 %v544, %v2091
    %2093 = vdwg.mxu0
    %2094 = vmatprep.subr.mxu0 %v587
    %2095 = vmatpush1.msra.mxu0 %v586
    %2096 = vmatprep.subr.mxu0 %v593
    %2097 = vmatpush1.msra.mxu0 %v592
    %2098 = vmatprep.subr.mxu0 %v599
    %2099 = vmatpush1.msra.mxu0 %v598
    %2100 = vmatprep.subr.mxu0 %v605
    %2101 = vmatpush1.msra.mxu0 %v604
    %2102 = vmatprep.subr.mxu0 %v611
    %2103 = vmatpush1.msra.mxu0 %v610
    %2104 = vmatprep.subr.mxu0 %v617
    %2105 = vmatpush1.msra.mxu0 %v616
    %2106 = vmatprep.subr.mxu0 %v623
    %2107 = vmatpush1.msra.mxu0 %v622
    %2108 = vmatprep.subr.mxu0 %v629
    %2109 = vmatpush1.msra.mxu0 %v628
    %2110 = vmatprep.subr.mxu0 %v635
    %2111 = vmatpush1.msra.mxu0 %v634
    %2112 = vmatprep.subr.mxu0 %v641
    %2113 = vmatpush1.msra.mxu0 %v640
    %2114 = vmatprep.subr.mxu0 %v647
    %2115 = vmatpush1.msra.mxu0 %v646
    %2116 = vmatprep.subr.mxu0 %v653
    %2117 = vmatpush1.msra.mxu0 %v652
    %2118 = vmatprep.subr.mxu0 %v659
    %2119 = vmatpush1.msra.mxu0 %v658
    %2120 = vmatprep.subr.mxu0 %v665
    %2121 = vmatpush1.msra.mxu0 %v664
    %2122 = vmatprep.subr.mxu0 %v671
    %2123 = vmatpush1.msra.mxu0 %v670
    %2124 = vmatprep.subr.mxu0 %v677
    %2125 = vmatpush1.msra.mxu0 %v676
    %2126 = vmatprep.subr.mxu0 %v683
    %2127 = vmatpush1.msra.mxu0 %v682
    %2128 = vmatprep.subr.mxu0 %v689
    %2129 = vmatpush1.msra.mxu0 %v688
    %2130 = vmatprep.subr.mxu0 %v695
    %2131 = vmatpush1.msra.mxu0 %v694
    %2132 = vmatprep.subr.mxu0 %v701
    %2133 = vmatpush1.msra.mxu0 %v700
    %2134 = vmatprep.subr.mxu0 %v707
    %2135 = vmatpush1.msra.mxu0 %v706
    %2136 = vmatprep.subr.mxu0 %v713
    %2137 = vmatpush1.msra.mxu0 %v712
    %2138 = vmatprep.subr.mxu0 %v719
    %2139 = vmatpush1.msra.mxu0 %v718
    %2140 = vmatprep.subr.mxu0 %v725
    %2141 = vmatpush1.msra.mxu0 %v724
    %2142 = vmatprep.subr.mxu0 %v731
    %2143 = vmatpush1.msra.mxu0 %v730
    %2144 = vmatprep.subr.mxu0 %v737
    %2145 = vmatpush1.msra.mxu0 %v736
    %2146 = vmatprep.subr.mxu0 %v743
    %2147 = vmatpush1.msra.mxu0 %v742
    %2148 = vmatprep.subr.mxu0 %v749
    %2149 = vmatpush1.msra.mxu0 %v748
    %2150 = vmatprep.subr.mxu0 %v755
    %2151 = vmatpush1.msra.mxu0 %v754
    %2152 = vmatprep.subr.mxu0 %v761
    %2153 = vmatpush1.msra.mxu0 %v760
    %2154 = vmatprep.subr.mxu0 %v767
    %2155 = vmatpush1.msra.mxu0 %v766
    %2156 = vmatprep.subr.mxu0 %v773
    %2157 = vmatpush1.msra.mxu0 %v772
    %2158 = vmatprep.mubr.f32.mxu0 %v2022
    %2159 = vmatmul.mubr.f32.gmra.mrb[0].mxu0 %v1860
    %v2160 = vpop.f32.mrb[0].mxu0
    %v2161 = vadd.f32 %v548, %v2160
    %v2162 = vpop.f32.mrb[0].mxu0
    %v2163 = vadd.f32 %v552, %v2162
    %2164 = vdwg.mxu0
    %2165 = vmatprep.subr.mxu0 %v589
    %2166 = vmatpush1.msra.mxu0 %v588
    %2167 = vmatprep.subr.mxu0 %v595
    %2168 = vmatpush1.msra.mxu0 %v594
    %2169 = vmatprep.subr.mxu0 %v601
    %2170 = vmatpush1.msra.mxu0 %v600
    %2171 = vmatprep.subr.mxu0 %v607
    %2172 = vmatpush1.msra.mxu0 %v606
    %2173 = vmatprep.subr.mxu0 %v613
    %2174 = vmatpush1.msra.mxu0 %v612
    %2175 = vmatprep.subr.mxu0 %v619
    %2176 = vmatpush1.msra.mxu0 %v618
    %2177 = vmatprep.subr.mxu0 %v625
    %2178 = vmatpush1.msra.mxu0 %v624
    %2179 = vmatprep.subr.mxu0 %v631
    %2180 = vmatpush1.msra.mxu0 %v630
    %2181 = vmatprep.subr.mxu0 %v637
    %2182 = vmatpush1.msra.mxu0 %v636
    %2183 = vmatprep.subr.mxu0 %v643
    %2184 = vmatpush1.msra.mxu0 %v642
    %2185 = vmatprep.subr.mxu0 %v649
    %2186 = vmatpush1.msra.mxu0 %v648
    %2187 = vmatprep.subr.mxu0 %v655
    %2188 = vmatpush1.msra.mxu0 %v654
    %2189 = vmatprep.subr.mxu0 %v661
    %2190 = vmatpush1.msra.mxu0 %v660
    %2191 = vmatprep.subr.mxu0 %v667
    %2192 = vmatpush1.msra.mxu0 %v666
    %2193 = vmatprep.subr.mxu0 %v673
    %2194 = vmatpush1.msra.mxu0 %v672
    %2195 = vmatprep.subr.mxu0 %v679
    %2196 = vmatpush1.msra.mxu0 %v678
    %2197 = vmatprep.subr.mxu0 %v685
    %2198 = vmatpush1.msra.mxu0 %v684
    %2199 = vmatprep.subr.mxu0 %v691
    %2200 = vmatpush1.msra.mxu0 %v690
    %2201 = vmatprep.subr.mxu0 %v697
    %2202 = vmatpush1.msra.mxu0 %v696
    %2203 = vmatprep.subr.mxu0 %v703
    %2204 = vmatpush1.msra.mxu0 %v702
    %2205 = vmatprep.subr.mxu0 %v709
    %2206 = vmatpush1.msra.mxu0 %v708
    %2207 = vmatprep.subr.mxu0 %v715
    %2208 = vmatpush1.msra.mxu0 %v714
    %2209 = vmatprep.subr.mxu0 %v721
    %2210 = vmatpush1.msra.mxu0 %v720
    %2211 = vmatprep.subr.mxu0 %v727
    %2212 = vmatpush1.msra.mxu0 %v726
    %2213 = vmatprep.subr.mxu0 %v733
    %2214 = vmatpush1.msra.mxu0 %v732
    %2215 = vmatprep.subr.mxu0 %v739
    %2216 = vmatpush1.msra.mxu0 %v738
    %2217 = vmatprep.subr.mxu0 %v745
    %2218 = vmatpush1.msra.mxu0 %v744
    %2219 = vmatprep.subr.mxu0 %v751
    %2220 = vmatpush1.msra.mxu0 %v750
    %2221 = vmatprep.subr.mxu0 %v757
    %2222 = vmatpush1.msra.mxu0 %v756
    %2223 = vmatprep.subr.mxu0 %v763
    %2224 = vmatpush1.msra.mxu0 %v762
    %2225 = vmatprep.subr.mxu0 %v769
    %2226 = vmatpush1.msra.mxu0 %v768
    %2227 = vmatprep.subr.mxu0 %v775
    %2228 = vmatpush1.msra.mxu0 %v774
    %2229 = vmatprep.mubr.f32.mxu0 %v2022
    %2230 = vmatmul.mubr.f32.gmra.mrb[0].mxu0 %v1860
    %v2231 = vpop.f32.mrb[0].mxu0
    %v2232 = vadd.f32 %v556, %v2231
    %v2233 = vpop.f32.mrb[0].mxu0
    %v2234 = vadd.f32 %v560, %v2233
    %2235 = vdwg.mxu0
    %s2236 = scalar_lea.vmem [#allocation3], 72
    %v2237 = vld [vmem:[%s2236] sm:$0xff]
    %v2238 = vld [vmem:[%s2236 + $0x8] sm:$0xff]
    %v2239 = vld [vmem:[%s2236 + $0x10] sm:$0xff]
    %v2240 = vadd.f32 %v2237, %v2090
    %v2241 = vadd.f32 %v2238, %v2092
    %v2242 = vxor.u32 %v2240, 2147483648
    %v2243 = vxor.u32 %v2241, 2147483648
    %v2244 = vmul.f32 %v2242, 1.442695
    %v2245 = vpow.pop %v2244
    %v2246 = vmul.f32 %v2243, 1.442695
    %v2247 = vpow.pop %v2246
    %v2248 = vadd.f32 %v2245, 1.0
    %v2249 = vadd.f32 %v2247, 1.0
    %v2250 = vrcp.pop %v2248
    %v2251 = vmul.f32 1.0, %v2250
    %v2252 = vrcp.pop %v2249
    %v2253 = vmul.f32 1.0, %v2252
    %v2254 = vmul.f32 %v2251, %v2161
    %v2255 = vadd.f32 %v2239, %v2254
    %v2256 = vtanh.pop %v2255
    %v2257 = vsub.f32 1.0, %v2253
    %v2258 = vmul.f32 %v2257, %v2256
    %v2259 = vmul.f32 %v2253, %v1860
    %v2260 = vadd.f32 %v2258, %v2259
    %2261 = vmatprep.subr.mxu0 %v1014
    %2262 = vmatpush1.msra.mxu0 %v1013
    %2263 = vmatprep.subr.mxu0 %v1017
    %2264 = vmatpush1.msra.mxu0 %v1016
    %2265 = vmatprep.subr.mxu0 %v1020
    %2266 = vmatpush1.msra.mxu0 %v1019
    %2267 = vmatprep.subr.mxu0 %v1023
    %2268 = vmatpush1.msra.mxu0 %v1022
    %2269 = vmatprep.subr.mxu0 %v1026
    %2270 = vmatpush1.msra.mxu0 %v1025
    %2271 = vmatprep.subr.mxu0 %v1029
    %2272 = vmatpush1.msra.mxu0 %v1028
    %2273 = vmatprep.subr.mxu0 %v1032
    %2274 = vmatpush1.msra.mxu0 %v1031
    %2275 = vmatprep.subr.mxu0 %v1035
    %2276 = vmatpush1.msra.mxu0 %v1034
    %2277 = vmatprep.subr.mxu0 %v1038
    %2278 = vmatpush1.msra.mxu0 %v1037
    %2279 = vmatprep.subr.mxu0 %v1041
    %2280 = vmatpush1.msra.mxu0 %v1040
    %2281 = vmatprep.subr.mxu0 %v1044
    %2282 = vmatpush1.msra.mxu0 %v1043
    %2283 = vmatprep.subr.mxu0 %v1047
    %2284 = vmatpush1.msra.mxu0 %v1046
    %2285 = vmatprep.subr.mxu0 %v1050
    %2286 = vmatpush1.msra.mxu0 %v1049
    %2287 = vmatprep.subr.mxu0 %v1053
    %2288 = vmatpush1.msra.mxu0 %v1052
    %2289 = vmatprep.subr.mxu0 %v1056
    %2290 = vmatpush1.msra.mxu0 %v1055
    %2291 = vmatprep.subr.mxu0 %v1059
    %2292 = vmatpush1.msra.mxu0 %v1058
    %2293 = vmatprep.subr.mxu0 0.0
    %2294 = vmatpush1.msra.mxu0 0.0
    %2295 = vmatprep.subr.mxu0 0.0
    %2296 = vmatpush1.msra.mxu0 0.0
    %2297 = vmatprep.subr.mxu0 0.0
    %2298 = vmatpush1.msra.mxu0 0.0
    %2299 = vmatprep.subr.mxu0 0.0
    %2300 = vmatpush1.msra.mxu0 0.0
    %2301 = vmatprep.subr.mxu0 0.0
    %2302 = vmatpush1.msra.mxu0 0.0
    %2303 = vmatprep.subr.mxu0 0.0
    %2304 = vmatpush1.msra.mxu0 0.0
    %2305 = vmatprep.subr.mxu0 0.0
    %2306 = vmatpush1.msra.mxu0 0.0
    %2307 = vmatprep.subr.mxu0 0.0
    %2308 = vmatpush1.msra.mxu0 0.0
    %2309 = vmatprep.subr.mxu0 0.0
    %2310 = vmatpush1.msra.mxu0 0.0
    %2311 = vmatprep.subr.mxu0 0.0
    %2312 = vmatpush1.msra.mxu0 0.0
    %2313 = vmatprep.subr.mxu0 0.0
    %2314 = vmatpush1.msra.mxu0 0.0
    %2315 = vmatprep.subr.mxu0 0.0
    %2316 = vmatpush1.msra.mxu0 0.0
    %2317 = vmatprep.subr.mxu0 0.0
    %2318 = vmatpush1.msra.mxu0 0.0
    %2319 = vmatprep.subr.mxu0 0.0
    %2320 = vmatpush1.msra.mxu0 0.0
    %2321 = vmatprep.subr.mxu0 0.0
    %2322 = vmatpush1.msra.mxu0 0.0
    %2323 = vmatprep.subr.mxu0 0.0
    %2324 = vmatpush1.msra.mxu0 0.0
    %2325 = vmatprep.mubr.f32.mxu0 0.0
    %2326 = vmatmul.mubr.f32.gmra.mrb[0].mxu0 %v2260
    %v2327 = vpop.f32.mrb[0].mxu0
    %v2328 = vadd.f32 %v572, %v2327
    %v2329 = vpop.f32.mrb[0].mxu0
    %v2330 = vadd.f32 %v576, %v2329
    %2331 = vdwg.mxu0
    %2332 = vmatprep.subr.mxu0 0.0
    %2333 = vmatpush1.msra.mxu0 %v1015
    %2334 = vmatprep.subr.mxu0 0.0
    %2335 = vmatpush1.msra.mxu0 %v1018
    %2336 = vmatprep.subr.mxu0 0.0
    %2337 = vmatpush1.msra.mxu0 %v1021
    %2338 = vmatprep.subr.mxu0 0.0
    %2339 = vmatpush1.msra.mxu0 %v1024
    %2340 = vmatprep.subr.mxu0 0.0
    %2341 = vmatpush1.msra.mxu0 %v1027
    %2342 = vmatprep.subr.mxu0 0.0
    %2343 = vmatpush1.msra.mxu0 %v1030
    %2344 = vmatprep.subr.mxu0 0.0
    %2345 = vmatpush1.msra.mxu0 %v1033
    %2346 = vmatprep.subr.mxu0 0.0
    %2347 = vmatpush1.msra.mxu0 %v1036
    %2348 = vmatprep.subr.mxu0 0.0
    %2349 = vmatpush1.msra.mxu0 %v1039
    %2350 = vmatprep.subr.mxu0 0.0
    %2351 = vmatpush1.msra.mxu0 %v1042
    %2352 = vmatprep.subr.mxu0 0.0
    %2353 = vmatpush1.msra.mxu0 %v1045
    %2354 = vmatprep.subr.mxu0 0.0
    %2355 = vmatpush1.msra.mxu0 %v1048
    %2356 = vmatprep.subr.mxu0 0.0
    %2357 = vmatpush1.msra.mxu0 %v1051
    %2358 = vmatprep.subr.mxu0 0.0
    %2359 = vmatpush1.msra.mxu0 %v1054
    %2360 = vmatprep.subr.mxu0 0.0
    %2361 = vmatpush1.msra.mxu0 %v1057
    %2362 = vmatprep.subr.mxu0 0.0
    %2363 = vmatpush1.msra.mxu0 %v1060
    %2364 = vmatprep.subr.mxu0 0.0
    %2365 = vmatpush1.msra.mxu0 0.0
    %2366 = vmatprep.subr.mxu0 0.0
    %2367 = vmatpush1.msra.mxu0 0.0
    %2368 = vmatprep.subr.mxu0 0.0
    %2369 = vmatpush1.msra.mxu0 0.0
    %2370 = vmatprep.subr.mxu0 0.0
    %2371 = vmatpush1.msra.mxu0 0.0
    %2372 = vmatprep.subr.mxu0 0.0
    %2373 = vmatpush1.msra.mxu0 0.0
    %2374 = vmatprep.subr.mxu0 0.0
    %2375 = vmatpush1.msra.mxu0 0.0
    %2376 = vmatprep.subr.mxu0 0.0
    %2377 = vmatpush1.msra.mxu0 0.0
    %2378 = vmatprep.subr.mxu0 0.0
    %2379 = vmatpush1.msra.mxu0 0.0
    %2380 = vmatprep.subr.mxu0 0.0
    %2381 = vmatpush1.msra.mxu0 0.0
    %2382 = vmatprep.subr.mxu0 0.0
    %2383 = vmatpush1.msra.mxu0 0.0
    %2384 = vmatprep.subr.mxu0 0.0
    %2385 = vmatpush1.msra.mxu0 0.0
    %2386 = vmatprep.subr.mxu0 0.0
    %2387 = vmatpush1.msra.mxu0 0.0
    %2388 = vmatprep.subr.mxu0 0.0
    %2389 = vmatpush1.msra.mxu0 0.0
    %2390 = vmatprep.subr.mxu0 0.0
    %2391 = vmatpush1.msra.mxu0 0.0
    %2392 = vmatprep.subr.mxu0 0.0
    %2393 = vmatpush1.msra.mxu0 0.0
    %2394 = vmatprep.subr.mxu0 0.0
    %2395 = vmatpush1.msra.mxu0 0.0
    %2396 = vmatprep.mubr.f32.mxu0 0.0
    %2397 = vmatmul.mubr.f32.gmra.mrb[0].mxu0 %v2260
    %v2398 = vpop.f32.mrb[0].mxu0
    %v2399 = vadd.f32 %v580, %v2398
    %v2400 = vpop.f32.mrb[0].mxu0
    %2401 = vdwg.mxu0
    %v2402 = vadd.f32 %v2328, %v2163
    %v2403 = vadd.f32 %v2330, %v2232
    %v2404 = vxor.u32 %v2402, 2147483648
    %v2405 = vxor.u32 %v2403, 2147483648
    %v2406 = vmul.f32 %v2404, 1.442695
    %v2407 = vpow.pop %v2406
    %v2408 = vmul.f32 %v2405, 1.442695
    %v2409 = vpow.pop %v2408
    %v2410 = vadd.f32 %v2407, 1.0
    %v2411 = vadd.f32 %v2409, 1.0
    %v2412 = vrcp.pop %v2410
    %v2413 = vmul.f32 1.0, %v2412
    %v2414 = vrcp.pop %v2411
    %v2415 = vmul.f32 1.0, %v2414
    %v2416 = vmul.f32 %v2413, %v2234
    %v2417 = vadd.f32 %v2399, %v2416
    %v2418 = vtanh.pop %v2417
    %v2419 = vsub.f32 1.0, %v2415
    %v2420 = vmul.f32 %v2419, %v2418
    %v2421 = vmul.f32 %v2415, %v2022
    %v2422 = vadd.f32 %v2420, %v2421
    %2423 = vmatprep.subr.mxu0 %v585
    %2424 = vmatpush1.msra.mxu0 %v584
    %2425 = vmatprep.subr.mxu0 %v591
    %2426 = vmatpush1.msra.mxu0 %v590
    %2427 = vmatprep.subr.mxu0 %v597
    %2428 = vmatpush1.msra.mxu0 %v596
    %2429 = vmatprep.subr.mxu0 %v603
    %2430 = vmatpush1.msra.mxu0 %v602
    %2431 = vmatprep.subr.mxu0 %v609
    %2432 = vmatpush1.msra.mxu0 %v608
    %2433 = vmatprep.subr.mxu0 %v615
    %2434 = vmatpush1.msra.mxu0 %v614
    %2435 = vmatprep.subr.mxu0 %v621
    %2436 = vmatpush1.msra.mxu0 %v620
    %2437 = vmatprep.subr.mxu0 %v627
    %2438 = vmatpush1.msra.mxu0 %v626
    %2439 = vmatprep.subr.mxu0 %v633
    %2440 = vmatpush1.msra.mxu0 %v632
    %2441 = vmatprep.subr.mxu0 %v639
    %2442 = vmatpush1.msra.mxu0 %v638
    %2443 = vmatprep.subr.mxu0 %v645
    %2444 = vmatpush1.msra.mxu0 %v644
    %2445 = vmatprep.subr.mxu0 %v651
    %2446 = vmatpush1.msra.mxu0 %v650
    %2447 = vmatprep.subr.mxu0 %v657
    %2448 = vmatpush1.msra.mxu0 %v656
    %2449 = vmatprep.subr.mxu0 %v663
    %2450 = vmatpush1.msra.mxu0 %v662
    %2451 = vmatprep.subr.mxu0 %v669
    %2452 = vmatpush1.msra.mxu0 %v668
    %2453 = vmatprep.subr.mxu0 %v675
    %2454 = vmatpush1.msra.mxu0 %v674
    %2455 = vmatprep.subr.mxu0 %v681
    %2456 = vmatpush1.msra.mxu0 %v680
    %2457 = vmatprep.subr.mxu0 %v687
    %2458 = vmatpush1.msra.mxu0 %v686
    %2459 = vmatprep.subr.mxu0 %v693
    %2460 = vmatpush1.msra.mxu0 %v692
    %2461 = vmatprep.subr.mxu0 %v699
    %2462 = vmatpush1.msra.mxu0 %v698
    %2463 = vmatprep.subr.mxu0 %v705
    %2464 = vmatpush1.msra.mxu0 %v704
    %2465 = vmatprep.subr.mxu0 %v711
    %2466 = vmatpush1.msra.mxu0 %v710
    %2467 = vmatprep.subr.mxu0 %v717
    %2468 = vmatpush1.msra.mxu0 %v716
    %2469 = vmatprep.subr.mxu0 %v723
    %2470 = vmatpush1.msra.mxu0 %v722
    %2471 = vmatprep.subr.mxu0 %v729
    %2472 = vmatpush1.msra.mxu0 %v728
    %2473 = vmatprep.subr.mxu0 %v735
    %2474 = vmatpush1.msra.mxu0 %v734
    %2475 = vmatprep.subr.mxu0 %v741
    %2476 = vmatpush1.msra.mxu0 %v740
    %2477 = vmatprep.subr.mxu0 %v747
    %2478 = vmatpush1.msra.mxu0 %v746
    %2479 = vmatprep.subr.mxu0 %v753
    %2480 = vmatpush1.msra.mxu0 %v752
    %2481 = vmatprep.subr.mxu0 %v759
    %2482 = vmatpush1.msra.mxu0 %v758
    %2483 = vmatprep.subr.mxu0 %v765
    %2484 = vmatpush1.msra.mxu0 %v764
    %2485 = vmatprep.subr.mxu0 %v771
    %2486 = vmatpush1.msra.mxu0 %v770
    %2487 = vmatprep.mubr.f32.mxu0 %v2422
    %2488 = vmatmul.mubr.f32.gmra.mrb[0].mxu0 %v2260
    %v2489 = vpop.f32.mrb[0].mxu0
    %v2490 = vadd.f32 %v540, %v2489
    %v2491 = vpop.f32.mrb[0].mxu0
    %v2492 = vadd.f32 %v544, %v2491
    %2493 = vdwg.mxu0
    %2494 = vmatprep.subr.mxu0 %v587
    %2495 = vmatpush1.msra.mxu0 %v586
    %2496 = vmatprep.subr.mxu0 %v593
    %2497 = vmatpush1.msra.mxu0 %v592
    %2498 = vmatprep.subr.mxu0 %v599
    %2499 = vmatpush1.msra.mxu0 %v598
    %2500 = vmatprep.subr.mxu0 %v605
    %2501 = vmatpush1.msra.mxu0 %v604
    %2502 = vmatprep.subr.mxu0 %v611
    %2503 = vmatpush1.msra.mxu0 %v610
    %2504 = vmatprep.subr.mxu0 %v617
    %2505 = vmatpush1.msra.mxu0 %v616
    %2506 = vmatprep.subr.mxu0 %v623
    %2507 = vmatpush1.msra.mxu0 %v622
    %2508 = vmatprep.subr.mxu0 %v629
    %2509 = vmatpush1.msra.mxu0 %v628
    %2510 = vmatprep.subr.mxu0 %v635
    %2511 = vmatpush1.msra.mxu0 %v634
    %2512 = vmatprep.subr.mxu0 %v641
    %2513 = vmatpush1.msra.mxu0 %v640
    %2514 = vmatprep.subr.mxu0 %v647
    %2515 = vmatpush1.msra.mxu0 %v646
    %2516 = vmatprep.subr.mxu0 %v653
    %2517 = vmatpush1.msra.mxu0 %v652
    %2518 = vmatprep.subr.mxu0 %v659
    %2519 = vmatpush1.msra.mxu0 %v658
    %2520 = vmatprep.subr.mxu0 %v665
    %2521 = vmatpush1.msra.mxu0 %v664
    %2522 = vmatprep.subr.mxu0 %v671
    %2523 = vmatpush1.msra.mxu0 %v670
    %2524 = vmatprep.subr.mxu0 %v677
    %2525 = vmatpush1.msra.mxu0 %v676
    %2526 = vmatprep.subr.mxu0 %v683
    %2527 = vmatpush1.msra.mxu0 %v682
    %2528 = vmatprep.subr.mxu0 %v689
    %2529 = vmatpush1.msra.mxu0 %v688
    %2530 = vmatprep.subr.mxu0 %v695
    %2531 = vmatpush1.msra.mxu0 %v694
    %2532 = vmatprep.subr.mxu0 %v701
    %2533 = vmatpush1.msra.mxu0 %v700
    %2534 = vmatprep.subr.mxu0 %v707
    %2535 = vmatpush1.msra.mxu0 %v706
    %2536 = vmatprep.subr.mxu0 %v713
    %2537 = vmatpush1.msra.mxu0 %v712
    %2538 = vmatprep.subr.mxu0 %v719
    %2539 = vmatpush1.msra.mxu0 %v718
    %2540 = vmatprep.subr.mxu0 %v725
    %2541 = vmatpush1.msra.mxu0 %v724
    %2542 = vmatprep.subr.mxu0 %v731
    %2543 = vmatpush1.msra.mxu0 %v730
    %2544 = vmatprep.subr.mxu0 %v737
    %2545 = vmatpush1.msra.mxu0 %v736
    %2546 = vmatprep.subr.mxu0 %v743
    %2547 = vmatpush1.msra.mxu0 %v742
    %2548 = vmatprep.subr.mxu0 %v749
    %2549 = vmatpush1.msra.mxu0 %v748
    %2550 = vmatprep.subr.mxu0 %v755
    %2551 = vmatpush1.msra.mxu0 %v754
    %2552 = vmatprep.subr.mxu0 %v761
    %2553 = vmatpush1.msra.mxu0 %v760
    %2554 = vmatprep.subr.mxu0 %v767
    %2555 = vmatpush1.msra.mxu0 %v766
    %2556 = vmatprep.subr.mxu0 %v773
    %2557 = vmatpush1.msra.mxu0 %v772
    %2558 = vmatprep.mubr.f32.mxu0 %v2422
    %2559 = vmatmul.mubr.f32.gmra.mrb[0].mxu0 %v2260
    %v2560 = vpop.f32.mrb[0].mxu0
    %v2561 = vadd.f32 %v548, %v2560
    %v2562 = vpop.f32.mrb[0].mxu0
    %v2563 = vadd.f32 %v552, %v2562
    %2564 = vdwg.mxu0
    %2565 = vmatprep.subr.mxu0 %v589
    %2566 = vmatpush1.msra.mxu0 %v588
    %2567 = vmatprep.subr.mxu0 %v595
    %2568 = vmatpush1.msra.mxu0 %v594
    %2569 = vmatprep.subr.mxu0 %v601
    %2570 = vmatpush1.msra.mxu0 %v600
    %2571 = vmatprep.subr.mxu0 %v607
    %2572 = vmatpush1.msra.mxu0 %v606
    %2573 = vmatprep.subr.mxu0 %v613
    %2574 = vmatpush1.msra.mxu0 %v612
    %2575 = vmatprep.subr.mxu0 %v619
    %2576 = vmatpush1.msra.mxu0 %v618
    %2577 = vmatprep.subr.mxu0 %v625
    %2578 = vmatpush1.msra.mxu0 %v624
    %2579 = vmatprep.subr.mxu0 %v631
    %2580 = vmatpush1.msra.mxu0 %v630
    %2581 = vmatprep.subr.mxu0 %v637
    %2582 = vmatpush1.msra.mxu0 %v636
    %2583 = vmatprep.subr.mxu0 %v643
    %2584 = vmatpush1.msra.mxu0 %v642
    %2585 = vmatprep.subr.mxu0 %v649
    %2586 = vmatpush1.msra.mxu0 %v648
    %2587 = vmatprep.subr.mxu0 %v655
    %2588 = vmatpush1.msra.mxu0 %v654
    %2589 = vmatprep.subr.mxu0 %v661
    %2590 = vmatpush1.msra.mxu0 %v660
    %2591 = vmatprep.subr.mxu0 %v667
    %2592 = vmatpush1.msra.mxu0 %v666
    %2593 = vmatprep.subr.mxu0 %v673
    %2594 = vmatpush1.msra.mxu0 %v672
    %2595 = vmatprep.subr.mxu0 %v679
    %2596 = vmatpush1.msra.mxu0 %v678
    %2597 = vmatprep.subr.mxu0 %v685
    %2598 = vmatpush1.msra.mxu0 %v684
    %2599 = vmatprep.subr.mxu0 %v691
    %2600 = vmatpush1.msra.mxu0 %v690
    %2601 = vmatprep.subr.mxu0 %v697
    %2602 = vmatpush1.msra.mxu0 %v696
    %2603 = vmatprep.subr.mxu0 %v703
    %2604 = vmatpush1.msra.mxu0 %v702
    %2605 = vmatprep.subr.mxu0 %v709
    %2606 = vmatpush1.msra.mxu0 %v708
    %2607 = vmatprep.subr.mxu0 %v715
    %2608 = vmatpush1.msra.mxu0 %v714
    %2609 = vmatprep.subr.mxu0 %v721
    %2610 = vmatpush1.msra.mxu0 %v720
    %2611 = vmatprep.subr.mxu0 %v727
    %2612 = vmatpush1.msra.mxu0 %v726
    %2613 = vmatprep.subr.mxu0 %v733
    %2614 = vmatpush1.msra.mxu0 %v732
    %2615 = vmatprep.subr.mxu0 %v739
    %2616 = vmatpush1.msra.mxu0 %v738
    %2617 = vmatprep.subr.mxu0 %v745
    %2618 = vmatpush1.msra.mxu0 %v744
    %2619 = vmatprep.subr.mxu0 %v751
    %2620 = vmatpush1.msra.mxu0 %v750
    %2621 = vmatprep.subr.mxu0 %v757
    %2622 = vmatpush1.msra.mxu0 %v756
    %2623 = vmatprep.subr.mxu0 %v763
    %2624 = vmatpush1.msra.mxu0 %v762
    %2625 = vmatprep.subr.mxu0 %v769
    %2626 = vmatpush1.msra.mxu0 %v768
    %2627 = vmatprep.subr.mxu0 %v775
    %2628 = vmatpush1.msra.mxu0 %v774
    %2629 = vmatprep.mubr.f32.mxu0 %v2422
    %2630 = vmatmul.mubr.f32.gmra.mrb[0].mxu0 %v2260
    %v2631 = vpop.f32.mrb[0].mxu0
    %v2632 = vadd.f32 %v556, %v2631
    %v2633 = vpop.f32.mrb[0].mxu0
    %v2634 = vadd.f32 %v560, %v2633
    %2635 = vdwg.mxu0
    %s2636 = scalar_lea.vmem [#allocation3], 96
    %v2637 = vld [vmem:[%s2636] sm:$0xff]
    %v2638 = vld [vmem:[%s2636 + $0x8] sm:$0xff]
    %v2639 = vld [vmem:[%s2636 + $0x10] sm:$0xff]
    %v2640 = vadd.f32 %v2637, %v2490
    %v2641 = vadd.f32 %v2638, %v2492
    %v2642 = vxor.u32 %v2640, 2147483648
    %v2643 = vxor.u32 %v2641, 2147483648
    %v2644 = vmul.f32 %v2642, 1.442695
    %v2645 = vpow.pop %v2644
    %v2646 = vmul.f32 %v2643, 1.442695
    %v2647 = vpow.pop %v2646
    %v2648 = vadd.f32 %v2645, 1.0
    %v2649 = vadd.f32 %v2647, 1.0
    %v2650 = vrcp.pop %v2648
    %v2651 = vmul.f32 1.0, %v2650
    %v2652 = vrcp.pop %v2649
    %v2653 = vmul.f32 1.0, %v2652
    %v2654 = vmul.f32 %v2651, %v2561
    %v2655 = vadd.f32 %v2639, %v2654
    %v2656 = vtanh.pop %v2655
    %v2657 = vsub.f32 1.0, %v2653
    %v2658 = vmul.f32 %v2657, %v2656
    %v2659 = vmul.f32 %v2653, %v2260
    %v2660 = vadd.f32 %v2658, %v2659
    %2661 = vmatprep.subr.mxu0 %v1014
    %2662 = vmatpush1.msra.mxu0 %v1013
    %2663 = vmatprep.subr.mxu0 %v1017
    %2664 = vmatpush1.msra.mxu0 %v1016
    %2665 = vmatprep.subr.mxu0 %v1020
    %2666 = vmatpush1.msra.mxu0 %v1019
    %2667 = vmatprep.subr.mxu0 %v1023
    %2668 = vmatpush1.msra.mxu0 %v1022
    %2669 = vmatprep.subr.mxu0 %v1026
    %2670 = vmatpush1.msra.mxu0 %v1025
    %2671 = vmatprep.subr.mxu0 %v1029
    %2672 = vmatpush1.msra.mxu0 %v1028
    %2673 = vmatprep.subr.mxu0 %v1032
    %2674 = vmatpush1.msra.mxu0 %v1031
    %2675 = vmatprep.subr.mxu0 %v1035
    %2676 = vmatpush1.msra.mxu0 %v1034
    %2677 = vmatprep.subr.mxu0 %v1038
    %2678 = vmatpush1.msra.mxu0 %v1037
    %2679 = vmatprep.subr.mxu0 %v1041
    %2680 = vmatpush1.msra.mxu0 %v1040
    %2681 = vmatprep.subr.mxu0 %v1044
    %2682 = vmatpush1.msra.mxu0 %v1043
    %2683 = vmatprep.subr.mxu0 %v1047
    %2684 = vmatpush1.msra.mxu0 %v1046
    %2685 = vmatprep.subr.mxu0 %v1050
    %2686 = vmatpush1.msra.mxu0 %v1049
    %2687 = vmatprep.subr.mxu0 %v1053
    %2688 = vmatpush1.msra.mxu0 %v1052
    %2689 = vmatprep.subr.mxu0 %v1056
    %2690 = vmatpush1.msra.mxu0 %v1055
    %2691 = vmatprep.subr.mxu0 %v1059
    %2692 = vmatpush1.msra.mxu0 %v1058
    %2693 = vmatprep.subr.mxu0 0.0
    %2694 = vmatpush1.msra.mxu0 0.0
    %2695 = vmatprep.subr.mxu0 0.0
    %2696 = vmatpush1.msra.mxu0 0.0
    %2697 = vmatprep.subr.mxu0 0.0
    %2698 = vmatpush1.msra.mxu0 0.0
    %2699 = vmatprep.subr.mxu0 0.0
    %2700 = vmatpush1.msra.mxu0 0.0
    %2701 = vmatprep.subr.mxu0 0.0
    %2702 = vmatpush1.msra.mxu0 0.0
    %2703 = vmatprep.subr.mxu0 0.0
    %2704 = vmatpush1.msra.mxu0 0.0
    %2705 = vmatprep.subr.mxu0 0.0
    %2706 = vmatpush1.msra.mxu0 0.0
    %2707 = vmatprep.subr.mxu0 0.0
    %2708 = vmatpush1.msra.mxu0 0.0
    %2709 = vmatprep.subr.mxu0 0.0
    %2710 = vmatpush1.msra.mxu0 0.0
    %2711 = vmatprep.subr.mxu0 0.0
    %2712 = vmatpush1.msra.mxu0 0.0
    %2713 = vmatprep.subr.mxu0 0.0
    %2714 = vmatpush1.msra.mxu0 0.0
    %2715 = vmatprep.subr.mxu0 0.0
    %2716 = vmatpush1.msra.mxu0 0.0
    %2717 = vmatprep.subr.mxu0 0.0
    %2718 = vmatpush1.msra.mxu0 0.0
    %2719 = vmatprep.subr.mxu0 0.0
    %2720 = vmatpush1.msra.mxu0 0.0
    %2721 = vmatprep.subr.mxu0 0.0
    %2722 = vmatpush1.msra.mxu0 0.0
    %2723 = vmatprep.subr.mxu0 0.0
    %2724 = vmatpush1.msra.mxu0 0.0
    %2725 = vmatprep.mubr.f32.mxu0 0.0
    %2726 = vmatmul.mubr.f32.gmra.mrb[0].mxu0 %v2660
    %v2727 = vpop.f32.mrb[0].mxu0
    %v2728 = vadd.f32 %v572, %v2727
    %v2729 = vpop.f32.mrb[0].mxu0
    %v2730 = vadd.f32 %v576, %v2729
    %2731 = vdwg.mxu0
    %2732 = vmatprep.subr.mxu0 0.0
    %2733 = vmatpush1.msra.mxu0 %v1015
    %2734 = vmatprep.subr.mxu0 0.0
    %2735 = vmatpush1.msra.mxu0 %v1018
    %2736 = vmatprep.subr.mxu0 0.0
    %2737 = vmatpush1.msra.mxu0 %v1021
    %2738 = vmatprep.subr.mxu0 0.0
    %2739 = vmatpush1.msra.mxu0 %v1024
    %2740 = vmatprep.subr.mxu0 0.0
    %2741 = vmatpush1.msra.mxu0 %v1027
    %2742 = vmatprep.subr.mxu0 0.0
    %2743 = vmatpush1.msra.mxu0 %v1030
    %2744 = vmatprep.subr.mxu0 0.0
    %2745 = vmatpush1.msra.mxu0 %v1033
    %2746 = vmatprep.subr.mxu0 0.0
    %2747 = vmatpush1.msra.mxu0 %v1036
    %2748 = vmatprep.subr.mxu0 0.0
    %2749 = vmatpush1.msra.mxu0 %v1039
    %2750 = vmatprep.subr.mxu0 0.0
    %2751 = vmatpush1.msra.mxu0 %v1042
    %2752 = vmatprep.subr.mxu0 0.0
    %2753 = vmatpush1.msra.mxu0 %v1045
    %2754 = vmatprep.subr.mxu0 0.0
    %2755 = vmatpush1.msra.mxu0 %v1048
    %2756 = vmatprep.subr.mxu0 0.0
    %2757 = vmatpush1.msra.mxu0 %v1051
    %2758 = vmatprep.subr.mxu0 0.0
    %2759 = vmatpush1.msra.mxu0 %v1054
    %2760 = vmatprep.subr.mxu0 0.0
    %2761 = vmatpush1.msra.mxu0 %v1057
    %2762 = vmatprep.subr.mxu0 0.0
    %2763 = vmatpush1.msra.mxu0 %v1060
    %2764 = vmatprep.subr.mxu0 0.0
    %2765 = vmatpush1.msra.mxu0 0.0
    %2766 = vmatprep.subr.mxu0 0.0
    %2767 = vmatpush1.msra.mxu0 0.0
    %2768 = vmatprep.subr.mxu0 0.0
    %2769 = vmatpush1.msra.mxu0 0.0
    %2770 = vmatprep.subr.mxu0 0.0
    %2771 = vmatpush1.msra.mxu0 0.0
    %2772 = vmatprep.subr.mxu0 0.0
    %2773 = vmatpush1.msra.mxu0 0.0
    %2774 = vmatprep.subr.mxu0 0.0
    %2775 = vmatpush1.msra.mxu0 0.0
    %2776 = vmatprep.subr.mxu0 0.0
    %2777 = vmatpush1.msra.mxu0 0.0
    %2778 = vmatprep.subr.mxu0 0.0
    %2779 = vmatpush1.msra.mxu0 0.0
    %2780 = vmatprep.subr.mxu0 0.0
    %2781 = vmatpush1.msra.mxu0 0.0
    %2782 = vmatprep.subr.mxu0 0.0
    %2783 = vmatpush1.msra.mxu0 0.0
    %2784 = vmatprep.subr.mxu0 0.0
    %2785 = vmatpush1.msra.mxu0 0.0
    %2786 = vmatprep.subr.mxu0 0.0
    %2787 = vmatpush1.msra.mxu0 0.0
    %2788 = vmatprep.subr.mxu0 0.0
    %2789 = vmatpush1.msra.mxu0 0.0
    %2790 = vmatprep.subr.mxu0 0.0
    %2791 = vmatpush1.msra.mxu0 0.0
    %2792 = vmatprep.subr.mxu0 0.0
    %2793 = vmatpush1.msra.mxu0 0.0
    %2794 = vmatprep.subr.mxu0 0.0
    %2795 = vmatpush1.msra.mxu0 0.0
    %2796 = vmatprep.mubr.f32.mxu0 0.0
    %2797 = vmatmul.mubr.f32.gmra.mrb[0].mxu0 %v2660
    %v2798 = vpop.f32.mrb[0].mxu0
    %v2799 = vadd.f32 %v580, %v2798
    %v2800 = vpop.f32.mrb[0].mxu0
    %2801 = vdwg.mxu0
    %v2802 = vadd.f32 %v2728, %v2563
    %v2803 = vadd.f32 %v2730, %v2632
    %v2804 = vxor.u32 %v2802, 2147483648
    %v2805 = vxor.u32 %v2803, 2147483648
    %v2806 = vmul.f32 %v2804, 1.442695
    %v2807 = vpow.pop %v2806
    %v2808 = vmul.f32 %v2805, 1.442695
    %v2809 = vpow.pop %v2808
    %v2810 = vadd.f32 %v2807, 1.0
    %v2811 = vadd.f32 %v2809, 1.0
    %v2812 = vrcp.pop %v2810
    %v2813 = vmul.f32 1.0, %v2812
    %v2814 = vrcp.pop %v2811
    %v2815 = vmul.f32 1.0, %v2814
    %v2816 = vmul.f32 %v2813, %v2634
    %v2817 = vadd.f32 %v2799, %v2816
    %v2818 = vtanh.pop %v2817
    %v2819 = vsub.f32 1.0, %v2815
    %v2820 = vmul.f32 %v2819, %v2818
    %v2821 = vmul.f32 %v2815, %v2422
    %v2822 = vadd.f32 %v2820, %v2821
    %2823 = vmatprep.subr.mxu0 %v585
    %2824 = vmatpush1.msra.mxu0 %v584
    %2825 = vmatprep.subr.mxu0 %v591
    %2826 = vmatpush1.msra.mxu0 %v590
    %2827 = vmatprep.subr.mxu0 %v597
    %2828 = vmatpush1.msra.mxu0 %v596
    %2829 = vmatprep.subr.mxu0 %v603
    %2830 = vmatpush1.msra.mxu0 %v602
    %2831 = vmatprep.subr.mxu0 %v609
    %2832 = vmatpush1.msra.mxu0 %v608
    %2833 = vmatprep.subr.mxu0 %v615
    %2834 = vmatpush1.msra.mxu0 %v614
    %2835 = vmatprep.subr.mxu0 %v621
    %2836 = vmatpush1.msra.mxu0 %v620
    %2837 = vmatprep.subr.mxu0 %v627
    %2838 = vmatpush1.msra.mxu0 %v626
    %2839 = vmatprep.subr.mxu0 %v633
    %2840 = vmatpush1.msra.mxu0 %v632
    %2841 = vmatprep.subr.mxu0 %v639
    %2842 = vmatpush1.msra.mxu0 %v638
    %2843 = vmatprep.subr.mxu0 %v645
    %2844 = vmatpush1.msra.mxu0 %v644
    %2845 = vmatprep.subr.mxu0 %v651
    %2846 = vmatpush1.msra.mxu0 %v650
    %2847 = vmatprep.subr.mxu0 %v657
    %2848 = vmatpush1.msra.mxu0 %v656
    %2849 = vmatprep.subr.mxu0 %v663
    %2850 = vmatpush1.msra.mxu0 %v662
    %2851 = vmatprep.subr.mxu0 %v669
    %2852 = vmatpush1.msra.mxu0 %v668
    %2853 = vmatprep.subr.mxu0 %v675
    %2854 = vmatpush1.msra.mxu0 %v674
    %2855 = vmatprep.subr.mxu0 %v681
    %2856 = vmatpush1.msra.mxu0 %v680
    %2857 = vmatprep.subr.mxu0 %v687
    %2858 = vmatpush1.msra.mxu0 %v686
    %2859 = vmatprep.subr.mxu0 %v693
    %2860 = vmatpush1.msra.mxu0 %v692
    %2861 = vmatprep.subr.mxu0 %v699
    %2862 = vmatpush1.msra.mxu0 %v698
    %2863 = vmatprep.subr.mxu0 %v705
    %2864 = vmatpush1.msra.mxu0 %v704
    %2865 = vmatprep.subr.mxu0 %v711
    %2866 = vmatpush1.msra.mxu0 %v710
    %2867 = vmatprep.subr.mxu0 %v717
    %2868 = vmatpush1.msra.mxu0 %v716
    %2869 = vmatprep.subr.mxu0 %v723
    %2870 = vmatpush1.msra.mxu0 %v722
    %2871 = vmatprep.subr.mxu0 %v729
    %2872 = vmatpush1.msra.mxu0 %v728
    %2873 = vmatprep.subr.mxu0 %v735
    %2874 = vmatpush1.msra.mxu0 %v734
    %2875 = vmatprep.subr.mxu0 %v741
    %2876 = vmatpush1.msra.mxu0 %v740
    %2877 = vmatprep.subr.mxu0 %v747
    %2878 = vmatpush1.msra.mxu0 %v746
    %2879 = vmatprep.subr.mxu0 %v753
    %2880 = vmatpush1.msra.mxu0 %v752
    %2881 = vmatprep.subr.mxu0 %v759
    %2882 = vmatpush1.msra.mxu0 %v758
    %2883 = vmatprep.subr.mxu0 %v765
    %2884 = vmatpush1.msra.mxu0 %v764
    %2885 = vmatprep.subr.mxu0 %v771
    %2886 = vmatpush1.msra.mxu0 %v770
    %2887 = vmatprep.mubr.f32.mxu0 %v2822
    %2888 = vmatmul.mubr.f32.gmra.mrb[0].mxu0 %v2660
    %v2889 = vpop.f32.mrb[0].mxu0
    %v2890 = vadd.f32 %v540, %v2889
    %v2891 = vpop.f32.mrb[0].mxu0
    %v2892 = vadd.f32 %v544, %v2891
    %2893 = vdwg.mxu0
    %2894 = vmatprep.subr.mxu0 %v587
    %2895 = vmatpush1.msra.mxu0 %v586
    %2896 = vmatprep.subr.mxu0 %v593
    %2897 = vmatpush1.msra.mxu0 %v592
    %2898 = vmatprep.subr.mxu0 %v599
    %2899 = vmatpush1.msra.mxu0 %v598
    %2900 = vmatprep.subr.mxu0 %v605
    %2901 = vmatpush1.msra.mxu0 %v604
    %2902 = vmatprep.subr.mxu0 %v611
    %2903 = vmatpush1.msra.mxu0 %v610
    %2904 = vmatprep.subr.mxu0 %v617
    %2905 = vmatpush1.msra.mxu0 %v616
    %2906 = vmatprep.subr.mxu0 %v623
    %2907 = vmatpush1.msra.mxu0 %v622
    %2908 = vmatprep.subr.mxu0 %v629
    %2909 = vmatpush1.msra.mxu0 %v628
    %2910 = vmatprep.subr.mxu0 %v635
    %2911 = vmatpush1.msra.mxu0 %v634
    %2912 = vmatprep.subr.mxu0 %v641
    %2913 = vmatpush1.msra.mxu0 %v640
    %2914 = vmatprep.subr.mxu0 %v647
    %2915 = vmatpush1.msra.mxu0 %v646
    %2916 = vmatprep.subr.mxu0 %v653
    %2917 = vmatpush1.msra.mxu0 %v652
    %2918 = vmatprep.subr.mxu0 %v659
    %2919 = vmatpush1.msra.mxu0 %v658
    %2920 = vmatprep.subr.mxu0 %v665
    %2921 = vmatpush1.msra.mxu0 %v664
    %2922 = vmatprep.subr.mxu0 %v671
    %2923 = vmatpush1.msra.mxu0 %v670
    %2924 = vmatprep.subr.mxu0 %v677
    %2925 = vmatpush1.msra.mxu0 %v676
    %2926 = vmatprep.subr.mxu0 %v683
    %2927 = vmatpush1.msra.mxu0 %v682
    %2928 = vmatprep.subr.mxu0 %v689
    %2929 = vmatpush1.msra.mxu0 %v688
    %2930 = vmatprep.subr.mxu0 %v695
    %2931 = vmatpush1.msra.mxu0 %v694
    %2932 = vmatprep.subr.mxu0 %v701
    %2933 = vmatpush1.msra.mxu0 %v700
    %2934 = vmatprep.subr.mxu0 %v707
    %2935 = vmatpush1.msra.mxu0 %v706
    %2936 = vmatprep.subr.mxu0 %v713
    %2937 = vmatpush1.msra.mxu0 %v712
    %2938 = vmatprep.subr.mxu0 %v719
    %2939 = vmatpush1.msra.mxu0 %v718
    %2940 = vmatprep.subr.mxu0 %v725
    %2941 = vmatpush1.msra.mxu0 %v724
    %2942 = vmatprep.subr.mxu0 %v731
    %2943 = vmatpush1.msra.mxu0 %v730
    %2944 = vmatprep.subr.mxu0 %v737
    %2945 = vmatpush1.msra.mxu0 %v736
    %2946 = vmatprep.subr.mxu0 %v743
    %2947 = vmatpush1.msra.mxu0 %v742
    %2948 = vmatprep.subr.mxu0 %v749
    %2949 = vmatpush1.msra.mxu0 %v748
    %2950 = vmatprep.subr.mxu0 %v755
    %2951 = vmatpush1.msra.mxu0 %v754
    %2952 = vmatprep.subr.mxu0 %v761
    %2953 = vmatpush1.msra.mxu0 %v760
    %2954 = vmatprep.subr.mxu0 %v767
    %2955 = vmatpush1.msra.mxu0 %v766
    %2956 = vmatprep.subr.mxu0 %v773
    %2957 = vmatpush1.msra.mxu0 %v772
    %2958 = vmatprep.mubr.f32.mxu0 %v2822
    %2959 = vmatmul.mubr.f32.gmra.mrb[0].mxu0 %v2660
    %v2960 = vpop.f32.mrb[0].mxu0
    %v2961 = vadd.f32 %v548, %v2960
    %v2962 = vpop.f32.mrb[0].mxu0
    %v2963 = vadd.f32 %v552, %v2962
    %2964 = vdwg.mxu0
    %2965 = vmatprep.subr.mxu0 %v589
    %2966 = vmatpush1.msra.mxu0 %v588
    %2967 = vmatprep.subr.mxu0 %v595
    %2968 = vmatpush1.msra.mxu0 %v594
    %2969 = vmatprep.subr.mxu0 %v601
    %2970 = vmatpush1.msra.mxu0 %v600
    %2971 = vmatprep.subr.mxu0 %v607
    %2972 = vmatpush1.msra.mxu0 %v606
    %2973 = vmatprep.subr.mxu0 %v613
    %2974 = vmatpush1.msra.mxu0 %v612
    %2975 = vmatprep.subr.mxu0 %v619
    %2976 = vmatpush1.msra.mxu0 %v618
    %2977 = vmatprep.subr.mxu0 %v625
    %2978 = vmatpush1.msra.mxu0 %v624
    %2979 = vmatprep.subr.mxu0 %v631
    %2980 = vmatpush1.msra.mxu0 %v630
    %2981 = vmatprep.subr.mxu0 %v637
    %2982 = vmatpush1.msra.mxu0 %v636
    %2983 = vmatprep.subr.mxu0 %v643
    %2984 = vmatpush1.msra.mxu0 %v642
    %2985 = vmatprep.subr.mxu0 %v649
    %2986 = vmatpush1.msra.mxu0 %v648
    %2987 = vmatprep.subr.mxu0 %v655
    %2988 = vmatpush1.msra.mxu0 %v654
    %2989 = vmatprep.subr.mxu0 %v661
    %2990 = vmatpush1.msra.mxu0 %v660
    %2991 = vmatprep.subr.mxu0 %v667
    %2992 = vmatpush1.msra.mxu0 %v666
    %2993 = vmatprep.subr.mxu0 %v673
    %2994 = vmatpush1.msra.mxu0 %v672
    %2995 = vmatprep.subr.mxu0 %v679
    %2996 = vmatpush1.msra.mxu0 %v678
    %2997 = vmatprep.subr.mxu0 %v685
    %2998 = vmatpush1.msra.mxu0 %v684
    %2999 = vmatprep.subr.mxu0 %v691
    %3000 = vmatpush1.msra.mxu0 %v690
    %3001 = vmatprep.subr.mxu0 %v697
    %3002 = vmatpush1.msra.mxu0 %v696
    %3003 = vmatprep.subr.mxu0 %v703
    %3004 = vmatpush1.msra.mxu0 %v702
    %3005 = vmatprep.subr.mxu0 %v709
    %3006 = vmatpush1.msra.mxu0 %v708
    %3007 = vmatprep.subr.mxu0 %v715
    %3008 = vmatpush1.msra.mxu0 %v714
    %3009 = vmatprep.subr.mxu0 %v721
    %3010 = vmatpush1.msra.mxu0 %v720
    %3011 = vmatprep.subr.mxu0 %v727
    %3012 = vmatpush1.msra.mxu0 %v726
    %3013 = vmatprep.subr.mxu0 %v733
    %3014 = vmatpush1.msra.mxu0 %v732
    %3015 = vmatprep.subr.mxu0 %v739
    %3016 = vmatpush1.msra.mxu0 %v738
    %3017 = vmatprep.subr.mxu0 %v745
    %3018 = vmatpush1.msra.mxu0 %v744
    %3019 = vmatprep.subr.mxu0 %v751
    %3020 = vmatpush1.msra.mxu0 %v750
    %3021 = vmatprep.subr.mxu0 %v757
    %3022 = vmatpush1.msra.mxu0 %v756
    %3023 = vmatprep.subr.mxu0 %v763
    %3024 = vmatpush1.msra.mxu0 %v762
    %3025 = vmatprep.subr.mxu0 %v769
    %3026 = vmatpush1.msra.mxu0 %v768
    %3027 = vmatprep.subr.mxu0 %v775
    %3028 = vmatpush1.msra.mxu0 %v774
    %3029 = vmatprep.mubr.f32.mxu0 %v2822
    %3030 = vmatmul.mubr.f32.gmra.mrb[0].mxu0 %v2660
    %v3031 = vpop.f32.mrb[0].mxu0
    %v3032 = vadd.f32 %v556, %v3031
    %v3033 = vpop.f32.mrb[0].mxu0
    %v3034 = vadd.f32 %v560, %v3033
    %3035 = vdwg.mxu0
    %s3036 = scalar_lea.vmem [#allocation3], 120
    %v3037 = vld [vmem:[%s3036] sm:$0xff]
    %v3038 = vld [vmem:[%s3036 + $0x8] sm:$0xff]
    %v3039 = vld [vmem:[%s3036 + $0x10] sm:$0xff]
    %v3040 = vadd.f32 %v3037, %v2890
    %v3041 = vadd.f32 %v3038, %v2892
    %v3042 = vxor.u32 %v3040, 2147483648
    %v3043 = vxor.u32 %v3041, 2147483648
    %v3044 = vmul.f32 %v3042, 1.442695
    %v3045 = vpow.pop %v3044
    %v3046 = vmul.f32 %v3043, 1.442695
    %v3047 = vpow.pop %v3046
    %v3048 = vadd.f32 %v3045, 1.0
    %v3049 = vadd.f32 %v3047, 1.0
    %v3050 = vrcp.pop %v3048
    %v3051 = vmul.f32 1.0, %v3050
    %v3052 = vrcp.pop %v3049
    %v3053 = vmul.f32 1.0, %v3052
    %v3054 = vmul.f32 %v3051, %v2961
    %v3055 = vadd.f32 %v3039, %v3054
    %v3056 = vtanh.pop %v3055
    %v3057 = vsub.f32 1.0, %v3053
    %v3058 = vmul.f32 %v3057, %v3056
    %v3059 = vmul.f32 %v3053, %v2660
    %v3060 = vadd.f32 %v3058, %v3059
    %3061 = vmatprep.subr.mxu0 %v1014
    %3062 = vmatpush1.msra.mxu0 %v1013
    %3063 = vmatprep.subr.mxu0 %v1017
    %3064 = vmatpush1.msra.mxu0 %v1016
    %3065 = vmatprep.subr.mxu0 %v1020
    %3066 = vmatpush1.msra.mxu0 %v1019
    %3067 = vmatprep.subr.mxu0 %v1023
    %3068 = vmatpush1.msra.mxu0 %v1022
    %3069 = vmatprep.subr.mxu0 %v1026
    %3070 = vmatpush1.msra.mxu0 %v1025
    %3071 = vmatprep.subr.mxu0 %v1029
    %3072 = vmatpush1.msra.mxu0 %v1028
    %3073 = vmatprep.subr.mxu0 %v1032
    %3074 = vmatpush1.msra.mxu0 %v1031
    %3075 = vmatprep.subr.mxu0 %v1035
    %3076 = vmatpush1.msra.mxu0 %v1034
    %3077 = vmatprep.subr.mxu0 %v1038
    %3078 = vmatpush1.msra.mxu0 %v1037
    %3079 = vmatprep.subr.mxu0 %v1041
    %3080 = vmatpush1.msra.mxu0 %v1040
    %3081 = vmatprep.subr.mxu0 %v1044
    %3082 = vmatpush1.msra.mxu0 %v1043
    %3083 = vmatprep.subr.mxu0 %v1047
    %3084 = vmatpush1.msra.mxu0 %v1046
    %3085 = vmatprep.subr.mxu0 %v1050
    %3086 = vmatpush1.msra.mxu0 %v1049
    %3087 = vmatprep.subr.mxu0 %v1053
    %3088 = vmatpush1.msra.mxu0 %v1052
    %3089 = vmatprep.subr.mxu0 %v1056
    %3090 = vmatpush1.msra.mxu0 %v1055
    %3091 = vmatprep.subr.mxu0 %v1059
    %3092 = vmatpush1.msra.mxu0 %v1058
    %3093 = vmatprep.subr.mxu0 0.0
    %3094 = vmatpush1.msra.mxu0 0.0
    %3095 = vmatprep.subr.mxu0 0.0
    %3096 = vmatpush1.msra.mxu0 0.0
    %3097 = vmatprep.subr.mxu0 0.0
    %3098 = vmatpush1.msra.mxu0 0.0
    %3099 = vmatprep.subr.mxu0 0.0
    %3100 = vmatpush1.msra.mxu0 0.0
    %3101 = vmatprep.subr.mxu0 0.0
    %3102 = vmatpush1.msra.mxu0 0.0
    %3103 = vmatprep.subr.mxu0 0.0
    %3104 = vmatpush1.msra.mxu0 0.0
    %3105 = vmatprep.subr.mxu0 0.0
    %3106 = vmatpush1.msra.mxu0 0.0
    %3107 = vmatprep.subr.mxu0 0.0
    %3108 = vmatpush1.msra.mxu0 0.0
    %3109 = vmatprep.subr.mxu0 0.0
    %3110 = vmatpush1.msra.mxu0 0.0
    %3111 = vmatprep.subr.mxu0 0.0
    %3112 = vmatpush1.msra.mxu0 0.0
    %3113 = vmatprep.subr.mxu0 0.0
    %3114 = vmatpush1.msra.mxu0 0.0
    %3115 = vmatprep.subr.mxu0 0.0
    %3116 = vmatpush1.msra.mxu0 0.0
    %3117 = vmatprep.subr.mxu0 0.0
    %3118 = vmatpush1.msra.mxu0 0.0
    %3119 = vmatprep.subr.mxu0 0.0
    %3120 = vmatpush1.msra.mxu0 0.0
    %3121 = vmatprep.subr.mxu0 0.0
    %3122 = vmatpush1.msra.mxu0 0.0
    %3123 = vmatprep.subr.mxu0 0.0
    %3124 = vmatpush1.msra.mxu0 0.0
    %3125 = vmatprep.mubr.f32.mxu0 0.0
    %3126 = vmatmul.mubr.f32.gmra.mrb[0].mxu0 %v3060
    %v3127 = vpop.f32.mrb[0].mxu0
    %v3128 = vadd.f32 %v572, %v3127
    %v3129 = vpop.f32.mrb[0].mxu0
    %v3130 = vadd.f32 %v576, %v3129
    %3131 = vdwg.mxu0
    %3132 = vmatprep.subr.mxu0 0.0
    %3133 = vmatpush1.msra.mxu0 %v1015
    %3134 = vmatprep.subr.mxu0 0.0
    %3135 = vmatpush1.msra.mxu0 %v1018
    %3136 = vmatprep.subr.mxu0 0.0
    %3137 = vmatpush1.msra.mxu0 %v1021
    %3138 = vmatprep.subr.mxu0 0.0
    %3139 = vmatpush1.msra.mxu0 %v1024
    %3140 = vmatprep.subr.mxu0 0.0
    %3141 = vmatpush1.msra.mxu0 %v1027
    %3142 = vmatprep.subr.mxu0 0.0
    %3143 = vmatpush1.msra.mxu0 %v1030
    %3144 = vmatprep.subr.mxu0 0.0
    %3145 = vmatpush1.msra.mxu0 %v1033
    %3146 = vmatprep.subr.mxu0 0.0
    %3147 = vmatpush1.msra.mxu0 %v1036
    %3148 = vmatprep.subr.mxu0 0.0
    %3149 = vmatpush1.msra.mxu0 %v1039
    %3150 = vmatprep.subr.mxu0 0.0
    %3151 = vmatpush1.msra.mxu0 %v1042
    %3152 = vmatprep.subr.mxu0 0.0
    %3153 = vmatpush1.msra.mxu0 %v1045
    %3154 = vmatprep.subr.mxu0 0.0
    %3155 = vmatpush1.msra.mxu0 %v1048
    %3156 = vmatprep.subr.mxu0 0.0
    %3157 = vmatpush1.msra.mxu0 %v1051
    %3158 = vmatprep.subr.mxu0 0.0
    %3159 = vmatpush1.msra.mxu0 %v1054
    %3160 = vmatprep.subr.mxu0 0.0
    %3161 = vmatpush1.msra.mxu0 %v1057
    %3162 = vmatprep.subr.mxu0 0.0
    %3163 = vmatpush1.msra.mxu0 %v1060
    %3164 = vmatprep.subr.mxu0 0.0
    %3165 = vmatpush1.msra.mxu0 0.0
    %3166 = vmatprep.subr.mxu0 0.0
    %3167 = vmatpush1.msra.mxu0 0.0
    %3168 = vmatprep.subr.mxu0 0.0
    %3169 = vmatpush1.msra.mxu0 0.0
    %3170 = vmatprep.subr.mxu0 0.0
    %3171 = vmatpush1.msra.mxu0 0.0
    %3172 = vmatprep.subr.mxu0 0.0
    %3173 = vmatpush1.msra.mxu0 0.0
    %3174 = vmatprep.subr.mxu0 0.0
    %3175 = vmatpush1.msra.mxu0 0.0
    %3176 = vmatprep.subr.mxu0 0.0
    %3177 = vmatpush1.msra.mxu0 0.0
    %3178 = vmatprep.subr.mxu0 0.0
    %3179 = vmatpush1.msra.mxu0 0.0
    %3180 = vmatprep.subr.mxu0 0.0
    %3181 = vmatpush1.msra.mxu0 0.0
    %3182 = vmatprep.subr.mxu0 0.0
    %3183 = vmatpush1.msra.mxu0 0.0
    %3184 = vmatprep.subr.mxu0 0.0
    %3185 = vmatpush1.msra.mxu0 0.0
    %3186 = vmatprep.subr.mxu0 0.0
    %3187 = vmatpush1.msra.mxu0 0.0
    %3188 = vmatprep.subr.mxu0 0.0
    %3189 = vmatpush1.msra.mxu0 0.0
    %3190 = vmatprep.subr.mxu0 0.0
    %3191 = vmatpush1.msra.mxu0 0.0
    %3192 = vmatprep.subr.mxu0 0.0
    %3193 = vmatpush1.msra.mxu0 0.0
    %3194 = vmatprep.subr.mxu0 0.0
    %3195 = vmatpush1.msra.mxu0 0.0
    %3196 = vmatprep.mubr.f32.mxu0 0.0
    %3197 = vmatmul.mubr.f32.gmra.mrb[0].mxu0 %v3060
    %v3198 = vpop.f32.mrb[0].mxu0
    %v3199 = vadd.f32 %v580, %v3198
    %v3200 = vpop.f32.mrb[0].mxu0
    %3201 = vdwg.mxu0
    %v3202 = vadd.f32 %v3128, %v2963
    %v3203 = vadd.f32 %v3130, %v3032
    %v3204 = vxor.u32 %v3202, 2147483648
    %v3205 = vxor.u32 %v3203, 2147483648
    %v3206 = vmul.f32 %v3204, 1.442695
    %v3207 = vpow.pop %v3206
    %v3208 = vmul.f32 %v3205, 1.442695
    %v3209 = vpow.pop %v3208
    %v3210 = vadd.f32 %v3207, 1.0
    %v3211 = vadd.f32 %v3209, 1.0
    %v3212 = vrcp.pop %v3210
    %v3213 = vmul.f32 1.0, %v3212
    %v3214 = vrcp.pop %v3211
    %v3215 = vmul.f32 1.0, %v3214
    %v3216 = vmul.f32 %v3213, %v3034
    %v3217 = vadd.f32 %v3199, %v3216
    %v3218 = vtanh.pop %v3217
    %v3219 = vsub.f32 1.0, %v3215
    %v3220 = vmul.f32 %v3219, %v3218
    %v3221 = vmul.f32 %v3215, %v2822
    %v3222 = vadd.f32 %v3220, %v3221
    %3223 = vmatprep.subr.mxu0 %v585
    %3224 = vmatpush1.msra.mxu0 %v584
    %3225 = vmatprep.subr.mxu0 %v591
    %3226 = vmatpush1.msra.mxu0 %v590
    %3227 = vmatprep.subr.mxu0 %v597
    %3228 = vmatpush1.msra.mxu0 %v596
    %3229 = vmatprep.subr.mxu0 %v603
    %3230 = vmatpush1.msra.mxu0 %v602
    %3231 = vmatprep.subr.mxu0 %v609
    %3232 = vmatpush1.msra.mxu0 %v608
    %3233 = vmatprep.subr.mxu0 %v615
    %3234 = vmatpush1.msra.mxu0 %v614
    %3235 = vmatprep.subr.mxu0 %v621
    %3236 = vmatpush1.msra.mxu0 %v620
    %3237 = vmatprep.subr.mxu0 %v627
    %3238 = vmatpush1.msra.mxu0 %v626
    %3239 = vmatprep.subr.mxu0 %v633
    %3240 = vmatpush1.msra.mxu0 %v632
    %3241 = vmatprep.subr.mxu0 %v639
    %3242 = vmatpush1.msra.mxu0 %v638
    %3243 = vmatprep.subr.mxu0 %v645
    %3244 = vmatpush1.msra.mxu0 %v644
    %3245 = vmatprep.subr.mxu0 %v651
    %3246 = vmatpush1.msra.mxu0 %v650
    %3247 = vmatprep.subr.mxu0 %v657
    %3248 = vmatpush1.msra.mxu0 %v656
    %3249 = vmatprep.subr.mxu0 %v663
    %3250 = vmatpush1.msra.mxu0 %v662
    %3251 = vmatprep.subr.mxu0 %v669
    %3252 = vmatpush1.msra.mxu0 %v668
    %3253 = vmatprep.subr.mxu0 %v675
    %3254 = vmatpush1.msra.mxu0 %v674
    %3255 = vmatprep.subr.mxu0 %v681
    %3256 = vmatpush1.msra.mxu0 %v680
    %3257 = vmatprep.subr.mxu0 %v687
    %3258 = vmatpush1.msra.mxu0 %v686
    %3259 = vmatprep.subr.mxu0 %v693
    %3260 = vmatpush1.msra.mxu0 %v692
    %3261 = vmatprep.subr.mxu0 %v699
    %3262 = vmatpush1.msra.mxu0 %v698
    %3263 = vmatprep.subr.mxu0 %v705
    %3264 = vmatpush1.msra.mxu0 %v704
    %3265 = vmatprep.subr.mxu0 %v711
    %3266 = vmatpush1.msra.mxu0 %v710
    %3267 = vmatprep.subr.mxu0 %v717
    %3268 = vmatpush1.msra.mxu0 %v716
    %3269 = vmatprep.subr.mxu0 %v723
    %3270 = vmatpush1.msra.mxu0 %v722
    %3271 = vmatprep.subr.mxu0 %v729
    %3272 = vmatpush1.msra.mxu0 %v728
    %3273 = vmatprep.subr.mxu0 %v735
    %3274 = vmatpush1.msra.mxu0 %v734
    %3275 = vmatprep.subr.mxu0 %v741
    %3276 = vmatpush1.msra.mxu0 %v740
    %3277 = vmatprep.subr.mxu0 %v747
    %3278 = vmatpush1.msra.mxu0 %v746
    %3279 = vmatprep.subr.mxu0 %v753
    %3280 = vmatpush1.msra.mxu0 %v752
    %3281 = vmatprep.subr.mxu0 %v759
    %3282 = vmatpush1.msra.mxu0 %v758
    %3283 = vmatprep.subr.mxu0 %v765
    %3284 = vmatpush1.msra.mxu0 %v764
    %3285 = vmatprep.subr.mxu0 %v771
    %3286 = vmatpush1.msra.mxu0 %v770
    %3287 = vmatprep.mubr.f32.mxu0 %v3222
    %3288 = vmatmul.mubr.f32.gmra.mrb[0].mxu0 %v3060
    %v3289 = vpop.f32.mrb[0].mxu0
    %v3290 = vadd.f32 %v540, %v3289
    %v3291 = vpop.f32.mrb[0].mxu0
    %v3292 = vadd.f32 %v544, %v3291
    %3293 = vdwg.mxu0
    %3294 = vmatprep.subr.mxu0 %v587
    %3295 = vmatpush1.msra.mxu0 %v586
    %3296 = vmatprep.subr.mxu0 %v593
    %3297 = vmatpush1.msra.mxu0 %v592
    %3298 = vmatprep.subr.mxu0 %v599
    %3299 = vmatpush1.msra.mxu0 %v598
    %3300 = vmatprep.subr.mxu0 %v605
    %3301 = vmatpush1.msra.mxu0 %v604
    %3302 = vmatprep.subr.mxu0 %v611
    %3303 = vmatpush1.msra.mxu0 %v610
    %3304 = vmatprep.subr.mxu0 %v617
    %3305 = vmatpush1.msra.mxu0 %v616
    %3306 = vmatprep.subr.mxu0 %v623
    %3307 = vmatpush1.msra.mxu0 %v622
    %3308 = vmatprep.subr.mxu0 %v629
    %3309 = vmatpush1.msra.mxu0 %v628
    %3310 = vmatprep.subr.mxu0 %v635
    %3311 = vmatpush1.msra.mxu0 %v634
    %3312 = vmatprep.subr.mxu0 %v641
    %3313 = vmatpush1.msra.mxu0 %v640
    %3314 = vmatprep.subr.mxu0 %v647
    %3315 = vmatpush1.msra.mxu0 %v646
    %3316 = vmatprep.subr.mxu0 %v653
    %3317 = vmatpush1.msra.mxu0 %v652
    %3318 = vmatprep.subr.mxu0 %v659
    %3319 = vmatpush1.msra.mxu0 %v658
    %3320 = vmatprep.subr.mxu0 %v665
    %3321 = vmatpush1.msra.mxu0 %v664
    %3322 = vmatprep.subr.mxu0 %v671
    %3323 = vmatpush1.msra.mxu0 %v670
    %3324 = vmatprep.subr.mxu0 %v677
    %3325 = vmatpush1.msra.mxu0 %v676
    %3326 = vmatprep.subr.mxu0 %v683
    %3327 = vmatpush1.msra.mxu0 %v682
    %3328 = vmatprep.subr.mxu0 %v689
    %3329 = vmatpush1.msra.mxu0 %v688
    %3330 = vmatprep.subr.mxu0 %v695
    %3331 = vmatpush1.msra.mxu0 %v694
    %3332 = vmatprep.subr.mxu0 %v701
    %3333 = vmatpush1.msra.mxu0 %v700
    %3334 = vmatprep.subr.mxu0 %v707
    %3335 = vmatpush1.msra.mxu0 %v706
    %3336 = vmatprep.subr.mxu0 %v713
    %3337 = vmatpush1.msra.mxu0 %v712
    %3338 = vmatprep.subr.mxu0 %v719
    %3339 = vmatpush1.msra.mxu0 %v718
    %3340 = vmatprep.subr.mxu0 %v725
    %3341 = vmatpush1.msra.mxu0 %v724
    %3342 = vmatprep.subr.mxu0 %v731
    %3343 = vmatpush1.msra.mxu0 %v730
    %3344 = vmatprep.subr.mxu0 %v737
    %3345 = vmatpush1.msra.mxu0 %v736
    %3346 = vmatprep.subr.mxu0 %v743
    %3347 = vmatpush1.msra.mxu0 %v742
    %3348 = vmatprep.subr.mxu0 %v749
    %3349 = vmatpush1.msra.mxu0 %v748
    %3350 = vmatprep.subr.mxu0 %v755
    %3351 = vmatpush1.msra.mxu0 %v754
    %3352 = vmatprep.subr.mxu0 %v761
    %3353 = vmatpush1.msra.mxu0 %v760
    %3354 = vmatprep.subr.mxu0 %v767
    %3355 = vmatpush1.msra.mxu0 %v766
    %3356 = vmatprep.subr.mxu0 %v773
    %3357 = vmatpush1.msra.mxu0 %v772
    %3358 = vmatprep.mubr.f32.mxu0 %v3222
    %3359 = vmatmul.mubr.f32.gmra.mrb[0].mxu0 %v3060
    %v3360 = vpop.f32.mrb[0].mxu0
    %v3361 = vadd.f32 %v548, %v3360
    %v3362 = vpop.f32.mrb[0].mxu0
    %v3363 = vadd.f32 %v552, %v3362
    %3364 = vdwg.mxu0
    %3365 = vmatprep.subr.mxu0 %v589
    %3366 = vmatpush1.msra.mxu0 %v588
    %3367 = vmatprep.subr.mxu0 %v595
    %3368 = vmatpush1.msra.mxu0 %v594
    %3369 = vmatprep.subr.mxu0 %v601
    %3370 = vmatpush1.msra.mxu0 %v600
    %3371 = vmatprep.subr.mxu0 %v607
    %3372 = vmatpush1.msra.mxu0 %v606
    %3373 = vmatprep.subr.mxu0 %v613
    %3374 = vmatpush1.msra.mxu0 %v612
    %3375 = vmatprep.subr.mxu0 %v619
    %3376 = vmatpush1.msra.mxu0 %v618
    %3377 = vmatprep.subr.mxu0 %v625
    %3378 = vmatpush1.msra.mxu0 %v624
    %3379 = vmatprep.subr.mxu0 %v631
    %3380 = vmatpush1.msra.mxu0 %v630
    %3381 = vmatprep.subr.mxu0 %v637
    %3382 = vmatpush1.msra.mxu0 %v636
    %3383 = vmatprep.subr.mxu0 %v643
    %3384 = vmatpush1.msra.mxu0 %v642
    %3385 = vmatprep.subr.mxu0 %v649
    %3386 = vmatpush1.msra.mxu0 %v648
    %3387 = vmatprep.subr.mxu0 %v655
    %3388 = vmatpush1.msra.mxu0 %v654
    %3389 = vmatprep.subr.mxu0 %v661
    %3390 = vmatpush1.msra.mxu0 %v660
    %3391 = vmatprep.subr.mxu0 %v667
    %3392 = vmatpush1.msra.mxu0 %v666
    %3393 = vmatprep.subr.mxu0 %v673
    %3394 = vmatpush1.msra.mxu0 %v672
    %3395 = vmatprep.subr.mxu0 %v679
    %3396 = vmatpush1.msra.mxu0 %v678
    %3397 = vmatprep.subr.mxu0 %v685
    %3398 = vmatpush1.msra.mxu0 %v684
    %3399 = vmatprep.subr.mxu0 %v691
    %3400 = vmatpush1.msra.mxu0 %v690
    %3401 = vmatprep.subr.mxu0 %v697
    %3402 = vmatpush1.msra.mxu0 %v696
    %3403 = vmatprep.subr.mxu0 %v703
    %3404 = vmatpush1.msra.mxu0 %v702
    %3405 = vmatprep.subr.mxu0 %v709
    %3406 = vmatpush1.msra.mxu0 %v708
    %3407 = vmatprep.subr.mxu0 %v715
    %3408 = vmatpush1.msra.mxu0 %v714
    %3409 = vmatprep.subr.mxu0 %v721
    %3410 = vmatpush1.msra.mxu0 %v720
    %3411 = vmatprep.subr.mxu0 %v727
    %3412 = vmatpush1.msra.mxu0 %v726
    %3413 = vmatprep.subr.mxu0 %v733
    %3414 = vmatpush1.msra.mxu0 %v732
    %3415 = vmatprep.subr.mxu0 %v739
    %3416 = vmatpush1.msra.mxu0 %v738
    %3417 = vmatprep.subr.mxu0 %v745
    %3418 = vmatpush1.msra.mxu0 %v744
    %3419 = vmatprep.subr.mxu0 %v751
    %3420 = vmatpush1.msra.mxu0 %v750
    %3421 = vmatprep.subr.mxu0 %v757
    %3422 = vmatpush1.msra.mxu0 %v756
    %3423 = vmatprep.subr.mxu0 %v763
    %3424 = vmatpush1.msra.mxu0 %v762
    %3425 = vmatprep.subr.mxu0 %v769
    %3426 = vmatpush1.msra.mxu0 %v768
    %3427 = vmatprep.subr.mxu0 %v775
    %3428 = vmatpush1.msra.mxu0 %v774
    %3429 = vmatprep.mubr.f32.mxu0 %v3222
    %3430 = vmatmul.mubr.f32.gmra.mrb[0].mxu0 %v3060
    %v3431 = vpop.f32.mrb[0].mxu0
    %v3432 = vadd.f32 %v556, %v3431
    %v3433 = vpop.f32.mrb[0].mxu0
    %v3434 = vadd.f32 %v560, %v3433
    %3435 = vdwg.mxu0
    %s3436 = scalar_lea.vmem [#allocation3], 144
    %v3437 = vld [vmem:[%s3436] sm:$0xff]
    %v3438 = vld [vmem:[%s3436 + $0x8] sm:$0xff]
    %v3439 = vld [vmem:[%s3436 + $0x10] sm:$0xff]
    %v3440 = vadd.f32 %v3437, %v3290
    %v3441 = vadd.f32 %v3438, %v3292
    %v3442 = vxor.u32 %v3440, 2147483648
    %v3443 = vxor.u32 %v3441, 2147483648
    %v3444 = vmul.f32 %v3442, 1.442695
    %v3445 = vpow.pop %v3444
    %v3446 = vmul.f32 %v3443, 1.442695
    %v3447 = vpow.pop %v3446
    %v3448 = vadd.f32 %v3445, 1.0
    %v3449 = vadd.f32 %v3447, 1.0
    %v3450 = vrcp.pop %v3448
    %v3451 = vmul.f32 1.0, %v3450
    %v3452 = vrcp.pop %v3449
    %v3453 = vmul.f32 1.0, %v3452
    %v3454 = vmul.f32 %v3451, %v3361
    %v3455 = vadd.f32 %v3439, %v3454
    %v3456 = vtanh.pop %v3455
    %v3457 = vsub.f32 1.0, %v3453
    %v3458 = vmul.f32 %v3457, %v3456
    %v3459 = vmul.f32 %v3453, %v3060
    %v3460 = vadd.f32 %v3458, %v3459
    %3461 = vmatprep.subr.mxu0 %v1014
    %3462 = vmatpush1.msra.mxu0 %v1013
    %3463 = vmatprep.subr.mxu0 %v1017
    %3464 = vmatpush1.msra.mxu0 %v1016
    %3465 = vmatprep.subr.mxu0 %v1020
    %3466 = vmatpush1.msra.mxu0 %v1019
    %3467 = vmatprep.subr.mxu0 %v1023
    %3468 = vmatpush1.msra.mxu0 %v1022
    %3469 = vmatprep.subr.mxu0 %v1026
    %3470 = vmatpush1.msra.mxu0 %v1025
    %3471 = vmatprep.subr.mxu0 %v1029
    %3472 = vmatpush1.msra.mxu0 %v1028
    %3473 = vmatprep.subr.mxu0 %v1032
    %3474 = vmatpush1.msra.mxu0 %v1031
    %3475 = vmatprep.subr.mxu0 %v1035
    %3476 = vmatpush1.msra.mxu0 %v1034
    %3477 = vmatprep.subr.mxu0 %v1038
    %3478 = vmatpush1.msra.mxu0 %v1037
    %3479 = vmatprep.subr.mxu0 %v1041
    %3480 = vmatpush1.msra.mxu0 %v1040
    %3481 = vmatprep.subr.mxu0 %v1044
    %3482 = vmatpush1.msra.mxu0 %v1043
    %3483 = vmatprep.subr.mxu0 %v1047
    %3484 = vmatpush1.msra.mxu0 %v1046
    %3485 = vmatprep.subr.mxu0 %v1050
    %3486 = vmatpush1.msra.mxu0 %v1049
    %3487 = vmatprep.subr.mxu0 %v1053
    %3488 = vmatpush1.msra.mxu0 %v1052
    %3489 = vmatprep.subr.mxu0 %v1056
    %3490 = vmatpush1.msra.mxu0 %v1055
    %3491 = vmatprep.subr.mxu0 %v1059
    %3492 = vmatpush1.msra.mxu0 %v1058
    %3493 = vmatprep.subr.mxu0 0.0
    %3494 = vmatpush1.msra.mxu0 0.0
    %3495 = vmatprep.subr.mxu0 0.0
    %3496 = vmatpush1.msra.mxu0 0.0
    %3497 = vmatprep.subr.mxu0 0.0
    %3498 = vmatpush1.msra.mxu0 0.0
    %3499 = vmatprep.subr.mxu0 0.0
    %3500 = vmatpush1.msra.mxu0 0.0
    %3501 = vmatprep.subr.mxu0 0.0
    %3502 = vmatpush1.msra.mxu0 0.0
    %3503 = vmatprep.subr.mxu0 0.0
    %3504 = vmatpush1.msra.mxu0 0.0
    %3505 = vmatprep.subr.mxu0 0.0
    %3506 = vmatpush1.msra.mxu0 0.0
    %3507 = vmatprep.subr.mxu0 0.0
    %3508 = vmatpush1.msra.mxu0 0.0
    %3509 = vmatprep.subr.mxu0 0.0
    %3510 = vmatpush1.msra.mxu0 0.0
    %3511 = vmatprep.subr.mxu0 0.0
    %3512 = vmatpush1.msra.mxu0 0.0
    %3513 = vmatprep.subr.mxu0 0.0
    %3514 = vmatpush1.msra.mxu0 0.0
    %3515 = vmatprep.subr.mxu0 0.0
    %3516 = vmatpush1.msra.mxu0 0.0
    %3517 = vmatprep.subr.mxu0 0.0
    %3518 = vmatpush1.msra.mxu0 0.0
    %3519 = vmatprep.subr.mxu0 0.0
    %3520 = vmatpush1.msra.mxu0 0.0
    %3521 = vmatprep.subr.mxu0 0.0
    %3522 = vmatpush1.msra.mxu0 0.0
    %3523 = vmatprep.subr.mxu0 0.0
    %3524 = vmatpush1.msra.mxu0 0.0
    %3525 = vmatprep.mubr.f32.mxu0 0.0
    %3526 = vmatmul.mubr.f32.gmra.mrb[0].mxu0 %v3460
    %v3527 = vpop.f32.mrb[0].mxu0
    %v3528 = vadd.f32 %v572, %v3527
    %v3529 = vpop.f32.mrb[0].mxu0
    %v3530 = vadd.f32 %v576, %v3529
    %3531 = vdwg.mxu0
    %3532 = vmatprep.subr.mxu0 0.0
    %3533 = vmatpush1.msra.mxu0 %v1015
    %3534 = vmatprep.subr.mxu0 0.0
    %3535 = vmatpush1.msra.mxu0 %v1018
    %3536 = vmatprep.subr.mxu0 0.0
    %3537 = vmatpush1.msra.mxu0 %v1021
    %3538 = vmatprep.subr.mxu0 0.0
    %3539 = vmatpush1.msra.mxu0 %v1024
    %3540 = vmatprep.subr.mxu0 0.0
    %3541 = vmatpush1.msra.mxu0 %v1027
    %3542 = vmatprep.subr.mxu0 0.0
    %3543 = vmatpush1.msra.mxu0 %v1030
    %3544 = vmatprep.subr.mxu0 0.0
    %3545 = vmatpush1.msra.mxu0 %v1033
    %3546 = vmatprep.subr.mxu0 0.0
    %3547 = vmatpush1.msra.mxu0 %v1036
    %3548 = vmatprep.subr.mxu0 0.0
    %3549 = vmatpush1.msra.mxu0 %v1039
    %3550 = vmatprep.subr.mxu0 0.0
    %3551 = vmatpush1.msra.mxu0 %v1042
    %3552 = vmatprep.subr.mxu0 0.0
    %3553 = vmatpush1.msra.mxu0 %v1045
    %3554 = vmatprep.subr.mxu0 0.0
    %3555 = vmatpush1.msra.mxu0 %v1048
    %3556 = vmatprep.subr.mxu0 0.0
    %3557 = vmatpush1.msra.mxu0 %v1051
    %3558 = vmatprep.subr.mxu0 0.0
    %3559 = vmatpush1.msra.mxu0 %v1054
    %3560 = vmatprep.subr.mxu0 0.0
    %3561 = vmatpush1.msra.mxu0 %v1057
    %3562 = vmatprep.subr.mxu0 0.0
    %3563 = vmatpush1.msra.mxu0 %v1060
    %3564 = vmatprep.subr.mxu0 0.0
    %3565 = vmatpush1.msra.mxu0 0.0
    %3566 = vmatprep.subr.mxu0 0.0
    %3567 = vmatpush1.msra.mxu0 0.0
    %3568 = vmatprep.subr.mxu0 0.0
    %3569 = vmatpush1.msra.mxu0 0.0
    %3570 = vmatprep.subr.mxu0 0.0
    %3571 = vmatpush1.msra.mxu0 0.0
    %3572 = vmatprep.subr.mxu0 0.0
    %3573 = vmatpush1.msra.mxu0 0.0
    %3574 = vmatprep.subr.mxu0 0.0
    %3575 = vmatpush1.msra.mxu0 0.0
    %3576 = vmatprep.subr.mxu0 0.0
    %3577 = vmatpush1.msra.mxu0 0.0
    %3578 = vmatprep.subr.mxu0 0.0
    %3579 = vmatpush1.msra.mxu0 0.0
    %3580 = vmatprep.subr.mxu0 0.0
    %3581 = vmatpush1.msra.mxu0 0.0
    %3582 = vmatprep.subr.mxu0 0.0
    %3583 = vmatpush1.msra.mxu0 0.0
    %3584 = vmatprep.subr.mxu0 0.0
    %3585 = vmatpush1.msra.mxu0 0.0
    %3586 = vmatprep.subr.mxu0 0.0
    %3587 = vmatpush1.msra.mxu0 0.0
    %3588 = vmatprep.subr.mxu0 0.0
    %3589 = vmatpush1.msra.mxu0 0.0
    %3590 = vmatprep.subr.mxu0 0.0
    %3591 = vmatpush1.msra.mxu0 0.0
    %3592 = vmatprep.subr.mxu0 0.0
    %3593 = vmatpush1.msra.mxu0 0.0
    %3594 = vmatprep.subr.mxu0 0.0
    %3595 = vmatpush1.msra.mxu0 0.0
    %3596 = vmatprep.mubr.f32.mxu0 0.0
    %3597 = vmatmul.mubr.f32.gmra.mrb[0].mxu0 %v3460
    %v3598 = vpop.f32.mrb[0].mxu0
    %v3599 = vadd.f32 %v580, %v3598
    %v3600 = vpop.f32.mrb[0].mxu0
    %3601 = vdwg.mxu0
    %v3602 = vadd.f32 %v3528, %v3363
    %v3603 = vadd.f32 %v3530, %v3432
    %v3604 = vxor.u32 %v3602, 2147483648
    %v3605 = vxor.u32 %v3603, 2147483648
    %v3606 = vmul.f32 %v3604, 1.442695
    %v3607 = vpow.pop %v3606
    %v3608 = vmul.f32 %v3605, 1.442695
    %v3609 = vpow.pop %v3608
    %v3610 = vadd.f32 %v3607, 1.0
    %v3611 = vadd.f32 %v3609, 1.0
    %v3612 = vrcp.pop %v3610
    %v3613 = vmul.f32 1.0, %v3612
    %v3614 = vrcp.pop %v3611
    %v3615 = vmul.f32 1.0, %v3614
    %v3616 = vmul.f32 %v3613, %v3434
    %v3617 = vadd.f32 %v3599, %v3616
    %v3618 = vtanh.pop %v3617
    %v3619 = vsub.f32 1.0, %v3615
    %v3620 = vmul.f32 %v3619, %v3618
    %v3621 = vmul.f32 %v3615, %v3222
    %v3622 = vadd.f32 %v3620, %v3621
    %3623 = vmatprep.subr.mxu0 %v585
    %3624 = vmatpush1.msra.mxu0 %v584
    %3625 = vmatprep.subr.mxu0 %v591
    %3626 = vmatpush1.msra.mxu0 %v590
    %3627 = vmatprep.subr.mxu0 %v597
    %3628 = vmatpush1.msra.mxu0 %v596
    %3629 = vmatprep.subr.mxu0 %v603
    %3630 = vmatpush1.msra.mxu0 %v602
    %3631 = vmatprep.subr.mxu0 %v609
    %3632 = vmatpush1.msra.mxu0 %v608
    %3633 = vmatprep.subr.mxu0 %v615
    %3634 = vmatpush1.msra.mxu0 %v614
    %3635 = vmatprep.subr.mxu0 %v621
    %3636 = vmatpush1.msra.mxu0 %v620
    %3637 = vmatprep.subr.mxu0 %v627
    %3638 = vmatpush1.msra.mxu0 %v626
    %3639 = vmatprep.subr.mxu0 %v633
    %3640 = vmatpush1.msra.mxu0 %v632
    %3641 = vmatprep.subr.mxu0 %v639
    %3642 = vmatpush1.msra.mxu0 %v638
    %3643 = vmatprep.subr.mxu0 %v645
    %3644 = vmatpush1.msra.mxu0 %v644
    %3645 = vmatprep.subr.mxu0 %v651
    %3646 = vmatpush1.msra.mxu0 %v650
    %3647 = vmatprep.subr.mxu0 %v657
    %3648 = vmatpush1.msra.mxu0 %v656
    %3649 = vmatprep.subr.mxu0 %v663
    %3650 = vmatpush1.msra.mxu0 %v662
    %3651 = vmatprep.subr.mxu0 %v669
    %3652 = vmatpush1.msra.mxu0 %v668
    %3653 = vmatprep.subr.mxu0 %v675
    %3654 = vmatpush1.msra.mxu0 %v674
    %3655 = vmatprep.subr.mxu0 %v681
    %3656 = vmatpush1.msra.mxu0 %v680
    %3657 = vmatprep.subr.mxu0 %v687
    %3658 = vmatpush1.msra.mxu0 %v686
    %3659 = vmatprep.subr.mxu0 %v693
    %3660 = vmatpush1.msra.mxu0 %v692
    %3661 = vmatprep.subr.mxu0 %v699
    %3662 = vmatpush1.msra.mxu0 %v698
    %3663 = vmatprep.subr.mxu0 %v705
    %3664 = vmatpush1.msra.mxu0 %v704
    %3665 = vmatprep.subr.mxu0 %v711
    %3666 = vmatpush1.msra.mxu0 %v710
    %3667 = vmatprep.subr.mxu0 %v717
    %3668 = vmatpush1.msra.mxu0 %v716
    %3669 = vmatprep.subr.mxu0 %v723
    %3670 = vmatpush1.msra.mxu0 %v722
    %3671 = vmatprep.subr.mxu0 %v729
    %3672 = vmatpush1.msra.mxu0 %v728
    %3673 = vmatprep.subr.mxu0 %v735
    %3674 = vmatpush1.msra.mxu0 %v734
    %3675 = vmatprep.subr.mxu0 %v741
    %3676 = vmatpush1.msra.mxu0 %v740
    %3677 = vmatprep.subr.mxu0 %v747
    %3678 = vmatpush1.msra.mxu0 %v746
    %3679 = vmatprep.subr.mxu0 %v753
    %3680 = vmatpush1.msra.mxu0 %v752
    %3681 = vmatprep.subr.mxu0 %v759
    %3682 = vmatpush1.msra.mxu0 %v758
    %3683 = vmatprep.subr.mxu0 %v765
    %3684 = vmatpush1.msra.mxu0 %v764
    %3685 = vmatprep.subr.mxu0 %v771
    %3686 = vmatpush1.msra.mxu0 %v770
    %3687 = vmatprep.mubr.f32.mxu0 %v3622
    %3688 = vmatmul.mubr.f32.gmra.mrb[0].mxu0 %v3460
    %v3689 = vpop.f32.mrb[0].mxu0
    %v3690 = vadd.f32 %v540, %v3689
    %v3691 = vpop.f32.mrb[0].mxu0
    %v3692 = vadd.f32 %v544, %v3691
    %3693 = vdwg.mxu0
    %3694 = vmatprep.subr.mxu0 %v587
    %3695 = vmatpush1.msra.mxu0 %v586
    %3696 = vmatprep.subr.mxu0 %v593
    %3697 = vmatpush1.msra.mxu0 %v592
    %3698 = vmatprep.subr.mxu0 %v599
    %3699 = vmatpush1.msra.mxu0 %v598
    %3700 = vmatprep.subr.mxu0 %v605
    %3701 = vmatpush1.msra.mxu0 %v604
    %3702 = vmatprep.subr.mxu0 %v611
    %3703 = vmatpush1.msra.mxu0 %v610
    %3704 = vmatprep.subr.mxu0 %v617
    %3705 = vmatpush1.msra.mxu0 %v616
    %3706 = vmatprep.subr.mxu0 %v623
    %3707 = vmatpush1.msra.mxu0 %v622
    %3708 = vmatprep.subr.mxu0 %v629
    %3709 = vmatpush1.msra.mxu0 %v628
    %3710 = vmatprep.subr.mxu0 %v635
    %3711 = vmatpush1.msra.mxu0 %v634
    %3712 = vmatprep.subr.mxu0 %v641
    %3713 = vmatpush1.msra.mxu0 %v640
    %3714 = vmatprep.subr.mxu0 %v647
    %3715 = vmatpush1.msra.mxu0 %v646
    %3716 = vmatprep.subr.mxu0 %v653
    %3717 = vmatpush1.msra.mxu0 %v652
    %3718 = vmatprep.subr.mxu0 %v659
    %3719 = vmatpush1.msra.mxu0 %v658
    %3720 = vmatprep.subr.mxu0 %v665
    %3721 = vmatpush1.msra.mxu0 %v664
    %3722 = vmatprep.subr.mxu0 %v671
    %3723 = vmatpush1.msra.mxu0 %v670
    %3724 = vmatprep.subr.mxu0 %v677
    %3725 = vmatpush1.msra.mxu0 %v676
    %3726 = vmatprep.subr.mxu0 %v683
    %3727 = vmatpush1.msra.mxu0 %v682
    %3728 = vmatprep.subr.mxu0 %v689
    %3729 = vmatpush1.msra.mxu0 %v688
    %3730 = vmatprep.subr.mxu0 %v695
    %3731 = vmatpush1.msra.mxu0 %v694
    %3732 = vmatprep.subr.mxu0 %v701
    %3733 = vmatpush1.msra.mxu0 %v700
    %3734 = vmatprep.subr.mxu0 %v707
    %3735 = vmatpush1.msra.mxu0 %v706
    %3736 = vmatprep.subr.mxu0 %v713
    %3737 = vmatpush1.msra.mxu0 %v712
    %3738 = vmatprep.subr.mxu0 %v719
    %3739 = vmatpush1.msra.mxu0 %v718
    %3740 = vmatprep.subr.mxu0 %v725
    %3741 = vmatpush1.msra.mxu0 %v724
    %3742 = vmatprep.subr.mxu0 %v731
    %3743 = vmatpush1.msra.mxu0 %v730
    %3744 = vmatprep.subr.mxu0 %v737
    %3745 = vmatpush1.msra.mxu0 %v736
    %3746 = vmatprep.subr.mxu0 %v743
    %3747 = vmatpush1.msra.mxu0 %v742
    %3748 = vmatprep.subr.mxu0 %v749
    %3749 = vmatpush1.msra.mxu0 %v748
    %3750 = vmatprep.subr.mxu0 %v755
    %3751 = vmatpush1.msra.mxu0 %v754
    %3752 = vmatprep.subr.mxu0 %v761
    %3753 = vmatpush1.msra.mxu0 %v760
    %3754 = vmatprep.subr.mxu0 %v767
    %3755 = vmatpush1.msra.mxu0 %v766
    %3756 = vmatprep.subr.mxu0 %v773
    %3757 = vmatpush1.msra.mxu0 %v772
    %3758 = vmatprep.mubr.f32.mxu0 %v3622
    %3759 = vmatmul.mubr.f32.gmra.mrb[0].mxu0 %v3460
    %v3760 = vpop.f32.mrb[0].mxu0
    %v3761 = vadd.f32 %v548, %v3760
    %v3762 = vpop.f32.mrb[0].mxu0
    %v3763 = vadd.f32 %v552, %v3762
    %3764 = vdwg.mxu0
    %3765 = vmatprep.subr.mxu0 %v589
    %3766 = vmatpush1.msra.mxu0 %v588
    %3767 = vmatprep.subr.mxu0 %v595
    %3768 = vmatpush1.msra.mxu0 %v594
    %3769 = vmatprep.subr.mxu0 %v601
    %3770 = vmatpush1.msra.mxu0 %v600
    %3771 = vmatprep.subr.mxu0 %v607
    %3772 = vmatpush1.msra.mxu0 %v606
    %3773 = vmatprep.subr.mxu0 %v613
    %3774 = vmatpush1.msra.mxu0 %v612
    %3775 = vmatprep.subr.mxu0 %v619
    %3776 = vmatpush1.msra.mxu0 %v618
    %3777 = vmatprep.subr.mxu0 %v625
    %3778 = vmatpush1.msra.mxu0 %v624
    %3779 = vmatprep.subr.mxu0 %v631
    %3780 = vmatpush1.msra.mxu0 %v630
    %3781 = vmatprep.subr.mxu0 %v637
    %3782 = vmatpush1.msra.mxu0 %v636
    %3783 = vmatprep.subr.mxu0 %v643
    %3784 = vmatpush1.msra.mxu0 %v642
    %3785 = vmatprep.subr.mxu0 %v649
    %3786 = vmatpush1.msra.mxu0 %v648
    %3787 = vmatprep.subr.mxu0 %v655
    %3788 = vmatpush1.msra.mxu0 %v654
    %3789 = vmatprep.subr.mxu0 %v661
    %3790 = vmatpush1.msra.mxu0 %v660
    %3791 = vmatprep.subr.mxu0 %v667
    %3792 = vmatpush1.msra.mxu0 %v666
    %3793 = vmatprep.subr.mxu0 %v673
    %3794 = vmatpush1.msra.mxu0 %v672
    %3795 = vmatprep.subr.mxu0 %v679
    %3796 = vmatpush1.msra.mxu0 %v678
    %3797 = vmatprep.subr.mxu0 %v685
    %3798 = vmatpush1.msra.mxu0 %v684
    %3799 = vmatprep.subr.mxu0 %v691
    %3800 = vmatpush1.msra.mxu0 %v690
    %3801 = vmatprep.subr.mxu0 %v697
    %3802 = vmatpush1.msra.mxu0 %v696
    %3803 = vmatprep.subr.mxu0 %v703
    %3804 = vmatpush1.msra.mxu0 %v702
    %3805 = vmatprep.subr.mxu0 %v709
    %3806 = vmatpush1.msra.mxu0 %v708
    %3807 = vmatprep.subr.mxu0 %v715
    %3808 = vmatpush1.msra.mxu0 %v714
    %3809 = vmatprep.subr.mxu0 %v721
    %3810 = vmatpush1.msra.mxu0 %v720
    %3811 = vmatprep.subr.mxu0 %v727
    %3812 = vmatpush1.msra.mxu0 %v726
    %3813 = vmatprep.subr.mxu0 %v733
    %3814 = vmatpush1.msra.mxu0 %v732
    %3815 = vmatprep.subr.mxu0 %v739
    %3816 = vmatpush1.msra.mxu0 %v738
    %3817 = vmatprep.subr.mxu0 %v745
    %3818 = vmatpush1.msra.mxu0 %v744
    %3819 = vmatprep.subr.mxu0 %v751
    %3820 = vmatpush1.msra.mxu0 %v750
    %3821 = vmatprep.subr.mxu0 %v757
    %3822 = vmatpush1.msra.mxu0 %v756
    %3823 = vmatprep.subr.mxu0 %v763
    %3824 = vmatpush1.msra.mxu0 %v762
    %3825 = vmatprep.subr.mxu0 %v769
    %3826 = vmatpush1.msra.mxu0 %v768
    %3827 = vmatprep.subr.mxu0 %v775
    %3828 = vmatpush1.msra.mxu0 %v774
    %3829 = vmatprep.mubr.f32.mxu0 %v3622
    %3830 = vmatmul.mubr.f32.gmra.mrb[0].mxu0 %v3460
    %v3831 = vpop.f32.mrb[0].mxu0
    %v3832 = vadd.f32 %v556, %v3831
    %v3833 = vpop.f32.mrb[0].mxu0
    %v3834 = vadd.f32 %v560, %v3833
    %3835 = vdwg.mxu0
    %s3836 = scalar_lea.vmem [#allocation3], 168
    %v3837 = vld [vmem:[%s3836] sm:$0xff]
    %v3838 = vld [vmem:[%s3836 + $0x8] sm:$0xff]
    %v3839 = vld [vmem:[%s3836 + $0x10] sm:$0xff]
    %v3840 = vadd.f32 %v3837, %v3690
    %v3841 = vadd.f32 %v3838, %v3692
    %v3842 = vxor.u32 %v3840, 2147483648
    %v3843 = vxor.u32 %v3841, 2147483648
    %v3844 = vmul.f32 %v3842, 1.442695
    %v3845 = vpow.pop %v3844
    %v3846 = vmul.f32 %v3843, 1.442695
    %v3847 = vpow.pop %v3846
    %v3848 = vadd.f32 %v3845, 1.0
    %v3849 = vadd.f32 %v3847, 1.0
    %v3850 = vrcp.pop %v3848
    %v3851 = vmul.f32 1.0, %v3850
    %v3852 = vrcp.pop %v3849
    %v3853 = vmul.f32 1.0, %v3852
    %v3854 = vmul.f32 %v3851, %v3761
    %v3855 = vadd.f32 %v3839, %v3854
    %v3856 = vtanh.pop %v3855
    %v3857 = vsub.f32 1.0, %v3853
    %v3858 = vmul.f32 %v3857, %v3856
    %v3859 = vmul.f32 %v3853, %v3460
    %v3860 = vadd.f32 %v3858, %v3859
    %3861 = vmatprep.subr.mxu0 %v1014
    %3862 = vmatpush1.msra.mxu0 %v1013
    %3863 = vmatprep.subr.mxu0 %v1017
    %3864 = vmatpush1.msra.mxu0 %v1016
    %3865 = vmatprep.subr.mxu0 %v1020
    %3866 = vmatpush1.msra.mxu0 %v1019
    %3867 = vmatprep.subr.mxu0 %v1023
    %3868 = vmatpush1.msra.mxu0 %v1022
    %3869 = vmatprep.subr.mxu0 %v1026
    %3870 = vmatpush1.msra.mxu0 %v1025
    %3871 = vmatprep.subr.mxu0 %v1029
    %3872 = vmatpush1.msra.mxu0 %v1028
    %3873 = vmatprep.subr.mxu0 %v1032
    %3874 = vmatpush1.msra.mxu0 %v1031
    %3875 = vmatprep.subr.mxu0 %v1035
    %3876 = vmatpush1.msra.mxu0 %v1034
    %3877 = vmatprep.subr.mxu0 %v1038
    %3878 = vmatpush1.msra.mxu0 %v1037
    %3879 = vmatprep.subr.mxu0 %v1041
    %3880 = vmatpush1.msra.mxu0 %v1040
    %3881 = vmatprep.subr.mxu0 %v1044
    %3882 = vmatpush1.msra.mxu0 %v1043
    %3883 = vmatprep.subr.mxu0 %v1047
    %3884 = vmatpush1.msra.mxu0 %v1046
    %3885 = vmatprep.subr.mxu0 %v1050
    %3886 = vmatpush1.msra.mxu0 %v1049
    %3887 = vmatprep.subr.mxu0 %v1053
    %3888 = vmatpush1.msra.mxu0 %v1052
    %3889 = vmatprep.subr.mxu0 %v1056
    %3890 = vmatpush1.msra.mxu0 %v1055
    %3891 = vmatprep.subr.mxu0 %v1059
    %3892 = vmatpush1.msra.mxu0 %v1058
    %3893 = vmatprep.subr.mxu0 0.0
    %3894 = vmatpush1.msra.mxu0 0.0
    %3895 = vmatprep.subr.mxu0 0.0
    %3896 = vmatpush1.msra.mxu0 0.0
    %3897 = vmatprep.subr.mxu0 0.0
    %3898 = vmatpush1.msra.mxu0 0.0
    %3899 = vmatprep.subr.mxu0 0.0
    %3900 = vmatpush1.msra.mxu0 0.0
    %3901 = vmatprep.subr.mxu0 0.0
    %3902 = vmatpush1.msra.mxu0 0.0
    %3903 = vmatprep.subr.mxu0 0.0
    %3904 = vmatpush1.msra.mxu0 0.0
    %3905 = vmatprep.subr.mxu0 0.0
    %3906 = vmatpush1.msra.mxu0 0.0
    %3907 = vmatprep.subr.mxu0 0.0
    %3908 = vmatpush1.msra.mxu0 0.0
    %3909 = vmatprep.subr.mxu0 0.0
    %3910 = vmatpush1.msra.mxu0 0.0
    %3911 = vmatprep.subr.mxu0 0.0
    %3912 = vmatpush1.msra.mxu0 0.0
    %3913 = vmatprep.subr.mxu0 0.0
    %3914 = vmatpush1.msra.mxu0 0.0
    %3915 = vmatprep.subr.mxu0 0.0
    %3916 = vmatpush1.msra.mxu0 0.0
    %3917 = vmatprep.subr.mxu0 0.0
    %3918 = vmatpush1.msra.mxu0 0.0
    %3919 = vmatprep.subr.mxu0 0.0
    %3920 = vmatpush1.msra.mxu0 0.0
    %3921 = vmatprep.subr.mxu0 0.0
    %3922 = vmatpush1.msra.mxu0 0.0
    %3923 = vmatprep.subr.mxu0 0.0
    %3924 = vmatpush1.msra.mxu0 0.0
    %3925 = vmatprep.mubr.f32.mxu0 0.0
    %3926 = vmatmul.mubr.f32.gmra.mrb[0].mxu0 %v3860
    %v3927 = vpop.f32.mrb[0].mxu0
    %v3928 = vadd.f32 %v572, %v3927
    %v3929 = vpop.f32.mrb[0].mxu0
    %v3930 = vadd.f32 %v576, %v3929
    %3931 = vdwg.mxu0
    %3932 = vmatprep.subr.mxu0 0.0
    %3933 = vmatpush1.msra.mxu0 %v1015
    %3934 = vmatprep.subr.mxu0 0.0
    %3935 = vmatpush1.msra.mxu0 %v1018
    %3936 = vmatprep.subr.mxu0 0.0
    %3937 = vmatpush1.msra.mxu0 %v1021
    %3938 = vmatprep.subr.mxu0 0.0
    %3939 = vmatpush1.msra.mxu0 %v1024
    %3940 = vmatprep.subr.mxu0 0.0
    %3941 = vmatpush1.msra.mxu0 %v1027
    %3942 = vmatprep.subr.mxu0 0.0
    %3943 = vmatpush1.msra.mxu0 %v1030
    %3944 = vmatprep.subr.mxu0 0.0
    %3945 = vmatpush1.msra.mxu0 %v1033
    %3946 = vmatprep.subr.mxu0 0.0
    %3947 = vmatpush1.msra.mxu0 %v1036
    %3948 = vmatprep.subr.mxu0 0.0
    %3949 = vmatpush1.msra.mxu0 %v1039
    %3950 = vmatprep.subr.mxu0 0.0
    %3951 = vmatpush1.msra.mxu0 %v1042
    %3952 = vmatprep.subr.mxu0 0.0
    %3953 = vmatpush1.msra.mxu0 %v1045
    %3954 = vmatprep.subr.mxu0 0.0
    %3955 = vmatpush1.msra.mxu0 %v1048
    %3956 = vmatprep.subr.mxu0 0.0
    %3957 = vmatpush1.msra.mxu0 %v1051
    %3958 = vmatprep.subr.mxu0 0.0
    %3959 = vmatpush1.msra.mxu0 %v1054
    %3960 = vmatprep.subr.mxu0 0.0
    %3961 = vmatpush1.msra.mxu0 %v1057
    %3962 = vmatprep.subr.mxu0 0.0
    %3963 = vmatpush1.msra.mxu0 %v1060
    %3964 = vmatprep.subr.mxu0 0.0
    %3965 = vmatpush1.msra.mxu0 0.0
    %3966 = vmatprep.subr.mxu0 0.0
    %3967 = vmatpush1.msra.mxu0 0.0
    %3968 = vmatprep.subr.mxu0 0.0
    %3969 = vmatpush1.msra.mxu0 0.0
    %3970 = vmatprep.subr.mxu0 0.0
    %3971 = vmatpush1.msra.mxu0 0.0
    %3972 = vmatprep.subr.mxu0 0.0
    %3973 = vmatpush1.msra.mxu0 0.0
    %3974 = vmatprep.subr.mxu0 0.0
    %3975 = vmatpush1.msra.mxu0 0.0
    %3976 = vmatprep.subr.mxu0 0.0
    %3977 = vmatpush1.msra.mxu0 0.0
    %3978 = vmatprep.subr.mxu0 0.0
    %3979 = vmatpush1.msra.mxu0 0.0
    %3980 = vmatprep.subr.mxu0 0.0
    %3981 = vmatpush1.msra.mxu0 0.0
    %3982 = vmatprep.subr.mxu0 0.0
    %3983 = vmatpush1.msra.mxu0 0.0
    %3984 = vmatprep.subr.mxu0 0.0
    %3985 = vmatpush1.msra.mxu0 0.0
    %3986 = vmatprep.subr.mxu0 0.0
    %3987 = vmatpush1.msra.mxu0 0.0
    %3988 = vmatprep.subr.mxu0 0.0
    %3989 = vmatpush1.msra.mxu0 0.0
    %3990 = vmatprep.subr.mxu0 0.0
    %3991 = vmatpush1.msra.mxu0 0.0
    %3992 = vmatprep.subr.mxu0 0.0
    %3993 = vmatpush1.msra.mxu0 0.0
    %3994 = vmatprep.subr.mxu0 0.0
    %3995 = vmatpush1.msra.mxu0 0.0
    %3996 = vmatprep.mubr.f32.mxu0 0.0
    %3997 = vmatmul.mubr.f32.gmra.mrb[0].mxu0 %v3860
    %v3998 = vpop.f32.mrb[0].mxu0
    %v3999 = vadd.f32 %v580, %v3998
    %v4000 = vpop.f32.mrb[0].mxu0
    %4001 = vdwg.mxu0
    %v4002 = vadd.f32 %v3928, %v3763
    %v4003 = vadd.f32 %v3930, %v3832
    %v4004 = vxor.u32 %v4002, 2147483648
    %v4005 = vxor.u32 %v4003, 2147483648
    %v4006 = vmul.f32 %v4004, 1.442695
    %v4007 = vpow.pop %v4006
    %v4008 = vmul.f32 %v4005, 1.442695
    %v4009 = vpow.pop %v4008
    %v4010 = vadd.f32 %v4007, 1.0
    %v4011 = vadd.f32 %v4009, 1.0
    %v4012 = vrcp.pop %v4010
    %v4013 = vmul.f32 1.0, %v4012
    %v4014 = vrcp.pop %v4011
    %v4015 = vmul.f32 1.0, %v4014
    %v4016 = vmul.f32 %v4013, %v3834
    %v4017 = vadd.f32 %v3999, %v4016
    %v4018 = vtanh.pop %v4017
    %v4019 = vsub.f32 1.0, %v4015
    %v4020 = vmul.f32 %v4019, %v4018
    %v4021 = vmul.f32 %v4015, %v3622
    %v4022 = vadd.f32 %v4020, %v4021
    %v4023 = vld [vmem:[#allocation10] sm:$0xff]
    %v4024 = vld [vmem:[#allocation10 + $0x8] sm:$0xff]
    %v4025 = vld [vmem:[#allocation10 + $0x10] sm:$0xff]
    %v4026 = vld [vmem:[#allocation10 + $0x18] sm:$0xff]
    %v4027 = vld [vmem:[#allocation10 + $0x20] sm:$0xff]
    %v4028 = vld [vmem:[#allocation10 + $0x28] sm:$0xff]
    %v4029 = vld [vmem:[#allocation10 + $0x30] sm:$0xff]
    %v4030 = vld [vmem:[#allocation10 + $0x38] sm:$0xff]
    %v4031 = vld [vmem:[#allocation10 + $0x40] sm:$0xff]
    %v4032 = vld [vmem:[#allocation10 + $0x48] sm:$0xff]
    %v4033 = vld [vmem:[#allocation10 + $0x50] sm:$0xff]
    %v4034 = vld [vmem:[#allocation10 + $0x58] sm:$0xff]
    %v4035 = vld [vmem:[#allocation10 + $0x60] sm:$0xff]
    %v4036 = vld [vmem:[#allocation10 + $0x68] sm:$0xff]
    %v4037 = vld [vmem:[#allocation10 + $0x70] sm:$0xff]
    %v4038 = vld [vmem:[#allocation10 + $0x78] sm:$0xff]
    %v4039 = vld [vmem:[%s9] sm:$0x1]
    %v4041 = vlaneseq
    %v4042 = vshrl.u32 %v4041, 7
    %v4043 = vsub.s32 0, %v4042
    %v4044 = vrot.slane %v4039, %v4043
    %4046 = vmatprep.subr.mxu0 0.0
    %4047 = vmatpush1.msra.mxu0 %v4023
    %4048 = vmatprep.subr.mxu0 0.0
    %4049 = vmatpush1.msra.mxu0 %v4024
    %4050 = vmatprep.subr.mxu0 0.0
    %4051 = vmatpush1.msra.mxu0 %v4025
    %4052 = vmatprep.subr.mxu0 0.0
    %4053 = vmatpush1.msra.mxu0 %v4026
    %4054 = vmatprep.subr.mxu0 0.0
    %4055 = vmatpush1.msra.mxu0 %v4027
    %4056 = vmatprep.subr.mxu0 0.0
    %4057 = vmatpush1.msra.mxu0 %v4028
    %4058 = vmatprep.subr.mxu0 0.0
    %4059 = vmatpush1.msra.mxu0 %v4029
    %4060 = vmatprep.subr.mxu0 0.0
    %4061 = vmatpush1.msra.mxu0 %v4030
    %4062 = vmatprep.subr.mxu0 0.0
    %4063 = vmatpush1.msra.mxu0 %v4031
    %4064 = vmatprep.subr.mxu0 0.0
    %4065 = vmatpush1.msra.mxu0 %v4032
    %4066 = vmatprep.subr.mxu0 0.0
    %4067 = vmatpush1.msra.mxu0 %v4033
    %4068 = vmatprep.subr.mxu0 0.0
    %4069 = vmatpush1.msra.mxu0 %v4034
    %4070 = vmatprep.subr.mxu0 0.0
    %4071 = vmatpush1.msra.mxu0 %v4035
    %4072 = vmatprep.subr.mxu0 0.0
    %4073 = vmatpush1.msra.mxu0 %v4036
    %4074 = vmatprep.subr.mxu0 0.0
    %4075 = vmatpush1.msra.mxu0 %v4037
    %4076 = vmatprep.subr.mxu0 0.0
    %4077 = vmatpush1.msra.mxu0 %v4038
    %4078 = vmatprep.subr.mxu0 0.0
    %4079 = vmatpush1.msra.mxu0 0.0
    %4080 = vmatprep.subr.mxu0 0.0
    %4081 = vmatpush1.msra.mxu0 0.0
    %4082 = vmatprep.subr.mxu0 0.0
    %4083 = vmatpush1.msra.mxu0 0.0
    %4084 = vmatprep.subr.mxu0 0.0
    %4085 = vmatpush1.msra.mxu0 0.0
    %4086 = vmatprep.subr.mxu0 0.0
    %4087 = vmatpush1.msra.mxu0 0.0
    %4088 = vmatprep.subr.mxu0 0.0
    %4089 = vmatpush1.msra.mxu0 0.0
    %4090 = vmatprep.subr.mxu0 0.0
    %4091 = vmatpush1.msra.mxu0 0.0
    %4092 = vmatprep.subr.mxu0 0.0
    %4093 = vmatpush1.msra.mxu0 0.0
    %4094 = vmatprep.subr.mxu0 0.0
    %4095 = vmatpush1.msra.mxu0 0.0
    %4096 = vmatprep.subr.mxu0 0.0
    %4097 = vmatpush1.msra.mxu0 0.0
    %4098 = vmatprep.subr.mxu0 0.0
    %4099 = vmatpush1.msra.mxu0 0.0
    %4100 = vmatprep.subr.mxu0 0.0
    %4101 = vmatpush1.msra.mxu0 0.0
    %4102 = vmatprep.subr.mxu0 0.0
    %4103 = vmatpush1.msra.mxu0 0.0
    %4104 = vmatprep.subr.mxu0 0.0
    %4105 = vmatpush1.msra.mxu0 0.0
    %4106 = vmatprep.subr.mxu0 0.0
    %4107 = vmatpush1.msra.mxu0 0.0
    %4108 = vmatprep.subr.mxu0 0.0
    %4109 = vmatpush1.msra.mxu0 0.0
    %4110 = vmatprep.mubr.f32.mxu0 0.0
    %4111 = vmatmul.mubr.f32.gmra.mrb[0].mxu0 %v4022
    %v4112 = vpop.f32.mrb[0].mxu0
    %v4113 = vadd.f32 %v4044, %v4112
    %v4114 = vpop.f32.mrb[0].mxu0
    %4115 = vdwg.mxu0
    %v4116 = vxor.u32 %v4113, 2147483648
    %v4117 = vmul.f32 %v4116, 1.442695
    %v4118 = vpow.pop %v4117
    %v4119 = vadd.f32 %v4118, 1.0
    %v4120 = vrcp.pop %v4119
    %v4121 = vmul.f32 1.0, %v4120
    %v4122 = vmul.f32 %v4113, %v4121
    %v4123 = vld [vmem:[#allocation11] sm:$0xff]
    %v4124 = vld [vmem:[#allocation11 + $0x8] sm:$0xff]
    %v4125 = vld [vmem:[#allocation11 + $0x10] sm:$0xff]
    %v4126 = vld [vmem:[#allocation11 + $0x18] sm:$0xff]
    %v4127 = vld [vmem:[#allocation11 + $0x20] sm:$0xff]
    %v4128 = vld [vmem:[#allocation11 + $0x28] sm:$0xff]
    %v4129 = vld [vmem:[#allocation11 + $0x30] sm:$0xff]
    %v4130 = vld [vmem:[#allocation11 + $0x38] sm:$0xff]
    %v4131 = vld [vmem:[#allocation11 + $0x40] sm:$0xff]
    %v4132 = vld [vmem:[#allocation11 + $0x48] sm:$0xff]
    %v4133 = vld [vmem:[#allocation11 + $0x50] sm:$0xff]
    %v4134 = vld [vmem:[#allocation11 + $0x58] sm:$0xff]
    %v4135 = vld [vmem:[#allocation11 + $0x60] sm:$0xff]
    %v4136 = vld [vmem:[#allocation11 + $0x68] sm:$0xff]
    %v4137 = vld [vmem:[#allocation11 + $0x70] sm:$0xff]
    %v4138 = vld [vmem:[#allocation11 + $0x78] sm:$0xff]
    %v4139 = vld [vmem:[%s11] sm:$0x1]
    %v4141 = vlaneseq
    %v4142 = vshrl.u32 %v4141, 7
    %v4143 = vsub.s32 0, %v4142
    %v4144 = vrot.slane %v4139, %v4143
    %4146 = vmatprep.subr.mxu0 0.0
    %4147 = vmatpush1.msra.mxu0 %v4123
    %4148 = vmatprep.subr.mxu0 0.0
    %4149 = vmatpush1.msra.mxu0 %v4124
    %4150 = vmatprep.subr.mxu0 0.0
    %4151 = vmatpush1.msra.mxu0 %v4125
    %4152 = vmatprep.subr.mxu0 0.0
    %4153 = vmatpush1.msra.mxu0 %v4126
    %4154 = vmatprep.subr.mxu0 0.0
    %4155 = vmatpush1.msra.mxu0 %v4127
    %4156 = vmatprep.subr.mxu0 0.0
    %4157 = vmatpush1.msra.mxu0 %v4128
    %4158 = vmatprep.subr.mxu0 0.0
    %4159 = vmatpush1.msra.mxu0 %v4129
    %4160 = vmatprep.subr.mxu0 0.0
    %4161 = vmatpush1.msra.mxu0 %v4130
    %4162 = vmatprep.subr.mxu0 0.0
    %4163 = vmatpush1.msra.mxu0 %v4131
    %4164 = vmatprep.subr.mxu0 0.0
    %4165 = vmatpush1.msra.mxu0 %v4132
    %4166 = vmatprep.subr.mxu0 0.0
    %4167 = vmatpush1.msra.mxu0 %v4133
    %4168 = vmatprep.subr.mxu0 0.0
    %4169 = vmatpush1.msra.mxu0 %v4134
    %4170 = vmatprep.subr.mxu0 0.0
    %4171 = vmatpush1.msra.mxu0 %v4135
    %4172 = vmatprep.subr.mxu0 0.0
    %4173 = vmatpush1.msra.mxu0 %v4136
    %4174 = vmatprep.subr.mxu0 0.0
    %4175 = vmatpush1.msra.mxu0 %v4137
    %4176 = vmatprep.subr.mxu0 0.0
    %4177 = vmatpush1.msra.mxu0 %v4138
    %4178 = vmatprep.subr.mxu0 0.0
    %4179 = vmatpush1.msra.mxu0 0.0
    %4180 = vmatprep.subr.mxu0 0.0
    %4181 = vmatpush1.msra.mxu0 0.0
    %4182 = vmatprep.subr.mxu0 0.0
    %4183 = vmatpush1.msra.mxu0 0.0
    %4184 = vmatprep.subr.mxu0 0.0
    %4185 = vmatpush1.msra.mxu0 0.0
    %4186 = vmatprep.subr.mxu0 0.0
    %4187 = vmatpush1.msra.mxu0 0.0
    %4188 = vmatprep.subr.mxu0 0.0
    %4189 = vmatpush1.msra.mxu0 0.0
    %4190 = vmatprep.subr.mxu0 0.0
    %4191 = vmatpush1.msra.mxu0 0.0
    %4192 = vmatprep.subr.mxu0 0.0
    %4193 = vmatpush1.msra.mxu0 0.0
    %4194 = vmatprep.subr.mxu0 0.0
    %4195 = vmatpush1.msra.mxu0 0.0
    %4196 = vmatprep.subr.mxu0 0.0
    %4197 = vmatpush1.msra.mxu0 0.0
    %4198 = vmatprep.subr.mxu0 0.0
    %4199 = vmatpush1.msra.mxu0 0.0
    %4200 = vmatprep.subr.mxu0 0.0
    %4201 = vmatpush1.msra.mxu0 0.0
    %4202 = vmatprep.subr.mxu0 0.0
    %4203 = vmatpush1.msra.mxu0 0.0
    %4204 = vmatprep.subr.mxu0 0.0
    %4205 = vmatpush1.msra.mxu0 0.0
    %4206 = vmatprep.subr.mxu0 0.0
    %4207 = vmatpush1.msra.mxu0 0.0
    %4208 = vmatprep.subr.mxu0 0.0
    %4209 = vmatpush1.msra.mxu0 0.0
    %4210 = vmatprep.mubr.f32.mxu0 0.0
    %4211 = vmatmul.mubr.f32.gmra.mrb[0].mxu0 %v4122
    %v4212 = vpop.f32.mrb[0].mxu0
    %v4213 = vadd.f32 %v4144, %v4212
    %v4214 = vpop.f32.mrb[0].mxu0
    %4215 = vdwg.mxu0
    %4216 = vmax.xlane.f32.xlu0 %v4213
    %v4217 = vpop.xlane.xlu0 %4216
    %v4218 = vsub.f32 %v4213, %v4217
    %v4219 = vmul.f32 %v4218, 1.442695
    %v4220 = vpow.pop %v4219
    %4221 = vadd.xlane.f32.xlu0 %v4220
    %v4222 = vpop.xlane.xlu0 %4221
    %v4223 = vrcp.pop %v4222
    %v4224 = vmul.f32 %v4220, %v4223
    %4225 = vst [vmem:[%s12] sm:$0xff] %v4224
    // Predicated region
    $region62: #{classifier_forward.1} parent=1 // pred_check
      _
    $region63: #{classifier_forward.1} parent=1 // pred_check_branch
      %4227 = sbr.rel (0) target = $region65
    $region64: #{classifier_forward.1} parent=1 // pred_region
      _
    $region65: #{classifier_forward.1} parent=1 // pred_fallthru
      _
    // Predicated region
    $region66: #{classifier_forward.1} parent=1 // pred_check
      _
    $region67: #{classifier_forward.1} parent=1 // pred_check_branch
      %4229 = sbr.rel (0) target = $region69
    $region68: #{classifier_forward.1} parent=1 // pred_region
      _
    $region69: #{classifier_forward.1} parent=1 // pred_fallthru
      _
    %4230 = vsyncpa [#allocation7], 1
    %4231 = vsyncpa [#allocation9], 1
    %4232 = vsyncpa [#allocation12], 1

</llo_original>
